<compile_context>
chip_gen: v7x
topology: tpu7x:2x2x1
jax: 0.10.0
libtpu: 0.0.40
codegen_flags: <defaults>
</compile_context>

<pallas_src>
import functools
import math

import jax
import jax.numpy as jnp
from jax.experimental import pallas as pl
from jax.experimental.pallas import tpu as pltpu

EPS = 1e-5


def _split_bf16(v):
    """Split f32 -> bf16 hi + bf16 lo with v ~= hi + lo (lo keeps bits ~2^-17 of v)."""
    hi = v.astype(jnp.bfloat16)
    lo = (v - hi.astype(jnp.float32)).astype(jnp.bfloat16)
    return hi, lo


def conv_block_kernel(x_ref, w1_ref, g1_ref, be1_ref, w2_ref, g2_ref, be2_ref,
                      o_ref, a2_ref, xh_ref, xl_ref, *, W, Wp, slab_off):
    # x_ref:   (N, Cin, FPin)   zero-padded input plane, flattened (h*Wp + w)
    # w*_ref:  (Cout, 9*C) f32  GEMM-form conv weights, K ordered (tap, channel)
    # g*/be*:  (Cout, 1)        BN gamma / beta
    # o_ref:   (N, Cout, L)     lane-dense flat output, L = H*Wp (L % 128 == 0)
    # a2_ref:  (N, Cout, FP2)   VMEM scratch: padded stage-2 activations
    # xh/xl:   (9*Cmax, N*L)    VMEM scratch: bf16 hi/lo im2col matrices
    N, Cin, _ = x_ref.shape
    _, Cout, L = o_ref.shape
    NL = N * L
    H = L // Wp
    inv_cnt = 1.0 / float(N * H * W)             # BN statistics over (N, H, W)

    # Valid-column mask built in-kernel: flat column % Wp < W.
    lane = jax.lax.broadcasted_iota(jnp.int32, (1, NL), 1)
    mask = (lane % Wp < W).astype(jnp.float32)

    def fill_taps(c, load_row):
        # 3 wide loads per sample (one per kernel row dh); the dw=1,2 taps are
        # static 1/2-lane shifts of the loaded value (XLU rotates), not loads.
        for n in range(N):
            for dh in range(3):
                wide = load_row(n, dh)                       # (c, L+2) f32
                for dw in range(3):
                    hi, lo = _split_bf16(wide[:, dw:dw + L])
                    r0 = (dh * 3 + dw) * c
                    xh_ref[r0:r0 + c, n * L:(n + 1) * L] = hi
                    xl_ref[r0:r0 + c, n * L:(n + 1) * L] = lo

    def conv_gemm(c, w_ref):
        # One fused (Cout, 9c) x (9c, N*L) conv per stage: 3 native-bf16 MXU
        # passes (hi*hi + hi*lo + lo*hi ~ bf16_3x), accumulated in f32.
        wh, wl = _split_bf16(w_ref[...])
        xh = xh_ref[:9 * c, :]
        xl = xl_ref[:9 * c, :]
        return (jnp.dot(wh, xh, preferred_element_type=jnp.float32)
                + jnp.dot(wh, xl, preferred_element_type=jnp.float32)
                + jnp.dot(wl, xh, preferred_element_type=jnp.float32))

    def bn_relu(y, g_ref, b_ref):
        # Train-mode BN: masked one-pass sum / sum-of-squares -> per-channel
        # scale/shift, applied as one FMA + max, re-masked on pad columns.
        ym = y * mask
        s = jnp.sum(ym, axis=1, keepdims=True)
        ss = jnp.sum(ym * ym, axis=1, keepdims=True)
        mean = s * inv_cnt
        var = jnp.maximum(ss * inv_cnt - mean * mean, 0.0)
        scale = g_ref[...] * jax.lax.rsqrt(var + EPS)
        shift = b_ref[...] - mean * scale
        return jnp.maximum(y * scale + shift, 0.0) * mask

    # ---- stage 1: conv1 (bias removed by batch-stat BN) -> BN -> ReLU ----
    fill_taps(Cin, lambda n, dh: x_ref[n, :, dh * Wp:dh * Wp + L + 2])
    a1 = bn_relu(conv_gemm(Cin, w1_ref), g1_ref, be1_ref)        # (Cout, N*L)

    # ---- stage-2 padded plane: aligned halo zero-fills + aligned slab stores ----
    # Masked (zeroed) pad columns of a1 land exactly on the halo cells between
    # rows, so only the head/tail strips need explicit zeroing.
    FP2 = a2_ref.shape[-1]
    a2_ref[:, :, :slab_off] = jnp.zeros((N, Cout, slab_off), jnp.float32)
    a2_ref[:, :, slab_off + L:] = jnp.zeros((N, Cout, FP2 - slab_off - L),
                                            jnp.float32)
    for n in range(N):
        a2_ref[n, :, slab_off:slab_off + L] = a1[:, n * L:(n + 1) * L]

    # ---- stage 2: conv2 -> BN -> ReLU -> lane-dense store ----
    base2 = slab_off - Wp - 1
    fill_taps(Cout, lambda n, dh:
              a2_ref[n, :, base2 + dh * Wp:base2 + dh * Wp + L + 2])
    out = bn_relu(conv_gemm(Cout, w2_ref), g2_ref, be2_ref)      # (Cout, N*L)
    for n in range(N):
        o_ref[n] = out[:, n * L:(n + 1) * L].astype(o_ref.dtype)


def conv_block_forward(x_nchw, params, *, keep_lane_padding=False):
    """x_nchw: (N, Cin, H, W) f32 -> (N, Cout, H, W) f32.
    With keep_lane_padding=True returns the lane-dense (N, Cout, H, Wp) layout
    (zero-filled in columns [W, Wp)) so the next block can consume it directly."""
    N, Cin, H, W = x_nchw.shape
    Cout = params["w1_oihw"].shape[0]

    # Lane-dense geometry: Wp >= W+2 and L = H*Wp a multiple of 128 (full vregs).
    step = 128 // math.gcd(H, 128)
    Wp = ((W + 2 + step - 1) // step) * step
    L = H * Wp
    slab_off = ((Wp + 1 + 127) // 128) * 128               # 128-aligned stage-2 slab
    fp2 = ((slab_off + L + Wp + 1 + 127) // 128) * 128     # padded stage-2 plane

    # Input prep: one fused pad, then a free row-major flatten.
    xp = jnp.pad(x_nchw, ((0, 0), (0, 0), (1, 2), (1, Wp - 1 - W)))
    xp = xp.reshape(N, Cin, (H + 3) * Wp)

    # Conv weights in GEMM form (Cout, 9*C), K ordered (tap, channel).  Conv
    # biases b1/b2 are intentionally not passed: train-mode BN subtracts any
    # per-channel constant via the batch mean (reference keeps them; matches).
    w1 = jnp.transpose(params["w1_oihw"], (0, 2, 3, 1)).reshape(Cout, 9 * Cin)
    w2 = jnp.transpose(params["w2_oihw"], (0, 2, 3, 1)).reshape(Cout, 9 * Cout)
    col = lambda v: v.reshape(-1, 1)

    args = (xp, w1, col(params["g1"]), col(params["be1"]),
            w2, col(params["g2"]), col(params["be2"]))
    full = lambda s: pl.BlockSpec(s, lambda i, _r=len(s): (0,) * _r)

    kernel = functools.partial(conv_block_kernel, W=W, Wp=Wp, slab_off=slab_off)
    out_flat = pl.pallas_call(
        kernel,
        out_shape=jax.ShapeDtypeStruct((N, Cout, L), x_nchw.dtype),
        grid=(1,),
        in_specs=[full(a.shape) for a in args],
        out_specs=full((N, Cout, L)),
        scratch_shapes=[
            pltpu.VMEM((N, Cout, fp2), jnp.float32),                 # stage-2 plane
            pltpu.VMEM((9 * max(Cin, Cout), N * L), jnp.bfloat16),   # im2col hi
            pltpu.VMEM((9 * max(Cin, Cout), N * L), jnp.bfloat16),   # im2col lo
        ],
        compiler_params=pltpu.CompilerParams(
            dimension_semantics=("arbitrary",),
            vmem_limit_bytes=32 * 1024 * 1024),
    )(*args)

    out_lane = out_flat.reshape(N, Cout, H, Wp)
    if keep_lane_padding:
        return out_lane
    # Dense module-equivalent layout (costs one extra output-sized HBM pass).
    return out_lane[:, :, :, :W]


def init_params(key, ch_in, ch_out):
    ks = jax.random.split(key, 8)
    return {
        "w1_oihw": 0.1 * jax.random.normal(ks[0], (ch_out, ch_in, 3, 3), jnp.float32),
        "b1": 0.1 * jax.random.normal(ks[1], (ch_out,), jnp.float32),
        "g1": 1.0 + 0.1 * jax.random.normal(ks[2], (ch_out,), jnp.float32),
        "be1": 0.1 * jax.random.normal(ks[3], (ch_out,), jnp.float32),
        "w2_oihw": 0.1 * jax.random.normal(ks[4], (ch_out, ch_out, 3, 3), jnp.float32),
        "b2": 0.1 * jax.random.normal(ks[5], (ch_out,), jnp.float32),
        "g2": 1.0 + 0.1 * jax.random.normal(ks[6], (ch_out,), jnp.float32),
        "be2": 0.1 * jax.random.normal(ks[7], (ch_out,), jnp.float32),
    }


def reference_forward(x_nchw, p):
    """Pure-JAX reference replicating the PyTorch forward (training-mode BN),
    including the conv biases that the kernel provably drops."""
    def conv(x, w, b):
        y = jax.lax.conv_general_dilated(
            x, w, window_strides=(1, 1), padding=((1, 1), (1, 1)),
            dimension_numbers=("NCHW", "OIHW", "NCHW"),
            precision=jax.lax.Precision.HIGHEST)
        return y + b[None, :, None, None]

    def bn_relu(y, g, bta):
        mean = jnp.mean(y, axis=(0, 2, 3), keepdims=True)
        var = jnp.mean((y - mean) ** 2, axis=(0, 2, 3), keepdims=True)
        yn = (y - mean) / jnp.sqrt(var + EPS)
        return jnp.maximum(yn * g[None, :, None, None] + bta[None, :, None, None], 0.0)

    y = bn_relu(conv(x_nchw, p["w1_oihw"], p["b1"]), p["g1"], p["be1"])
    y = bn_relu(conv(y, p["w2_oihw"], p["b2"]), p["g2"], p["be2"])
    return y


if __name__ == "__main__":
    key = jax.random.PRNGKey(0)
    k_x, k_p = jax.random.split(key)

    N, CH_IN, H, W = 2, 4, 16, 16
    CH_OUT = 8

    x = jax.random.normal(k_x, (N, CH_IN, H, W), jnp.float32)
    params = init_params(k_p, CH_IN, CH_OUT)

    fwd = jax.jit(conv_block_forward)
    y = fwd(x, params)
    jax.block_until_ready(y)

    assert y.shape == (N, CH_OUT, H, W), y.shape

    y_ref = reference_forward(x, params)
    max_err = float(jnp.max(jnp.abs(y - y_ref)))
    assert jnp.allclose(y, y_ref, atol=2e-3, rtol=2e-3), max_err

    print("KERNEL_OK")
</pallas_src>

<mosaic_0001>
module attributes {stable_mosaic.version = 11 : i64} {
  func.func @conv_block_kernel(%arg0: i32, %arg1: memref<2x4x456xf32, #tpu.memory_space<vmem>>, %arg2: memref<8x36xf32, #tpu.memory_space<vmem>>, %arg3: memref<8x1xf32, #tpu.memory_space<vmem>>, %arg4: memref<8x1xf32, #tpu.memory_space<vmem>>, %arg5: memref<8x72xf32, #tpu.memory_space<vmem>>, %arg6: memref<8x1xf32, #tpu.memory_space<vmem>>, %arg7: memref<8x1xf32, #tpu.memory_space<vmem>>, %arg8: memref<2x8x384xf32, #tpu.memory_space<vmem>>, %arg9: memref<2x8x640xf32, #tpu.memory_space<vmem>>, %arg10: memref<72x768xbf16, #tpu.memory_space<vmem>>, %arg11: memref<72x768xbf16, #tpu.memory_space<vmem>>) attributes {dimension_semantics = [#tpu.dimension_semantics<arbitrary>], iteration_bounds = array<i64: 1>, scalar_prefetch = 0 : i64, scratch_operands = 3 : i64, tpu.core_type = #tpu.core_type<tc>, window_params = [{pipeline_mode = #tpu.pipeline_mode<synchronous>, transform_indices = @transform_0, window_bounds = array<i64: 2, 4, 456>}, {pipeline_mode = #tpu.pipeline_mode<synchronous>, transform_indices = @transform_1, window_bounds = array<i64: 8, 36>}, {pipeline_mode = #tpu.pipeline_mode<synchronous>, transform_indices = @transform_2, window_bounds = array<i64: 8, 1>}, {pipeline_mode = #tpu.pipeline_mode<synchronous>, transform_indices = @transform_3, window_bounds = array<i64: 8, 1>}, {pipeline_mode = #tpu.pipeline_mode<synchronous>, transform_indices = @transform_4, window_bounds = array<i64: 8, 72>}, {pipeline_mode = #tpu.pipeline_mode<synchronous>, transform_indices = @transform_5, window_bounds = array<i64: 8, 1>}, {pipeline_mode = #tpu.pipeline_mode<synchronous>, transform_indices = @transform_6, window_bounds = array<i64: 8, 1>}, {pipeline_mode = #tpu.pipeline_mode<synchronous>, transform_indices = @transform_7, window_bounds = array<i64: 2, 8, 384>}]} {
    %0 = tpu.iota {dimensions = array<i32: 1>} : vector<1x768xi32>
    %c24_i32 = arith.constant 24 : i32
    %c0_i32 = arith.constant 0 : i32
    %1 = arith.cmpi eq, %c24_i32, %c0_i32 : i32
    %c1_i32 = arith.constant 1 : i32
    %2 = arith.select %1, %c1_i32, %c24_i32 : i32
    %3 = vector.broadcast %2 : i32 to vector<1x768xi32>
    %4 = arith.remsi %0, %3 : vector<1x768xi32>
    %c0_i32_0 = arith.constant 0 : i32
    %5 = vector.broadcast %c0_i32_0 : i32 to vector<1x768xi32>
    %6 = arith.cmpi ne, %4, %5 : vector<1x768xi32>
    %c0_i32_1 = arith.constant 0 : i32
    %7 = vector.broadcast %c0_i32_1 : i32 to vector<1x768xi32>
    %8 = arith.cmpi slt, %4, %7 : vector<1x768xi32>
    %c0_i32_2 = arith.constant 0 : i32
    %9 = arith.cmpi slt, %2, %c0_i32_2 : i32
    %10 = vector.broadcast %9 : i1 to vector<1x768xi1>
    %11 = vector.broadcast %10 : vector<1x768xi1> to vector<1x768xi1>
    %12 = arith.xori %8, %11 : vector<1x768xi1>
    %13 = arith.andi %12, %6 : vector<1x768xi1>
    %14 = vector.broadcast %2 : i32 to vector<1x768xi32>
    %15 = arith.addi %4, %14 : vector<1x768xi32>
    %16 = arith.select %13, %15, %4 : vector<1x768xi1>, vector<1x768xi32>
    %c16_i32 = arith.constant 16 : i32
    %17 = vector.broadcast %c16_i32 : i32 to vector<1x768xi32>
    %18 = arith.cmpi slt, %16, %17 : vector<1x768xi32>
    %19 = arith.extui %18 : vector<1x768xi1> to vector<1x768xi32>
    %20 = arith.sitofp %19 : vector<1x768xi32> to vector<1x768xf32>
    %c0 = arith.constant 0 : index
    %c0_3 = arith.constant 0 : index
    %c0_4 = arith.constant 0 : index
    %21 = vector.load %arg1[%c0, %c0_3, %c0_4] : memref<2x4x456xf32, #tpu.memory_space<vmem>>, vector<1x4x386xf32>
    %22 = vector.shape_cast %21 : vector<1x4x386xf32> to vector<4x386xf32>
    %23 = vector.extract_strided_slice %22 {offsets = [0, 0], sizes = [4, 384], strides = [1, 1]} : vector<4x386xf32> to vector<4x384xf32>
    %24 = arith.truncf %23 : vector<4x384xf32> to vector<4x384xbf16>
    %25 = arith.extf %24 : vector<4x384xbf16> to vector<4x384xf32>
    %26 = arith.subf %23, %25 : vector<4x384xf32>
    %27 = arith.truncf %26 : vector<4x384xf32> to vector<4x384xbf16>
    %c0_5 = arith.constant 0 : index
    %c0_6 = arith.constant 0 : index
    %28 = vector.load %arg10[%c0_5, %c0_6] : memref<72x768xbf16, #tpu.memory_space<vmem>>, vector<4x384xbf16>
    tpu.vector_store %arg10[%c0_5, %c0_6], %24 {strides = array<i32>} : memref<72x768xbf16, #tpu.memory_space<vmem>>, vector<4x384xbf16>,
    %c0_7 = arith.constant 0 : index
    %c0_8 = arith.constant 0 : index
    %29 = vector.load %arg11[%c0_7, %c0_8] : memref<72x768xbf16, #tpu.memory_space<vmem>>, vector<4x384xbf16>
    tpu.vector_store %arg11[%c0_7, %c0_8], %27 {strides = array<i32>} : memref<72x768xbf16, #tpu.memory_space<vmem>>, vector<4x384xbf16>,
    %30 = vector.extract_strided_slice %22 {offsets = [0, 1], sizes = [4, 384], strides = [1, 1]} : vector<4x386xf32> to vector<4x384xf32>
    %31 = arith.truncf %30 : vector<4x384xf32> to vector<4x384xbf16>
    %32 = arith.extf %31 : vector<4x384xbf16> to vector<4x384xf32>
    %33 = arith.subf %30, %32 : vector<4x384xf32>
    %34 = arith.truncf %33 : vector<4x384xf32> to vector<4x384xbf16>
    %c4 = arith.constant 4 : index
    %c0_9 = arith.constant 0 : index
    %35 = vector.load %arg10[%c4, %c0_9] : memref<72x768xbf16, #tpu.memory_space<vmem>>, vector<4x384xbf16>
    tpu.vector_store %arg10[%c4, %c0_9], %31 {strides = array<i32>} : memref<72x768xbf16, #tpu.memory_space<vmem>>, vector<4x384xbf16>,
    %c4_10 = arith.constant 4 : index
    %c0_11 = arith.constant 0 : index
    %36 = vector.load %arg11[%c4_10, %c0_11] : memref<72x768xbf16, #tpu.memory_space<vmem>>, vector<4x384xbf16>
    tpu.vector_store %arg11[%c4_10, %c0_11], %34 {strides = array<i32>} : memref<72x768xbf16, #tpu.memory_space<vmem>>, vector<4x384xbf16>,
    %37 = vector.extract_strided_slice %22 {offsets = [0, 2], sizes = [4, 384], strides = [1, 1]} : vector<4x386xf32> to vector<4x384xf32>
    %38 = arith.truncf %37 : vector<4x384xf32> to vector<4x384xbf16>
    %39 = arith.extf %38 : vector<4x384xbf16> to vector<4x384xf32>
    %40 = arith.subf %37, %39 : vector<4x384xf32>
    %41 = arith.truncf %40 : vector<4x384xf32> to vector<4x384xbf16>
    %c8 = arith.constant 8 : index
    %c0_12 = arith.constant 0 : index
    %42 = vector.load %arg10[%c8, %c0_12] : memref<72x768xbf16, #tpu.memory_space<vmem>>, vector<4x384xbf16>
    tpu.vector_store %arg10[%c8, %c0_12], %38 {strides = array<i32>} : memref<72x768xbf16, #tpu.memory_space<vmem>>, vector<4x384xbf16>,
    %c8_13 = arith.constant 8 : index
    %c0_14 = arith.constant 0 : index
    %43 = vector.load %arg11[%c8_13, %c0_14] : memref<72x768xbf16, #tpu.memory_space<vmem>>, vector<4x384xbf16>
    tpu.vector_store %arg11[%c8_13, %c0_14], %41 {strides = array<i32>} : memref<72x768xbf16, #tpu.memory_space<vmem>>, vector<4x384xbf16>,
    %c0_15 = arith.constant 0 : index
    %c0_16 = arith.constant 0 : index
    %c24 = arith.constant 24 : index
    %44 = vector.load %arg1[%c0_15, %c0_16, %c24] : memref<2x4x456xf32, #tpu.memory_space<vmem>>, vector<1x4x386xf32>
    %45 = vector.shape_cast %44 : vector<1x4x386xf32> to vector<4x386xf32>
    %46 = vector.extract_strided_slice %45 {offsets = [0, 0], sizes = [4, 384], strides = [1, 1]} : vector<4x386xf32> to vector<4x384xf32>
    %47 = arith.truncf %46 : vector<4x384xf32> to vector<4x384xbf16>
    %48 = arith.extf %47 : vector<4x384xbf16> to vector<4x384xf32>
    %49 = arith.subf %46, %48 : vector<4x384xf32>
    %50 = arith.truncf %49 : vector<4x384xf32> to vector<4x384xbf16>
    %c12 = arith.constant 12 : index
    %c0_17 = arith.constant 0 : index
    %51 = vector.load %arg10[%c12, %c0_17] : memref<72x768xbf16, #tpu.memory_space<vmem>>, vector<4x384xbf16>
    tpu.vector_store %arg10[%c12, %c0_17], %47 {strides = array<i32>} : memref<72x768xbf16, #tpu.memory_space<vmem>>, vector<4x384xbf16>,
    %c12_18 = arith.constant 12 : index
    %c0_19 = arith.constant 0 : index
    %52 = vector.load %arg11[%c12_18, %c0_19] : memref<72x768xbf16, #tpu.memory_space<vmem>>, vector<4x384xbf16>
    tpu.vector_store %arg11[%c12_18, %c0_19], %50 {strides = array<i32>} : memref<72x768xbf16, #tpu.memory_space<vmem>>, vector<4x384xbf16>,
    %53 = vector.extract_strided_slice %45 {offsets = [0, 1], sizes = [4, 384], strides = [1, 1]} : vector<4x386xf32> to vector<4x384xf32>
    %54 = arith.truncf %53 : vector<4x384xf32> to vector<4x384xbf16>
    %55 = arith.extf %54 : vector<4x384xbf16> to vector<4x384xf32>
    %56 = arith.subf %53, %55 : vector<4x384xf32>
    %57 = arith.truncf %56 : vector<4x384xf32> to vector<4x384xbf16>
    %c16 = arith.constant 16 : index
    %c0_20 = arith.constant 0 : index
    %58 = vector.load %arg10[%c16, %c0_20] : memref<72x768xbf16, #tpu.memory_space<vmem>>, vector<4x384xbf16>
    tpu.vector_store %arg10[%c16, %c0_20], %54 {strides = array<i32>} : memref<72x768xbf16, #tpu.memory_space<vmem>>, vector<4x384xbf16>,
    %c16_21 = arith.constant 16 : index
    %c0_22 = arith.constant 0 : index
    %59 = vector.load %arg11[%c16_21, %c0_22] : memref<72x768xbf16, #tpu.memory_space<vmem>>, vector<4x384xbf16>
    tpu.vector_store %arg11[%c16_21, %c0_22], %57 {strides = array<i32>} : memref<72x768xbf16, #tpu.memory_space<vmem>>, vector<4x384xbf16>,
    %60 = vector.extract_strided_slice %45 {offsets = [0, 2], sizes = [4, 384], strides = [1, 1]} : vector<4x386xf32> to vector<4x384xf32>
    %61 = arith.truncf %60 : vector<4x384xf32> to vector<4x384xbf16>
    %62 = arith.extf %61 : vector<4x384xbf16> to vector<4x384xf32>
    %63 = arith.subf %60, %62 : vector<4x384xf32>
    %64 = arith.truncf %63 : vector<4x384xf32> to vector<4x384xbf16>
    %c20 = arith.constant 20 : index
    %c0_23 = arith.constant 0 : index
    %65 = vector.load %arg10[%c20, %c0_23] : memref<72x768xbf16, #tpu.memory_space<vmem>>, vector<4x384xbf16>
    tpu.vector_store %arg10[%c20, %c0_23], %61 {strides = array<i32>} : memref<72x768xbf16, #tpu.memory_space<vmem>>, vector<4x384xbf16>,
    %c20_24 = arith.constant 20 : index
    %c0_25 = arith.constant 0 : index
    %66 = vector.load %arg11[%c20_24, %c0_25] : memref<72x768xbf16, #tpu.memory_space<vmem>>, vector<4x384xbf16>
    tpu.vector_store %arg11[%c20_24, %c0_25], %64 {strides = array<i32>} : memref<72x768xbf16, #tpu.memory_space<vmem>>, vector<4x384xbf16>,
    %c0_26 = arith.constant 0 : index
    %c0_27 = arith.constant 0 : index
    %c48 = arith.constant 48 : index
    %67 = vector.load %arg1[%c0_26, %c0_27, %c48] : memref<2x4x456xf32, #tpu.memory_space<vmem>>, vector<1x4x386xf32>
    %68 = vector.shape_cast %67 : vector<1x4x386xf32> to vector<4x386xf32>
    %69 = vector.extract_strided_slice %68 {offsets = [0, 0], sizes = [4, 384], strides = [1, 1]} : vector<4x386xf32> to vector<4x384xf32>
    %70 = arith.truncf %69 : vector<4x384xf32> to vector<4x384xbf16>
    %71 = arith.extf %70 : vector<4x384xbf16> to vector<4x384xf32>
    %72 = arith.subf %69, %71 : vector<4x384xf32>
    %73 = arith.truncf %72 : vector<4x384xf32> to vector<4x384xbf16>
    %c24_28 = arith.constant 24 : index
    %c0_29 = arith.constant 0 : index
    %74 = vector.load %arg10[%c24_28, %c0_29] : memref<72x768xbf16, #tpu.memory_space<vmem>>, vector<4x384xbf16>
    tpu.vector_store %arg10[%c24_28, %c0_29], %70 {strides = array<i32>} : memref<72x768xbf16, #tpu.memory_space<vmem>>, vector<4x384xbf16>,
    %c24_30 = arith.constant 24 : index
    %c0_31 = arith.constant 0 : index
    %75 = vector.load %arg11[%c24_30, %c0_31] : memref<72x768xbf16, #tpu.memory_space<vmem>>, vector<4x384xbf16>
    tpu.vector_store %arg11[%c24_30, %c0_31], %73 {strides = array<i32>} : memref<72x768xbf16, #tpu.memory_space<vmem>>, vector<4x384xbf16>,
    %76 = vector.extract_strided_slice %68 {offsets = [0, 1], sizes = [4, 384], strides = [1, 1]} : vector<4x386xf32> to vector<4x384xf32>
    %77 = arith.truncf %76 : vector<4x384xf32> to vector<4x384xbf16>
    %78 = arith.extf %77 : vector<4x384xbf16> to vector<4x384xf32>
    %79 = arith.subf %76, %78 : vector<4x384xf32>
    %80 = arith.truncf %79 : vector<4x384xf32> to vector<4x384xbf16>
    %c28 = arith.constant 28 : index
    %c0_32 = arith.constant 0 : index
    %81 = vector.load %arg10[%c28, %c0_32] : memref<72x768xbf16, #tpu.memory_space<vmem>>, vector<4x384xbf16>
    tpu.vector_store %arg10[%c28, %c0_32], %77 {strides = array<i32>} : memref<72x768xbf16, #tpu.memory_space<vmem>>, vector<4x384xbf16>,
    %c28_33 = arith.constant 28 : index
    %c0_34 = arith.constant 0 : index
    %82 = vector.load %arg11[%c28_33, %c0_34] : memref<72x768xbf16, #tpu.memory_space<vmem>>, vector<4x384xbf16>
    tpu.vector_store %arg11[%c28_33, %c0_34], %80 {strides = array<i32>} : memref<72x768xbf16, #tpu.memory_space<vmem>>, vector<4x384xbf16>,
    %83 = vector.extract_strided_slice %68 {offsets = [0, 2], sizes = [4, 384], strides = [1, 1]} : vector<4x386xf32> to vector<4x384xf32>
    %84 = arith.truncf %83 : vector<4x384xf32> to vector<4x384xbf16>
    %85 = arith.extf %84 : vector<4x384xbf16> to vector<4x384xf32>
    %86 = arith.subf %83, %85 : vector<4x384xf32>
    %87 = arith.truncf %86 : vector<4x384xf32> to vector<4x384xbf16>
    %c32 = arith.constant 32 : index
    %c0_35 = arith.constant 0 : index
    %88 = vector.load %arg10[%c32, %c0_35] : memref<72x768xbf16, #tpu.memory_space<vmem>>, vector<4x384xbf16>
    tpu.vector_store %arg10[%c32, %c0_35], %84 {strides = array<i32>} : memref<72x768xbf16, #tpu.memory_space<vmem>>, vector<4x384xbf16>,
    %c32_36 = arith.constant 32 : index
    %c0_37 = arith.constant 0 : index
    %89 = vector.load %arg11[%c32_36, %c0_37] : memref<72x768xbf16, #tpu.memory_space<vmem>>, vector<4x384xbf16>
    tpu.vector_store %arg11[%c32_36, %c0_37], %87 {strides = array<i32>} : memref<72x768xbf16, #tpu.memory_space<vmem>>, vector<4x384xbf16>,
    %c1 = arith.constant 1 : index
    %c0_38 = arith.constant 0 : index
    %c0_39 = arith.constant 0 : index
    %90 = vector.load %arg1[%c1, %c0_38, %c0_39] : memref<2x4x456xf32, #tpu.memory_space<vmem>>, vector<1x4x386xf32>
    %91 = vector.shape_cast %90 : vector<1x4x386xf32> to vector<4x386xf32>
    %92 = vector.extract_strided_slice %91 {offsets = [0, 0], sizes = [4, 384], strides = [1, 1]} : vector<4x386xf32> to vector<4x384xf32>
    %93 = arith.truncf %92 : vector<4x384xf32> to vector<4x384xbf16>
    %94 = arith.extf %93 : vector<4x384xbf16> to vector<4x384xf32>
    %95 = arith.subf %92, %94 : vector<4x384xf32>
    %96 = arith.truncf %95 : vector<4x384xf32> to vector<4x384xbf16>
    %c0_40 = arith.constant 0 : index
    %c384 = arith.constant 384 : index
    %97 = vector.load %arg10[%c0_40, %c384] : memref<72x768xbf16, #tpu.memory_space<vmem>>, vector<4x384xbf16>
    tpu.vector_store %arg10[%c0_40, %c384], %93 {strides = array<i32>} : memref<72x768xbf16, #tpu.memory_space<vmem>>, vector<4x384xbf16>,
    %c0_41 = arith.constant 0 : index
    %c384_42 = arith.constant 384 : index
    %98 = vector.load %arg11[%c0_41, %c384_42] : memref<72x768xbf16, #tpu.memory_space<vmem>>, vector<4x384xbf16>
    tpu.vector_store %arg11[%c0_41, %c384_42], %96 {strides = array<i32>} : memref<72x768xbf16, #tpu.memory_space<vmem>>, vector<4x384xbf16>,
    %99 = vector.extract_strided_slice %91 {offsets = [0, 1], sizes = [4, 384], strides = [1, 1]} : vector<4x386xf32> to vector<4x384xf32>
    %100 = arith.truncf %99 : vector<4x384xf32> to vector<4x384xbf16>
    %101 = arith.extf %100 : vector<4x384xbf16> to vector<4x384xf32>
    %102 = arith.subf %99, %101 : vector<4x384xf32>
    %103 = arith.truncf %102 : vector<4x384xf32> to vector<4x384xbf16>
    %c4_43 = arith.constant 4 : index
    %c384_44 = arith.constant 384 : index
    %104 = vector.load %arg10[%c4_43, %c384_44] : memref<72x768xbf16, #tpu.memory_space<vmem>>, vector<4x384xbf16>
    tpu.vector_store %arg10[%c4_43, %c384_44], %100 {strides = array<i32>} : memref<72x768xbf16, #tpu.memory_space<vmem>>, vector<4x384xbf16>,
    %c4_45 = arith.constant 4 : index
    %c384_46 = arith.constant 384 : index
    %105 = vector.load %arg11[%c4_45, %c384_46] : memref<72x768xbf16, #tpu.memory_space<vmem>>, vector<4x384xbf16>
    tpu.vector_store %arg11[%c4_45, %c384_46], %103 {strides = array<i32>} : memref<72x768xbf16, #tpu.memory_space<vmem>>, vector<4x384xbf16>,
    %106 = vector.extract_strided_slice %91 {offsets = [0, 2], sizes = [4, 384], strides = [1, 1]} : vector<4x386xf32> to vector<4x384xf32>
    %107 = arith.truncf %106 : vector<4x384xf32> to vector<4x384xbf16>
    %108 = arith.extf %107 : vector<4x384xbf16> to vector<4x384xf32>
    %109 = arith.subf %106, %108 : vector<4x384xf32>
    %110 = arith.truncf %109 : vector<4x384xf32> to vector<4x384xbf16>
    %c8_47 = arith.constant 8 : index
    %c384_48 = arith.constant 384 : index
    %111 = vector.load %arg10[%c8_47, %c384_48] : memref<72x768xbf16, #tpu.memory_space<vmem>>, vector<4x384xbf16>
    tpu.vector_store %arg10[%c8_47, %c384_48], %107 {strides = array<i32>} : memref<72x768xbf16, #tpu.memory_space<vmem>>, vector<4x384xbf16>,
    %c8_49 = arith.constant 8 : index
    %c384_50 = arith.constant 384 : index
    %112 = vector.load %arg11[%c8_49, %c384_50] : memref<72x768xbf16, #tpu.memory_space<vmem>>, vector<4x384xbf16>
    tpu.vector_store %arg11[%c8_49, %c384_50], %110 {strides = array<i32>} : memref<72x768xbf16, #tpu.memory_space<vmem>>, vector<4x384xbf16>,
    %c1_51 = arith.constant 1 : index
    %c0_52 = arith.constant 0 : index
    %c24_53 = arith.constant 24 : index
    %113 = vector.load %arg1[%c1_51, %c0_52, %c24_53] : memref<2x4x456xf32, #tpu.memory_space<vmem>>, vector<1x4x386xf32>
    %114 = vector.shape_cast %113 : vector<1x4x386xf32> to vector<4x386xf32>
    %115 = vector.extract_strided_slice %114 {offsets = [0, 0], sizes = [4, 384], strides = [1, 1]} : vector<4x386xf32> to vector<4x384xf32>
    %116 = arith.truncf %115 : vector<4x384xf32> to vector<4x384xbf16>
    %117 = arith.extf %116 : vector<4x384xbf16> to vector<4x384xf32>
    %118 = arith.subf %115, %117 : vector<4x384xf32>
    %119 = arith.truncf %118 : vector<4x384xf32> to vector<4x384xbf16>
    %c12_54 = arith.constant 12 : index
    %c384_55 = arith.constant 384 : index
    %120 = vector.load %arg10[%c12_54, %c384_55] : memref<72x768xbf16, #tpu.memory_space<vmem>>, vector<4x384xbf16>
    tpu.vector_store %arg10[%c12_54, %c384_55], %116 {strides = array<i32>} : memref<72x768xbf16, #tpu.memory_space<vmem>>, vector<4x384xbf16>,
    %c12_56 = arith.constant 12 : index
    %c384_57 = arith.constant 384 : index
    %121 = vector.load %arg11[%c12_56, %c384_57] : memref<72x768xbf16, #tpu.memory_space<vmem>>, vector<4x384xbf16>
    tpu.vector_store %arg11[%c12_56, %c384_57], %119 {strides = array<i32>} : memref<72x768xbf16, #tpu.memory_space<vmem>>, vector<4x384xbf16>,
    %122 = vector.extract_strided_slice %114 {offsets = [0, 1], sizes = [4, 384], strides = [1, 1]} : vector<4x386xf32> to vector<4x384xf32>
    %123 = arith.truncf %122 : vector<4x384xf32> to vector<4x384xbf16>
    %124 = arith.extf %123 : vector<4x384xbf16> to vector<4x384xf32>
    %125 = arith.subf %122, %124 : vector<4x384xf32>
    %126 = arith.truncf %125 : vector<4x384xf32> to vector<4x384xbf16>
    %c16_58 = arith.constant 16 : index
    %c384_59 = arith.constant 384 : index
    %127 = vector.load %arg10[%c16_58, %c384_59] : memref<72x768xbf16, #tpu.memory_space<vmem>>, vector<4x384xbf16>
    tpu.vector_store %arg10[%c16_58, %c384_59], %123 {strides = array<i32>} : memref<72x768xbf16, #tpu.memory_space<vmem>>, vector<4x384xbf16>,
    %c16_60 = arith.constant 16 : index
    %c384_61 = arith.constant 384 : index
    %128 = vector.load %arg11[%c16_60, %c384_61] : memref<72x768xbf16, #tpu.memory_space<vmem>>, vector<4x384xbf16>
    tpu.vector_store %arg11[%c16_60, %c384_61], %126 {strides = array<i32>} : memref<72x768xbf16, #tpu.memory_space<vmem>>, vector<4x384xbf16>,
    %129 = vector.extract_strided_slice %114 {offsets = [0, 2], sizes = [4, 384], strides = [1, 1]} : vector<4x386xf32> to vector<4x384xf32>
    %130 = arith.truncf %129 : vector<4x384xf32> to vector<4x384xbf16>
    %131 = arith.extf %130 : vector<4x384xbf16> to vector<4x384xf32>
    %132 = arith.subf %129, %131 : vector<4x384xf32>
    %133 = arith.truncf %132 : vector<4x384xf32> to vector<4x384xbf16>
    %c20_62 = arith.constant 20 : index
    %c384_63 = arith.constant 384 : index
    %134 = vector.load %arg10[%c20_62, %c384_63] : memref<72x768xbf16, #tpu.memory_space<vmem>>, vector<4x384xbf16>
    tpu.vector_store %arg10[%c20_62, %c384_63], %130 {strides = array<i32>} : memref<72x768xbf16, #tpu.memory_space<vmem>>, vector<4x384xbf16>,
    %c20_64 = arith.constant 20 : index
    %c384_65 = arith.constant 384 : index
    %135 = vector.load %arg11[%c20_64, %c384_65] : memref<72x768xbf16, #tpu.memory_space<vmem>>, vector<4x384xbf16>
    tpu.vector_store %arg11[%c20_64, %c384_65], %133 {strides = array<i32>} : memref<72x768xbf16, #tpu.memory_space<vmem>>, vector<4x384xbf16>,
    %c1_66 = arith.constant 1 : index
    %c0_67 = arith.constant 0 : index
    %c48_68 = arith.constant 48 : index
    %136 = vector.load %arg1[%c1_66, %c0_67, %c48_68] : memref<2x4x456xf32, #tpu.memory_space<vmem>>, vector<1x4x386xf32>
    %137 = vector.shape_cast %136 : vector<1x4x386xf32> to vector<4x386xf32>
    %138 = vector.extract_strided_slice %137 {offsets = [0, 0], sizes = [4, 384], strides = [1, 1]} : vector<4x386xf32> to vector<4x384xf32>
    %139 = arith.truncf %138 : vector<4x384xf32> to vector<4x384xbf16>
    %140 = arith.extf %139 : vector<4x384xbf16> to vector<4x384xf32>
    %141 = arith.subf %138, %140 : vector<4x384xf32>
    %142 = arith.truncf %141 : vector<4x384xf32> to vector<4x384xbf16>
    %c24_69 = arith.constant 24 : index
    %c384_70 = arith.constant 384 : index
    %143 = vector.load %arg10[%c24_69, %c384_70] : memref<72x768xbf16, #tpu.memory_space<vmem>>, vector<4x384xbf16>
    tpu.vector_store %arg10[%c24_69, %c384_70], %139 {strides = array<i32>} : memref<72x768xbf16, #tpu.memory_space<vmem>>, vector<4x384xbf16>,
    %c24_71 = arith.constant 24 : index
    %c384_72 = arith.constant 384 : index
    %144 = vector.load %arg11[%c24_71, %c384_72] : memref<72x768xbf16, #tpu.memory_space<vmem>>, vector<4x384xbf16>
    tpu.vector_store %arg11[%c24_71, %c384_72], %142 {strides = array<i32>} : memref<72x768xbf16, #tpu.memory_space<vmem>>, vector<4x384xbf16>,
    %145 = vector.extract_strided_slice %137 {offsets = [0, 1], sizes = [4, 384], strides = [1, 1]} : vector<4x386xf32> to vector<4x384xf32>
    %146 = arith.truncf %145 : vector<4x384xf32> to vector<4x384xbf16>
    %147 = arith.extf %146 : vector<4x384xbf16> to vector<4x384xf32>
    %148 = arith.subf %145, %147 : vector<4x384xf32>
    %149 = arith.truncf %148 : vector<4x384xf32> to vector<4x384xbf16>
    %c28_73 = arith.constant 28 : index
    %c384_74 = arith.constant 384 : index
    %150 = vector.load %arg10[%c28_73, %c384_74] : memref<72x768xbf16, #tpu.memory_space<vmem>>, vector<4x384xbf16>
    tpu.vector_store %arg10[%c28_73, %c384_74], %146 {strides = array<i32>} : memref<72x768xbf16, #tpu.memory_space<vmem>>, vector<4x384xbf16>,
    %c28_75 = arith.constant 28 : index
    %c384_76 = arith.constant 384 : index
    %151 = vector.load %arg11[%c28_75, %c384_76] : memref<72x768xbf16, #tpu.memory_space<vmem>>, vector<4x384xbf16>
    tpu.vector_store %arg11[%c28_75, %c384_76], %149 {strides = array<i32>} : memref<72x768xbf16, #tpu.memory_space<vmem>>, vector<4x384xbf16>,
    %152 = vector.extract_strided_slice %137 {offsets = [0, 2], sizes = [4, 384], strides = [1, 1]} : vector<4x386xf32> to vector<4x384xf32>
    %153 = arith.truncf %152 : vector<4x384xf32> to vector<4x384xbf16>
    %154 = arith.extf %153 : vector<4x384xbf16> to vector<4x384xf32>
    %155 = arith.subf %152, %154 : vector<4x384xf32>
    %156 = arith.truncf %155 : vector<4x384xf32> to vector<4x384xbf16>
    %c32_77 = arith.constant 32 : index
    %c384_78 = arith.constant 384 : index
    %157 = vector.load %arg10[%c32_77, %c384_78] : memref<72x768xbf16, #tpu.memory_space<vmem>>, vector<4x384xbf16>
    tpu.vector_store %arg10[%c32_77, %c384_78], %153 {strides = array<i32>} : memref<72x768xbf16, #tpu.memory_space<vmem>>, vector<4x384xbf16>,
    %c32_79 = arith.constant 32 : index
    %c384_80 = arith.constant 384 : index
    %158 = vector.load %arg11[%c32_79, %c384_80] : memref<72x768xbf16, #tpu.memory_space<vmem>>, vector<4x384xbf16>
    tpu.vector_store %arg11[%c32_79, %c384_80], %156 {strides = array<i32>} : memref<72x768xbf16, #tpu.memory_space<vmem>>, vector<4x384xbf16>,
    %c0_81 = arith.constant 0 : index
    %c0_82 = arith.constant 0 : index
    %159 = vector.load %arg2[%c0_81, %c0_82] : memref<8x36xf32, #tpu.memory_space<vmem>>, vector<8x36xf32>
    %160 = arith.truncf %159 : vector<8x36xf32> to vector<8x36xbf16>
    %161 = arith.extf %160 : vector<8x36xbf16> to vector<8x36xf32>
    %162 = arith.subf %159, %161 : vector<8x36xf32>
    %163 = arith.truncf %162 : vector<8x36xf32> to vector<8x36xbf16>
    %c0_83 = arith.constant 0 : index
    %c0_84 = arith.constant 0 : index
    %164 = vector.load %arg10[%c0_83, %c0_84] : memref<72x768xbf16, #tpu.memory_space<vmem>>, vector<36x768xbf16>
    %c0_85 = arith.constant 0 : index
    %c0_86 = arith.constant 0 : index
    %165 = vector.load %arg11[%c0_85, %c0_86] : memref<72x768xbf16, #tpu.memory_space<vmem>>, vector<36x768xbf16>
    %cst = arith.constant dense<0.000000e+00> : vector<8x768xf32>
    %166 = tpu.matmul %160, %164, %cst {dimension_numbers = #tpu.dot_dimension_numbers<[1], [0], [0], [1], [0, 0, 1, 1], [], []>} : vector<8x36xbf16>, vector<36x768xbf16>, vector<8x768xf32> -> vector<8x768xf32>
    %cst_87 = arith.constant dense<0.000000e+00> : vector<8x768xf32>
    %167 = tpu.matmul %160, %165, %cst_87 {dimension_numbers = #tpu.dot_dimension_numbers<[1], [0], [0], [1], [0, 0, 1, 1], [], []>} : vector<8x36xbf16>, vector<36x768xbf16>, vector<8x768xf32> -> vector<8x768xf32>
    %168 = arith.addf %166, %167 : vector<8x768xf32>
    %cst_88 = arith.constant dense<0.000000e+00> : vector<8x768xf32>
    %169 = tpu.matmul %163, %164, %cst_88 {dimension_numbers = #tpu.dot_dimension_numbers<[1], [0], [0], [1], [0, 0, 1, 1], [], []>} : vector<8x36xbf16>, vector<36x768xbf16>, vector<8x768xf32> -> vector<8x768xf32>
    %170 = arith.addf %168, %169 : vector<8x768xf32>
    %171 = vector.broadcast %20 : vector<1x768xf32> to vector<8x768xf32>
    %172 = arith.mulf %170, %171 : vector<8x768xf32>
    %cst_89 = arith.constant dense<0.000000e+00> : vector<8xf32>
    %173 = vector.multi_reduction <add>, %172, %cst_89 [1] : vector<8x768xf32> to vector<8xf32>
    %174 = vector.shape_cast %173 : vector<8xf32> to vector<8x1xf32>
    %175 = arith.mulf %172, %172 : vector<8x768xf32>
    %cst_90 = arith.constant dense<0.000000e+00> : vector<8xf32>
    %176 = vector.multi_reduction <add>, %175, %cst_90 [1] : vector<8x768xf32> to vector<8xf32>
    %177 = vector.shape_cast %176 : vector<8xf32> to vector<8x1xf32>
    %cst_91 = arith.constant 0.001953125 : f32
    %178 = vector.broadcast %cst_91 : f32 to vector<8x1xf32>
    %179 = arith.mulf %174, %178 : vector<8x1xf32>
    %cst_92 = arith.constant 0.001953125 : f32
    %180 = vector.broadcast %cst_92 : f32 to vector<8x1xf32>
    %181 = arith.mulf %177, %180 : vector<8x1xf32>
    %182 = arith.mulf %179, %179 : vector<8x1xf32>
    %183 = arith.subf %181, %182 : vector<8x1xf32>
    %cst_93 = arith.constant 0.000000e+00 : f32
    %184 = vector.broadcast %cst_93 : f32 to vector<8x1xf32>
    %185 = arith.maximumf %183, %184 : vector<8x1xf32>
    %c0_94 = arith.constant 0 : index
    %c0_95 = arith.constant 0 : index
    %186 = vector.load %arg3[%c0_94, %c0_95] : memref<8x1xf32, #tpu.memory_space<vmem>>, vector<8x1xf32>
    %cst_96 = arith.constant 9.99999974E-6 : f32
    %187 = vector.broadcast %cst_96 : f32 to vector<8x1xf32>
    %188 = arith.addf %185, %187 : vector<8x1xf32>
    %189 = math.rsqrt %188 : vector<8x1xf32>
    %190 = arith.mulf %186, %189 : vector<8x1xf32>
    %c0_97 = arith.constant 0 : index
    %c0_98 = arith.constant 0 : index
    %191 = vector.load %arg4[%c0_97, %c0_98] : memref<8x1xf32, #tpu.memory_space<vmem>>, vector<8x1xf32>
    %192 = arith.mulf %179, %190 : vector<8x1xf32>
    %193 = arith.subf %191, %192 : vector<8x1xf32>
    %194 = vector.broadcast %190 : vector<8x1xf32> to vector<8x768xf32>
    %195 = arith.mulf %170, %194 : vector<8x768xf32>
    %196 = vector.broadcast %193 : vector<8x1xf32> to vector<8x768xf32>
    %197 = arith.addf %195, %196 : vector<8x768xf32>
    %cst_99 = arith.constant 0.000000e+00 : f32
    %198 = vector.broadcast %cst_99 : f32 to vector<8x768xf32>
    %199 = arith.maximumf %197, %198 : vector<8x768xf32>
    %200 = vector.broadcast %20 : vector<1x768xf32> to vector<8x768xf32>
    %201 = arith.mulf %199, %200 : vector<8x768xf32>
    %cst_100 = arith.constant 0.000000e+00 : f32
    %202 = vector.broadcast %cst_100 : f32 to vector<2x8x128xf32>
    %c0_101 = arith.constant 0 : index
    %c0_102 = arith.constant 0 : index
    %c0_103 = arith.constant 0 : index
    %203 = vector.load %arg9[%c0_101, %c0_102, %c0_103] : memref<2x8x640xf32, #tpu.memory_space<vmem>>, vector<2x8x128xf32>
    tpu.vector_store %arg9[%c0_101, %c0_102, %c0_103], %202 {strides = array<i32>} : memref<2x8x640xf32, #tpu.memory_space<vmem>>, vector<2x8x128xf32>,
    %cst_104 = arith.constant 0.000000e+00 : f32
    %204 = vector.broadcast %cst_104 : f32 to vector<2x8x128xf32>
    %c0_105 = arith.constant 0 : index
    %c0_106 = arith.constant 0 : index
    %c512 = arith.constant 512 : index
    %205 = vector.load %arg9[%c0_105, %c0_106, %c512] : memref<2x8x640xf32, #tpu.memory_space<vmem>>, vector<2x8x128xf32>
    tpu.vector_store %arg9[%c0_105, %c0_106, %c512], %204 {strides = array<i32>} : memref<2x8x640xf32, #tpu.memory_space<vmem>>, vector<2x8x128xf32>,
    %206 = vector.extract_strided_slice %201 {offsets = [0, 0], sizes = [8, 384], strides = [1, 1]} : vector<8x768xf32> to vector<8x384xf32>
    %c0_107 = arith.constant 0 : index
    %c0_108 = arith.constant 0 : index
    %c128 = arith.constant 128 : index
    %207 = vector.load %arg9[%c0_107, %c0_108, %c128] : memref<2x8x640xf32, #tpu.memory_space<vmem>>, vector<1x8x384xf32>
    %208 = vector.shape_cast %207 : vector<1x8x384xf32> to vector<8x384xf32>
    %209 = vector.shape_cast %206 : vector<8x384xf32> to vector<1x8x384xf32>
    tpu.vector_store %arg9[%c0_107, %c0_108, %c128], %209 {strides = array<i32>} : memref<2x8x640xf32, #tpu.memory_space<vmem>>, vector<1x8x384xf32>,
    %210 = vector.extract_strided_slice %201 {offsets = [0, 384], sizes = [8, 384], strides = [1, 1]} : vector<8x768xf32> to vector<8x384xf32>
    %c1_109 = arith.constant 1 : index
    %c0_110 = arith.constant 0 : index
    %c128_111 = arith.constant 128 : index
    %211 = vector.load %arg9[%c1_109, %c0_110, %c128_111] : memref<2x8x640xf32, #tpu.memory_space<vmem>>, vector<1x8x384xf32>
    %212 = vector.shape_cast %211 : vector<1x8x384xf32> to vector<8x384xf32>
    %213 = vector.shape_cast %210 : vector<8x384xf32> to vector<1x8x384xf32>
    tpu.vector_store %arg9[%c1_109, %c0_110, %c128_111], %213 {strides = array<i32>} : memref<2x8x640xf32, #tpu.memory_space<vmem>>, vector<1x8x384xf32>,
    %c0_112 = arith.constant 0 : index
    %c0_113 = arith.constant 0 : index
    %c103 = arith.constant 103 : index
    %214 = vector.load %arg9[%c0_112, %c0_113, %c103] : memref<2x8x640xf32, #tpu.memory_space<vmem>>, vector<1x8x386xf32>
    %215 = vector.shape_cast %214 : vector<1x8x386xf32> to vector<8x386xf32>
    %216 = vector.extract_strided_slice %215 {offsets = [0, 0], sizes = [8, 384], strides = [1, 1]} : vector<8x386xf32> to vector<8x384xf32>
    %217 = arith.truncf %216 : vector<8x384xf32> to vector<8x384xbf16>
    %218 = arith.extf %217 : vector<8x384xbf16> to vector<8x384xf32>
    %219 = arith.subf %216, %218 : vector<8x384xf32>
    %220 = arith.truncf %219 : vector<8x384xf32> to vector<8x384xbf16>
    %c0_114 = arith.constant 0 : index
    %c0_115 = arith.constant 0 : index
    %221 = vector.load %arg10[%c0_114, %c0_115] : memref<72x768xbf16, #tpu.memory_space<vmem>>, vector<8x384xbf16>
    tpu.vector_store %arg10[%c0_114, %c0_115], %217 {strides = array<i32>} : memref<72x768xbf16, #tpu.memory_space<vmem>>, vector<8x384xbf16>,
    %c0_116 = arith.constant 0 : index
    %c0_117 = arith.constant 0 : index
    %222 = vector.load %arg11[%c0_116, %c0_117] : memref<72x768xbf16, #tpu.memory_space<vmem>>, vector<8x384xbf16>
    tpu.vector_store %arg11[%c0_116, %c0_117], %220 {strides = array<i32>} : memref<72x768xbf16, #tpu.memory_space<vmem>>, vector<8x384xbf16>,
    %223 = vector.extract_strided_slice %215 {offsets = [0, 1], sizes = [8, 384], strides = [1, 1]} : vector<8x386xf32> to vector<8x384xf32>
    %224 = arith.truncf %223 : vector<8x384xf32> to vector<8x384xbf16>
    %225 = arith.extf %224 : vector<8x384xbf16> to vector<8x384xf32>
    %226 = arith.subf %223, %225 : vector<8x384xf32>
    %227 = arith.truncf %226 : vector<8x384xf32> to vector<8x384xbf16>
    %c8_118 = arith.constant 8 : index
    %c0_119 = arith.constant 0 : index
    %228 = vector.load %arg10[%c8_118, %c0_119] : memref<72x768xbf16, #tpu.memory_space<vmem>>, vector<8x384xbf16>
    tpu.vector_store %arg10[%c8_118, %c0_119], %224 {strides = array<i32>} : memref<72x768xbf16, #tpu.memory_space<vmem>>, vector<8x384xbf16>,
    %c8_120 = arith.constant 8 : index
    %c0_121 = arith.constant 0 : index
    %229 = vector.load %arg11[%c8_120, %c0_121] : memref<72x768xbf16, #tpu.memory_space<vmem>>, vector<8x384xbf16>
    tpu.vector_store %arg11[%c8_120, %c0_121], %227 {strides = array<i32>} : memref<72x768xbf16, #tpu.memory_space<vmem>>, vector<8x384xbf16>,
    %230 = vector.extract_strided_slice %215 {offsets = [0, 2], sizes = [8, 384], strides = [1, 1]} : vector<8x386xf32> to vector<8x384xf32>
    %231 = arith.truncf %230 : vector<8x384xf32> to vector<8x384xbf16>
    %232 = arith.extf %231 : vector<8x384xbf16> to vector<8x384xf32>
    %233 = arith.subf %230, %232 : vector<8x384xf32>
    %234 = arith.truncf %233 : vector<8x384xf32> to vector<8x384xbf16>
    %c16_122 = arith.constant 16 : index
    %c0_123 = arith.constant 0 : index
    %235 = vector.load %arg10[%c16_122, %c0_123] : memref<72x768xbf16, #tpu.memory_space<vmem>>, vector<8x384xbf16>
    tpu.vector_store %arg10[%c16_122, %c0_123], %231 {strides = array<i32>} : memref<72x768xbf16, #tpu.memory_space<vmem>>, vector<8x384xbf16>,
    %c16_124 = arith.constant 16 : index
    %c0_125 = arith.constant 0 : index
    %236 = vector.load %arg11[%c16_124, %c0_125] : memref<72x768xbf16, #tpu.memory_space<vmem>>, vector<8x384xbf16>
    tpu.vector_store %arg11[%c16_124, %c0_125], %234 {strides = array<i32>} : memref<72x768xbf16, #tpu.memory_space<vmem>>, vector<8x384xbf16>,
    %c0_126 = arith.constant 0 : index
    %c0_127 = arith.constant 0 : index
    %c127 = arith.constant 127 : index
    %237 = vector.load %arg9[%c0_126, %c0_127, %c127] : memref<2x8x640xf32, #tpu.memory_space<vmem>>, vector<1x8x386xf32>
    %238 = vector.shape_cast %237 : vector<1x8x386xf32> to vector<8x386xf32>
    %239 = vector.extract_strided_slice %238 {offsets = [0, 0], sizes = [8, 384], strides = [1, 1]} : vector<8x386xf32> to vector<8x384xf32>
    %240 = arith.truncf %239 : vector<8x384xf32> to vector<8x384xbf16>
    %241 = arith.extf %240 : vector<8x384xbf16> to vector<8x384xf32>
    %242 = arith.subf %239, %241 : vector<8x384xf32>
    %243 = arith.truncf %242 : vector<8x384xf32> to vector<8x384xbf16>
    %c24_128 = arith.constant 24 : index
    %c0_129 = arith.constant 0 : index
    %244 = vector.load %arg10[%c24_128, %c0_129] : memref<72x768xbf16, #tpu.memory_space<vmem>>, vector<8x384xbf16>
    tpu.vector_store %arg10[%c24_128, %c0_129], %240 {strides = array<i32>} : memref<72x768xbf16, #tpu.memory_space<vmem>>, vector<8x384xbf16>,
    %c24_130 = arith.constant 24 : index
    %c0_131 = arith.constant 0 : index
    %245 = vector.load %arg11[%c24_130, %c0_131] : memref<72x768xbf16, #tpu.memory_space<vmem>>, vector<8x384xbf16>
    tpu.vector_store %arg11[%c24_130, %c0_131], %243 {strides = array<i32>} : memref<72x768xbf16, #tpu.memory_space<vmem>>, vector<8x384xbf16>,
    %246 = vector.extract_strided_slice %238 {offsets = [0, 1], sizes = [8, 384], strides = [1, 1]} : vector<8x386xf32> to vector<8x384xf32>
    %247 = arith.truncf %246 : vector<8x384xf32> to vector<8x384xbf16>
    %248 = arith.extf %247 : vector<8x384xbf16> to vector<8x384xf32>
    %249 = arith.subf %246, %248 : vector<8x384xf32>
    %250 = arith.truncf %249 : vector<8x384xf32> to vector<8x384xbf16>
    %c32_132 = arith.constant 32 : index
    %c0_133 = arith.constant 0 : index
    %251 = vector.load %arg10[%c32_132, %c0_133] : memref<72x768xbf16, #tpu.memory_space<vmem>>, vector<8x384xbf16>
    tpu.vector_store %arg10[%c32_132, %c0_133], %247 {strides = array<i32>} : memref<72x768xbf16, #tpu.memory_space<vmem>>, vector<8x384xbf16>,
    %c32_134 = arith.constant 32 : index
    %c0_135 = arith.constant 0 : index
    %252 = vector.load %arg11[%c32_134, %c0_135] : memref<72x768xbf16, #tpu.memory_space<vmem>>, vector<8x384xbf16>
    tpu.vector_store %arg11[%c32_134, %c0_135], %250 {strides = array<i32>} : memref<72x768xbf16, #tpu.memory_space<vmem>>, vector<8x384xbf16>,
    %253 = vector.extract_strided_slice %238 {offsets = [0, 2], sizes = [8, 384], strides = [1, 1]} : vector<8x386xf32> to vector<8x384xf32>
    %254 = arith.truncf %253 : vector<8x384xf32> to vector<8x384xbf16>
    %255 = arith.extf %254 : vector<8x384xbf16> to vector<8x384xf32>
    %256 = arith.subf %253, %255 : vector<8x384xf32>
    %257 = arith.truncf %256 : vector<8x384xf32> to vector<8x384xbf16>
    %c40 = arith.constant 40 : index
    %c0_136 = arith.constant 0 : index
    %258 = vector.load %arg10[%c40, %c0_136] : memref<72x768xbf16, #tpu.memory_space<vmem>>, vector<8x384xbf16>
    tpu.vector_store %arg10[%c40, %c0_136], %254 {strides = array<i32>} : memref<72x768xbf16, #tpu.memory_space<vmem>>, vector<8x384xbf16>,
    %c40_137 = arith.constant 40 : index
    %c0_138 = arith.constant 0 : index
    %259 = vector.load %arg11[%c40_137, %c0_138] : memref<72x768xbf16, #tpu.memory_space<vmem>>, vector<8x384xbf16>
    tpu.vector_store %arg11[%c40_137, %c0_138], %257 {strides = array<i32>} : memref<72x768xbf16, #tpu.memory_space<vmem>>, vector<8x384xbf16>,
    %c0_139 = arith.constant 0 : index
    %c0_140 = arith.constant 0 : index
    %c151 = arith.constant 151 : index
    %260 = vector.load %arg9[%c0_139, %c0_140, %c151] : memref<2x8x640xf32, #tpu.memory_space<vmem>>, vector<1x8x386xf32>
    %261 = vector.shape_cast %260 : vector<1x8x386xf32> to vector<8x386xf32>
    %262 = vector.extract_strided_slice %261 {offsets = [0, 0], sizes = [8, 384], strides = [1, 1]} : vector<8x386xf32> to vector<8x384xf32>
    %263 = arith.truncf %262 : vector<8x384xf32> to vector<8x384xbf16>
    %264 = arith.extf %263 : vector<8x384xbf16> to vector<8x384xf32>
    %265 = arith.subf %262, %264 : vector<8x384xf32>
    %266 = arith.truncf %265 : vector<8x384xf32> to vector<8x384xbf16>
    %c48_141 = arith.constant 48 : index
    %c0_142 = arith.constant 0 : index
    %267 = vector.load %arg10[%c48_141, %c0_142] : memref<72x768xbf16, #tpu.memory_space<vmem>>, vector<8x384xbf16>
    tpu.vector_store %arg10[%c48_141, %c0_142], %263 {strides = array<i32>} : memref<72x768xbf16, #tpu.memory_space<vmem>>, vector<8x384xbf16>,
    %c48_143 = arith.constant 48 : index
    %c0_144 = arith.constant 0 : index
    %268 = vector.load %arg11[%c48_143, %c0_144] : memref<72x768xbf16, #tpu.memory_space<vmem>>, vector<8x384xbf16>
    tpu.vector_store %arg11[%c48_143, %c0_144], %266 {strides = array<i32>} : memref<72x768xbf16, #tpu.memory_space<vmem>>, vector<8x384xbf16>,
    %269 = vector.extract_strided_slice %261 {offsets = [0, 1], sizes = [8, 384], strides = [1, 1]} : vector<8x386xf32> to vector<8x384xf32>
    %270 = arith.truncf %269 : vector<8x384xf32> to vector<8x384xbf16>
    %271 = arith.extf %270 : vector<8x384xbf16> to vector<8x384xf32>
    %272 = arith.subf %269, %271 : vector<8x384xf32>
    %273 = arith.truncf %272 : vector<8x384xf32> to vector<8x384xbf16>
    %c56 = arith.constant 56 : index
    %c0_145 = arith.constant 0 : index
    %274 = vector.load %arg10[%c56, %c0_145] : memref<72x768xbf16, #tpu.memory_space<vmem>>, vector<8x384xbf16>
    tpu.vector_store %arg10[%c56, %c0_145], %270 {strides = array<i32>} : memref<72x768xbf16, #tpu.memory_space<vmem>>, vector<8x384xbf16>,
    %c56_146 = arith.constant 56 : index
    %c0_147 = arith.constant 0 : index
    %275 = vector.load %arg11[%c56_146, %c0_147] : memref<72x768xbf16, #tpu.memory_space<vmem>>, vector<8x384xbf16>
    tpu.vector_store %arg11[%c56_146, %c0_147], %273 {strides = array<i32>} : memref<72x768xbf16, #tpu.memory_space<vmem>>, vector<8x384xbf16>,
    %276 = vector.extract_strided_slice %261 {offsets = [0, 2], sizes = [8, 384], strides = [1, 1]} : vector<8x386xf32> to vector<8x384xf32>
    %277 = arith.truncf %276 : vector<8x384xf32> to vector<8x384xbf16>
    %278 = arith.extf %277 : vector<8x384xbf16> to vector<8x384xf32>
    %279 = arith.subf %276, %278 : vector<8x384xf32>
    %280 = arith.truncf %279 : vector<8x384xf32> to vector<8x384xbf16>
    %c64 = arith.constant 64 : index
    %c0_148 = arith.constant 0 : index
    %281 = vector.load %arg10[%c64, %c0_148] : memref<72x768xbf16, #tpu.memory_space<vmem>>, vector<8x384xbf16>
    tpu.vector_store %arg10[%c64, %c0_148], %277 {strides = array<i32>} : memref<72x768xbf16, #tpu.memory_space<vmem>>, vector<8x384xbf16>,
    %c64_149 = arith.constant 64 : index
    %c0_150 = arith.constant 0 : index
    %282 = vector.load %arg11[%c64_149, %c0_150] : memref<72x768xbf16, #tpu.memory_space<vmem>>, vector<8x384xbf16>
    tpu.vector_store %arg11[%c64_149, %c0_150], %280 {strides = array<i32>} : memref<72x768xbf16, #tpu.memory_space<vmem>>, vector<8x384xbf16>,
    %c1_151 = arith.constant 1 : index
    %c0_152 = arith.constant 0 : index
    %c103_153 = arith.constant 103 : index
    %283 = vector.load %arg9[%c1_151, %c0_152, %c103_153] : memref<2x8x640xf32, #tpu.memory_space<vmem>>, vector<1x8x386xf32>
    %284 = vector.shape_cast %283 : vector<1x8x386xf32> to vector<8x386xf32>
    %285 = vector.extract_strided_slice %284 {offsets = [0, 0], sizes = [8, 384], strides = [1, 1]} : vector<8x386xf32> to vector<8x384xf32>
    %286 = arith.truncf %285 : vector<8x384xf32> to vector<8x384xbf16>
    %287 = arith.extf %286 : vector<8x384xbf16> to vector<8x384xf32>
    %288 = arith.subf %285, %287 : vector<8x384xf32>
    %289 = arith.truncf %288 : vector<8x384xf32> to vector<8x384xbf16>
    %c0_154 = arith.constant 0 : index
    %c384_155 = arith.constant 384 : index
    %290 = vector.load %arg10[%c0_154, %c384_155] : memref<72x768xbf16, #tpu.memory_space<vmem>>, vector<8x384xbf16>
    tpu.vector_store %arg10[%c0_154, %c384_155], %286 {strides = array<i32>} : memref<72x768xbf16, #tpu.memory_space<vmem>>, vector<8x384xbf16>,
    %c0_156 = arith.constant 0 : index
    %c384_157 = arith.constant 384 : index
    %291 = vector.load %arg11[%c0_156, %c384_157] : memref<72x768xbf16, #tpu.memory_space<vmem>>, vector<8x384xbf16>
    tpu.vector_store %arg11[%c0_156, %c384_157], %289 {strides = array<i32>} : memref<72x768xbf16, #tpu.memory_space<vmem>>, vector<8x384xbf16>,
    %292 = vector.extract_strided_slice %284 {offsets = [0, 1], sizes = [8, 384], strides = [1, 1]} : vector<8x386xf32> to vector<8x384xf32>
    %293 = arith.truncf %292 : vector<8x384xf32> to vector<8x384xbf16>
    %294 = arith.extf %293 : vector<8x384xbf16> to vector<8x384xf32>
    %295 = arith.subf %292, %294 : vector<8x384xf32>
    %296 = arith.truncf %295 : vector<8x384xf32> to vector<8x384xbf16>
    %c8_158 = arith.constant 8 : index
    %c384_159 = arith.constant 384 : index
    %297 = vector.load %arg10[%c8_158, %c384_159] : memref<72x768xbf16, #tpu.memory_space<vmem>>, vector<8x384xbf16>
    tpu.vector_store %arg10[%c8_158, %c384_159], %293 {strides = array<i32>} : memref<72x768xbf16, #tpu.memory_space<vmem>>, vector<8x384xbf16>,
    %c8_160 = arith.constant 8 : index
    %c384_161 = arith.constant 384 : index
    %298 = vector.load %arg11[%c8_160, %c384_161] : memref<72x768xbf16, #tpu.memory_space<vmem>>, vector<8x384xbf16>
    tpu.vector_store %arg11[%c8_160, %c384_161], %296 {strides = array<i32>} : memref<72x768xbf16, #tpu.memory_space<vmem>>, vector<8x384xbf16>,
    %299 = vector.extract_strided_slice %284 {offsets = [0, 2], sizes = [8, 384], strides = [1, 1]} : vector<8x386xf32> to vector<8x384xf32>
    %300 = arith.truncf %299 : vector<8x384xf32> to vector<8x384xbf16>
    %301 = arith.extf %300 : vector<8x384xbf16> to vector<8x384xf32>
    %302 = arith.subf %299, %301 : vector<8x384xf32>
    %303 = arith.truncf %302 : vector<8x384xf32> to vector<8x384xbf16>
    %c16_162 = arith.constant 16 : index
    %c384_163 = arith.constant 384 : index
    %304 = vector.load %arg10[%c16_162, %c384_163] : memref<72x768xbf16, #tpu.memory_space<vmem>>, vector<8x384xbf16>
    tpu.vector_store %arg10[%c16_162, %c384_163], %300 {strides = array<i32>} : memref<72x768xbf16, #tpu.memory_space<vmem>>, vector<8x384xbf16>,
    %c16_164 = arith.constant 16 : index
    %c384_165 = arith.constant 384 : index
    %305 = vector.load %arg11[%c16_164, %c384_165] : memref<72x768xbf16, #tpu.memory_space<vmem>>, vector<8x384xbf16>
    tpu.vector_store %arg11[%c16_164, %c384_165], %303 {strides = array<i32>} : memref<72x768xbf16, #tpu.memory_space<vmem>>, vector<8x384xbf16>,
    %c1_166 = arith.constant 1 : index
    %c0_167 = arith.constant 0 : index
    %c127_168 = arith.constant 127 : index
    %306 = vector.load %arg9[%c1_166, %c0_167, %c127_168] : memref<2x8x640xf32, #tpu.memory_space<vmem>>, vector<1x8x386xf32>
    %307 = vector.shape_cast %306 : vector<1x8x386xf32> to vector<8x386xf32>
    %308 = vector.extract_strided_slice %307 {offsets = [0, 0], sizes = [8, 384], strides = [1, 1]} : vector<8x386xf32> to vector<8x384xf32>
    %309 = arith.truncf %308 : vector<8x384xf32> to vector<8x384xbf16>
    %310 = arith.extf %309 : vector<8x384xbf16> to vector<8x384xf32>
    %311 = arith.subf %308, %310 : vector<8x384xf32>
    %312 = arith.truncf %311 : vector<8x384xf32> to vector<8x384xbf16>
    %c24_169 = arith.constant 24 : index
    %c384_170 = arith.constant 384 : index
    %313 = vector.load %arg10[%c24_169, %c384_170] : memref<72x768xbf16, #tpu.memory_space<vmem>>, vector<8x384xbf16>
    tpu.vector_store %arg10[%c24_169, %c384_170], %309 {strides = array<i32>} : memref<72x768xbf16, #tpu.memory_space<vmem>>, vector<8x384xbf16>,
    %c24_171 = arith.constant 24 : index
    %c384_172 = arith.constant 384 : index
    %314 = vector.load %arg11[%c24_171, %c384_172] : memref<72x768xbf16, #tpu.memory_space<vmem>>, vector<8x384xbf16>
    tpu.vector_store %arg11[%c24_171, %c384_172], %312 {strides = array<i32>} : memref<72x768xbf16, #tpu.memory_space<vmem>>, vector<8x384xbf16>,
    %315 = vector.extract_strided_slice %307 {offsets = [0, 1], sizes = [8, 384], strides = [1, 1]} : vector<8x386xf32> to vector<8x384xf32>
    %316 = arith.truncf %315 : vector<8x384xf32> to vector<8x384xbf16>
    %317 = arith.extf %316 : vector<8x384xbf16> to vector<8x384xf32>
    %318 = arith.subf %315, %317 : vector<8x384xf32>
    %319 = arith.truncf %318 : vector<8x384xf32> to vector<8x384xbf16>
    %c32_173 = arith.constant 32 : index
    %c384_174 = arith.constant 384 : index
    %320 = vector.load %arg10[%c32_173, %c384_174] : memref<72x768xbf16, #tpu.memory_space<vmem>>, vector<8x384xbf16>
    tpu.vector_store %arg10[%c32_173, %c384_174], %316 {strides = array<i32>} : memref<72x768xbf16, #tpu.memory_space<vmem>>, vector<8x384xbf16>,
    %c32_175 = arith.constant 32 : index
    %c384_176 = arith.constant 384 : index
    %321 = vector.load %arg11[%c32_175, %c384_176] : memref<72x768xbf16, #tpu.memory_space<vmem>>, vector<8x384xbf16>
    tpu.vector_store %arg11[%c32_175, %c384_176], %319 {strides = array<i32>} : memref<72x768xbf16, #tpu.memory_space<vmem>>, vector<8x384xbf16>,
    %322 = vector.extract_strided_slice %307 {offsets = [0, 2], sizes = [8, 384], strides = [1, 1]} : vector<8x386xf32> to vector<8x384xf32>
    %323 = arith.truncf %322 : vector<8x384xf32> to vector<8x384xbf16>
    %324 = arith.extf %323 : vector<8x384xbf16> to vector<8x384xf32>
    %325 = arith.subf %322, %324 : vector<8x384xf32>
    %326 = arith.truncf %325 : vector<8x384xf32> to vector<8x384xbf16>
    %c40_177 = arith.constant 40 : index
    %c384_178 = arith.constant 384 : index
    %327 = vector.load %arg10[%c40_177, %c384_178] : memref<72x768xbf16, #tpu.memory_space<vmem>>, vector<8x384xbf16>
    tpu.vector_store %arg10[%c40_177, %c384_178], %323 {strides = array<i32>} : memref<72x768xbf16, #tpu.memory_space<vmem>>, vector<8x384xbf16>,
    %c40_179 = arith.constant 40 : index
    %c384_180 = arith.constant 384 : index
    %328 = vector.load %arg11[%c40_179, %c384_180] : memref<72x768xbf16, #tpu.memory_space<vmem>>, vector<8x384xbf16>
    tpu.vector_store %arg11[%c40_179, %c384_180], %326 {strides = array<i32>} : memref<72x768xbf16, #tpu.memory_space<vmem>>, vector<8x384xbf16>,
    %c1_181 = arith.constant 1 : index
    %c0_182 = arith.constant 0 : index
    %c151_183 = arith.constant 151 : index
    %329 = vector.load %arg9[%c1_181, %c0_182, %c151_183] : memref<2x8x640xf32, #tpu.memory_space<vmem>>, vector<1x8x386xf32>
    %330 = vector.shape_cast %329 : vector<1x8x386xf32> to vector<8x386xf32>
    %331 = vector.extract_strided_slice %330 {offsets = [0, 0], sizes = [8, 384], strides = [1, 1]} : vector<8x386xf32> to vector<8x384xf32>
    %332 = arith.truncf %331 : vector<8x384xf32> to vector<8x384xbf16>
    %333 = arith.extf %332 : vector<8x384xbf16> to vector<8x384xf32>
    %334 = arith.subf %331, %333 : vector<8x384xf32>
    %335 = arith.truncf %334 : vector<8x384xf32> to vector<8x384xbf16>
    %c48_184 = arith.constant 48 : index
    %c384_185 = arith.constant 384 : index
    %336 = vector.load %arg10[%c48_184, %c384_185] : memref<72x768xbf16, #tpu.memory_space<vmem>>, vector<8x384xbf16>
    tpu.vector_store %arg10[%c48_184, %c384_185], %332 {strides = array<i32>} : memref<72x768xbf16, #tpu.memory_space<vmem>>, vector<8x384xbf16>,
    %c48_186 = arith.constant 48 : index
    %c384_187 = arith.constant 384 : index
    %337 = vector.load %arg11[%c48_186, %c384_187] : memref<72x768xbf16, #tpu.memory_space<vmem>>, vector<8x384xbf16>
    tpu.vector_store %arg11[%c48_186, %c384_187], %335 {strides = array<i32>} : memref<72x768xbf16, #tpu.memory_space<vmem>>, vector<8x384xbf16>,
    %338 = vector.extract_strided_slice %330 {offsets = [0, 1], sizes = [8, 384], strides = [1, 1]} : vector<8x386xf32> to vector<8x384xf32>
    %339 = arith.truncf %338 : vector<8x384xf32> to vector<8x384xbf16>
    %340 = arith.extf %339 : vector<8x384xbf16> to vector<8x384xf32>
    %341 = arith.subf %338, %340 : vector<8x384xf32>
    %342 = arith.truncf %341 : vector<8x384xf32> to vector<8x384xbf16>
    %c56_188 = arith.constant 56 : index
    %c384_189 = arith.constant 384 : index
    %343 = vector.load %arg10[%c56_188, %c384_189] : memref<72x768xbf16, #tpu.memory_space<vmem>>, vector<8x384xbf16>
    tpu.vector_store %arg10[%c56_188, %c384_189], %339 {strides = array<i32>} : memref<72x768xbf16, #tpu.memory_space<vmem>>, vector<8x384xbf16>,
    %c56_190 = arith.constant 56 : index
    %c384_191 = arith.constant 384 : index
    %344 = vector.load %arg11[%c56_190, %c384_191] : memref<72x768xbf16, #tpu.memory_space<vmem>>, vector<8x384xbf16>
    tpu.vector_store %arg11[%c56_190, %c384_191], %342 {strides = array<i32>} : memref<72x768xbf16, #tpu.memory_space<vmem>>, vector<8x384xbf16>,
    %345 = vector.extract_strided_slice %330 {offsets = [0, 2], sizes = [8, 384], strides = [1, 1]} : vector<8x386xf32> to vector<8x384xf32>
    %346 = arith.truncf %345 : vector<8x384xf32> to vector<8x384xbf16>
    %347 = arith.extf %346 : vector<8x384xbf16> to vector<8x384xf32>
    %348 = arith.subf %345, %347 : vector<8x384xf32>
    %349 = arith.truncf %348 : vector<8x384xf32> to vector<8x384xbf16>
    %c64_192 = arith.constant 64 : index
    %c384_193 = arith.constant 384 : index
    %350 = vector.load %arg10[%c64_192, %c384_193] : memref<72x768xbf16, #tpu.memory_space<vmem>>, vector<8x384xbf16>
    tpu.vector_store %arg10[%c64_192, %c384_193], %346 {strides = array<i32>} : memref<72x768xbf16, #tpu.memory_space<vmem>>, vector<8x384xbf16>,
    %c64_194 = arith.constant 64 : index
    %c384_195 = arith.constant 384 : index
    %351 = vector.load %arg11[%c64_194, %c384_195] : memref<72x768xbf16, #tpu.memory_space<vmem>>, vector<8x384xbf16>
    tpu.vector_store %arg11[%c64_194, %c384_195], %349 {strides = array<i32>} : memref<72x768xbf16, #tpu.memory_space<vmem>>, vector<8x384xbf16>,
    %c0_196 = arith.constant 0 : index
    %c0_197 = arith.constant 0 : index
    %352 = vector.load %arg5[%c0_196, %c0_197] : memref<8x72xf32, #tpu.memory_space<vmem>>, vector<8x72xf32>
    %353 = arith.truncf %352 : vector<8x72xf32> to vector<8x72xbf16>
    %354 = arith.extf %353 : vector<8x72xbf16> to vector<8x72xf32>
    %355 = arith.subf %352, %354 : vector<8x72xf32>
    %356 = arith.truncf %355 : vector<8x72xf32> to vector<8x72xbf16>
    %c0_198 = arith.constant 0 : index
    %c0_199 = arith.constant 0 : index
    %357 = vector.load %arg10[%c0_198, %c0_199] : memref<72x768xbf16, #tpu.memory_space<vmem>>, vector<72x768xbf16>
    %c0_200 = arith.constant 0 : index
    %c0_201 = arith.constant 0 : index
    %358 = vector.load %arg11[%c0_200, %c0_201] : memref<72x768xbf16, #tpu.memory_space<vmem>>, vector<72x768xbf16>
    %cst_202 = arith.constant dense<0.000000e+00> : vector<8x768xf32>
    %359 = tpu.matmul %353, %357, %cst_202 {dimension_numbers = #tpu.dot_dimension_numbers<[1], [0], [0], [1], [0, 0, 1, 1], [], []>} : vector<8x72xbf16>, vector<72x768xbf16>, vector<8x768xf32> -> vector<8x768xf32>
    %cst_203 = arith.constant dense<0.000000e+00> : vector<8x768xf32>
    %360 = tpu.matmul %353, %358, %cst_203 {dimension_numbers = #tpu.dot_dimension_numbers<[1], [0], [0], [1], [0, 0, 1, 1], [], []>} : vector<8x72xbf16>, vector<72x768xbf16>, vector<8x768xf32> -> vector<8x768xf32>
    %361 = arith.addf %359, %360 : vector<8x768xf32>
    %cst_204 = arith.constant dense<0.000000e+00> : vector<8x768xf32>
    %362 = tpu.matmul %356, %357, %cst_204 {dimension_numbers = #tpu.dot_dimension_numbers<[1], [0], [0], [1], [0, 0, 1, 1], [], []>} : vector<8x72xbf16>, vector<72x768xbf16>, vector<8x768xf32> -> vector<8x768xf32>
    %363 = arith.addf %361, %362 : vector<8x768xf32>
    %364 = vector.broadcast %20 : vector<1x768xf32> to vector<8x768xf32>
    %365 = arith.mulf %363, %364 : vector<8x768xf32>
    %cst_205 = arith.constant dense<0.000000e+00> : vector<8xf32>
    %366 = vector.multi_reduction <add>, %365, %cst_205 [1] : vector<8x768xf32> to vector<8xf32>
    %367 = vector.shape_cast %366 : vector<8xf32> to vector<8x1xf32>
    %368 = arith.mulf %365, %365 : vector<8x768xf32>
    %cst_206 = arith.constant dense<0.000000e+00> : vector<8xf32>
    %369 = vector.multi_reduction <add>, %368, %cst_206 [1] : vector<8x768xf32> to vector<8xf32>
    %370 = vector.shape_cast %369 : vector<8xf32> to vector<8x1xf32>
    %cst_207 = arith.constant 0.001953125 : f32
    %371 = vector.broadcast %cst_207 : f32 to vector<8x1xf32>
    %372 = arith.mulf %367, %371 : vector<8x1xf32>
    %cst_208 = arith.constant 0.001953125 : f32
    %373 = vector.broadcast %cst_208 : f32 to vector<8x1xf32>
    %374 = arith.mulf %370, %373 : vector<8x1xf32>
    %375 = arith.mulf %372, %372 : vector<8x1xf32>
    %376 = arith.subf %374, %375 : vector<8x1xf32>
    %cst_209 = arith.constant 0.000000e+00 : f32
    %377 = vector.broadcast %cst_209 : f32 to vector<8x1xf32>
    %378 = arith.maximumf %376, %377 : vector<8x1xf32>
    %c0_210 = arith.constant 0 : index
    %c0_211 = arith.constant 0 : index
    %379 = vector.load %arg6[%c0_210, %c0_211] : memref<8x1xf32, #tpu.memory_space<vmem>>, vector<8x1xf32>
    %cst_212 = arith.constant 9.99999974E-6 : f32
    %380 = vector.broadcast %cst_212 : f32 to vector<8x1xf32>
    %381 = arith.addf %378, %380 : vector<8x1xf32>
    %382 = math.rsqrt %381 : vector<8x1xf32>
    %383 = arith.mulf %379, %382 : vector<8x1xf32>
    %c0_213 = arith.constant 0 : index
    %c0_214 = arith.constant 0 : index
    %384 = vector.load %arg7[%c0_213, %c0_214] : memref<8x1xf32, #tpu.memory_space<vmem>>, vector<8x1xf32>
    %385 = arith.mulf %372, %383 : vector<8x1xf32>
    %386 = arith.subf %384, %385 : vector<8x1xf32>
    %387 = vector.broadcast %383 : vector<8x1xf32> to vector<8x768xf32>
    %388 = arith.mulf %363, %387 : vector<8x768xf32>
    %389 = vector.broadcast %386 : vector<8x1xf32> to vector<8x768xf32>
    %390 = arith.addf %388, %389 : vector<8x768xf32>
    %cst_215 = arith.constant 0.000000e+00 : f32
    %391 = vector.broadcast %cst_215 : f32 to vector<8x768xf32>
    %392 = arith.maximumf %390, %391 : vector<8x768xf32>
    %393 = vector.broadcast %20 : vector<1x768xf32> to vector<8x768xf32>
    %394 = arith.mulf %392, %393 : vector<8x768xf32>
    %395 = vector.extract_strided_slice %394 {offsets = [0, 0], sizes = [8, 384], strides = [1, 1]} : vector<8x768xf32> to vector<8x384xf32>
    %c0_216 = arith.constant 0 : index
    %c0_217 = arith.constant 0 : index
    %c0_218 = arith.constant 0 : index
    %396 = vector.load %arg8[%c0_216, %c0_217, %c0_218] : memref<2x8x384xf32, #tpu.memory_space<vmem>>, vector<1x8x384xf32>
    %397 = vector.shape_cast %396 : vector<1x8x384xf32> to vector<8x384xf32>
    %398 = vector.shape_cast %395 : vector<8x384xf32> to vector<1x8x384xf32>
    tpu.vector_store %arg8[%c0_216, %c0_217, %c0_218], %398 {strides = array<i32>} : memref<2x8x384xf32, #tpu.memory_space<vmem>>, vector<1x8x384xf32>,
    %399 = vector.extract_strided_slice %394 {offsets = [0, 384], sizes = [8, 384], strides = [1, 1]} : vector<8x768xf32> to vector<8x384xf32>
    %c1_219 = arith.constant 1 : index
    %c0_220 = arith.constant 0 : index
    %c0_221 = arith.constant 0 : index
    %400 = vector.load %arg8[%c1_219, %c0_220, %c0_221] : memref<2x8x384xf32, #tpu.memory_space<vmem>>, vector<1x8x384xf32>
    %401 = vector.shape_cast %400 : vector<1x8x384xf32> to vector<8x384xf32>
    %402 = vector.shape_cast %399 : vector<8x384xf32> to vector<1x8x384xf32>
    tpu.vector_store %arg8[%c1_219, %c0_220, %c0_221], %402 {strides = array<i32>} : memref<2x8x384xf32, #tpu.memory_space<vmem>>, vector<1x8x384xf32>,
    return
  }
  func.func @transform_0(%arg0: i32) -> (i32, i32, i32) {
    %c0_i32 = arith.constant 0 : i32
    %c0_i32_0 = arith.constant 0 : i32
    %c0_i32_1 = arith.constant 0 : i32
    %c0_i32_2 = arith.constant 0 : i32
    return %c0_i32, %c0_i32_0, %c0_i32_1 : i32, i32, i32
  }
  func.func @transform_1(%arg0: i32) -> (i32, i32) {
    %c0_i32 = arith.constant 0 : i32
    %c0_i32_0 = arith.constant 0 : i32
    %c0_i32_1 = arith.constant 0 : i32
    return %c0_i32, %c0_i32_0 : i32, i32
  }
  func.func @transform_2(%arg0: i32) -> (i32, i32) {
    %c0_i32 = arith.constant 0 : i32
    %c0_i32_0 = arith.constant 0 : i32
    %c0_i32_1 = arith.constant 0 : i32
    return %c0_i32, %c0_i32_0 : i32, i32
  }
  func.func @transform_3(%arg0: i32) -> (i32, i32) {
    %c0_i32 = arith.constant 0 : i32
    %c0_i32_0 = arith.constant 0 : i32
    %c0_i32_1 = arith.constant 0 : i32
    return %c0_i32, %c0_i32_0 : i32, i32
  }
  func.func @transform_4(%arg0: i32) -> (i32, i32) {
    %c0_i32 = arith.constant 0 : i32
    %c0_i32_0 = arith.constant 0 : i32
    %c0_i32_1 = arith.constant 0 : i32
    return %c0_i32, %c0_i32_0 : i32, i32
  }
  func.func @transform_5(%arg0: i32) -> (i32, i32) {
    %c0_i32 = arith.constant 0 : i32
    %c0_i32_0 = arith.constant 0 : i32
    %c0_i32_1 = arith.constant 0 : i32
    return %c0_i32, %c0_i32_0 : i32, i32
  }
  func.func @transform_6(%arg0: i32) -> (i32, i32) {
    %c0_i32 = arith.constant 0 : i32
    %c0_i32_0 = arith.constant 0 : i32
    %c0_i32_1 = arith.constant 0 : i32
    return %c0_i32, %c0_i32_0 : i32, i32
  }
  func.func @transform_7(%arg0: i32) -> (i32, i32, i32) {
    %c0_i32 = arith.constant 0 : i32
    %c0_i32_0 = arith.constant 0 : i32
    %c0_i32_1 = arith.constant 0 : i32
    %c0_i32_2 = arith.constant 0 : i32
    return %c0_i32, %c0_i32_0, %c0_i32_1 : i32, i32, i32
  }
}

</mosaic_0001>

<llo_original>
// kernel: conv_block_forward.1
$region0: #{conv_block_forward.1}
  #allocation0 [shape = 'u32[]', space=smem, size = 0x4, offset = 0x4, fixed_abs, tag = 'smem constant byte address 0x4 - core index']
  #allocation1 [shape = 'u32[144,128]{1,0:T(1,128)}', space=vmem, size = 0x12000, scoped, tag = 'internal scratch']
  #allocation2 [shape = 'f32[2,8,640]{2,1,0:T(8,128)}', space=vmem, size = 0xa000, scoped, tag = 'scratch operand']
  #allocation3 [shape = 'bf16[72,768]{1,0:T(8,128)(2,1)}', space=vmem, size = 0x1b000, scoped, tag = 'scratch operand']
  #allocation4 [shape = 'bf16[72,768]{1,0:T(8,128)(2,1)}', space=vmem, size = 0x1b000, scoped, tag = 'scratch operand']
  %s0 = inlined_call_operand.vmem [shape: f32[2,4,456], index: 0, kind: input, shape index: {}]
  %s1 = inlined_call_operand.vmem [shape: f32[8,36], index: 1, kind: input, shape index: {}]
  %s2 = inlined_call_operand.vmem [shape: f32[8,1], index: 2, kind: input, shape index: {}]
  %s3 = inlined_call_operand.vmem [shape: f32[8,1], index: 3, kind: input, shape index: {}]
  %s4 = inlined_call_operand.vmem [shape: f32[8,72], index: 4, kind: input, shape index: {}]
  %s5 = inlined_call_operand.vmem [shape: f32[8,1], index: 5, kind: input, shape index: {}]
  %s6 = inlined_call_operand.vmem [shape: f32[8,1], index: 6, kind: input, shape index: {}]
  %s7 = inlined_call_operand.vmem [shape: f32[2,8,384], index: 7, kind: output, shape index: {}]
  %s8 = sld [smem:[#allocation0]]
  $region38: #{conv_block_forward.1} parent=0
    _
  %s10 = ssub.s32 1, %s8
  %s11 = scalar_select 0, %s10, %s8
  // Predicated region
  $region2: #{conv_block_forward.1} parent=0 // pred_check
    _
  $region3: #{conv_block_forward.1} parent=0 // pred_check_branch
    %13 = sbr.rel (0) target = $region5
  $region4: #{conv_block_forward.1} parent=0 // pred_region
    _
  $region5: #{conv_block_forward.1} parent=0 // pred_fallthru
    _
  // Predicated region
  $region6: #{conv_block_forward.1} parent=0 // pred_check
    _
  $region7: #{conv_block_forward.1} parent=0 // pred_check_branch
    %15 = sbr.rel (0) target = $region9
  $region8: #{conv_block_forward.1} parent=0 // pred_region
    _
  $region9: #{conv_block_forward.1} parent=0 // pred_fallthru
    _
  // Predicated region
  $region10: #{conv_block_forward.1} parent=0 // pred_check
    _
  $region11: #{conv_block_forward.1} parent=0 // pred_check_branch
    %17 = sbr.rel (0) target = $region13
  $region12: #{conv_block_forward.1} parent=0 // pred_region
    _
  $region13: #{conv_block_forward.1} parent=0 // pred_fallthru
    _
  // Predicated region
  $region14: #{conv_block_forward.1} parent=0 // pred_check
    _
  $region15: #{conv_block_forward.1} parent=0 // pred_check_branch
    %19 = sbr.rel (0) target = $region17
  $region16: #{conv_block_forward.1} parent=0 // pred_region
    _
  $region17: #{conv_block_forward.1} parent=0 // pred_fallthru
    _
  // Predicated region
  $region18: #{conv_block_forward.1} parent=0 // pred_check
    _
  $region19: #{conv_block_forward.1} parent=0 // pred_check_branch
    %21 = sbr.rel (0) target = $region21
  $region20: #{conv_block_forward.1} parent=0 // pred_region
    _
  $region21: #{conv_block_forward.1} parent=0 // pred_fallthru
    _
  // Predicated region
  $region22: #{conv_block_forward.1} parent=0 // pred_check
    _
  $region23: #{conv_block_forward.1} parent=0 // pred_check_branch
    %23 = sbr.rel (0) target = $region25
  $region24: #{conv_block_forward.1} parent=0 // pred_region
    _
  $region25: #{conv_block_forward.1} parent=0 // pred_fallthru
    _
  // Predicated region
  $region26: #{conv_block_forward.1} parent=0 // pred_check
    _
  $region27: #{conv_block_forward.1} parent=0 // pred_check_branch
    %25 = sbr.rel (0) target = $region29
  $region28: #{conv_block_forward.1} parent=0 // pred_region
    _
  $region29: #{conv_block_forward.1} parent=0 // pred_fallthru
    _
  %v27 = vlaneseq
  %v28 = vand.u32 %v27, 127
  %v29 = vadd.s32 %v28, 128
  %v30 = vadd.s32 %v28, 256
  %v31 = vadd.s32 %v28, 384
  %v32 = vadd.s32 %v28, 512
  %v33 = vadd.s32 %v28, 640
  %vm34 = vcmp.lt.s32.totalorder %v28, 0
  %v35 = vsub.s32 0, %v28
  %v36 = vsel %vm34, %v35, %v28
  %v37 = vmul.u32.u64.compose %v36, 2863311531
  %v38 = vextract.low.u32 %v37
  %v39 = vextract.high.u32 %v37
  %v40 = vshrl.u32 %v39, 4
  %v41 = vmul.u32 %v40, 24
  %v42 = vsub.s32 %v36, %v41
  %v43 = vsub.s32 0, %v42
  %v44 = vsel %vm34, %v43, %v42
  %vm45 = vcmp.lt.s32.totalorder %v29, 0
  %v46 = vsub.s32 0, %v29
  %v47 = vsel %vm45, %v46, %v29
  %v48 = vmul.u32.u64.compose %v47, 2863311531
  %v49 = vextract.low.u32 %v48
  %v50 = vextract.high.u32 %v48
  %v51 = vshrl.u32 %v50, 4
  %v52 = vmul.u32 %v51, 24
  %v53 = vsub.s32 %v47, %v52
  %v54 = vsub.s32 0, %v53
  %v55 = vsel %vm45, %v54, %v53
  %vm56 = vcmp.lt.s32.totalorder %v30, 0
  %v57 = vsub.s32 0, %v30
  %v58 = vsel %vm56, %v57, %v30
  %v59 = vmul.u32.u64.compose %v58, 2863311531
  %v60 = vextract.low.u32 %v59
  %v61 = vextract.high.u32 %v59
  %v62 = vshrl.u32 %v61, 4
  %v63 = vmul.u32 %v62, 24
  %v64 = vsub.s32 %v58, %v63
  %v65 = vsub.s32 0, %v64
  %v66 = vsel %vm56, %v65, %v64
  %vm67 = vcmp.lt.s32.totalorder %v31, 0
  %v68 = vsub.s32 0, %v31
  %v69 = vsel %vm67, %v68, %v31
  %v70 = vmul.u32.u64.compose %v69, 2863311531
  %v71 = vextract.low.u32 %v70
  %v72 = vextract.high.u32 %v70
  %v73 = vshrl.u32 %v72, 4
  %v74 = vmul.u32 %v73, 24
  %v75 = vsub.s32 %v69, %v74
  %v76 = vsub.s32 0, %v75
  %v77 = vsel %vm67, %v76, %v75
  %vm78 = vcmp.lt.s32.totalorder %v32, 0
  %v79 = vsub.s32 0, %v32
  %v80 = vsel %vm78, %v79, %v32
  %v81 = vmul.u32.u64.compose %v80, 2863311531
  %v82 = vextract.low.u32 %v81
  %v83 = vextract.high.u32 %v81
  %v84 = vshrl.u32 %v83, 4
  %v85 = vmul.u32 %v84, 24
  %v86 = vsub.s32 %v80, %v85
  %v87 = vsub.s32 0, %v86
  %v88 = vsel %vm78, %v87, %v86
  %vm89 = vcmp.lt.s32.totalorder %v33, 0
  %v90 = vsub.s32 0, %v33
  %v91 = vsel %vm89, %v90, %v33
  %v92 = vmul.u32.u64.compose %v91, 2863311531
  %v93 = vextract.low.u32 %v92
  %v94 = vextract.high.u32 %v92
  %v95 = vshrl.u32 %v94, 4
  %v96 = vmul.u32 %v95, 24
  %v97 = vsub.s32 %v91, %v96
  %v98 = vsub.s32 0, %v97
  %v99 = vsel %vm89, %v98, %v97
  %vm100 = vcmp.ne.s32.totalorder %v44, 0
  %vm101 = vcmp.ne.s32.totalorder %v55, 0
  %vm102 = vcmp.ne.s32.totalorder %v66, 0
  %vm103 = vcmp.ne.s32.totalorder %v77, 0
  %vm104 = vcmp.ne.s32.totalorder %v88, 0
  %vm105 = vcmp.ne.s32.totalorder %v99, 0
  %vm106 = vcmp.lt.s32.totalorder %v44, 0
  %vm107 = vcmp.lt.s32.totalorder %v55, 0
  %vm108 = vcmp.lt.s32.totalorder %v66, 0
  %vm109 = vcmp.lt.s32.totalorder %v77, 0
  %vm110 = vcmp.lt.s32.totalorder %v88, 0
  %vm111 = vcmp.lt.s32.totalorder %v99, 0
  %vm112 = vmand %vm106, %vm100
  %vm113 = vmand %vm107, %vm101
  %vm114 = vmand %vm108, %vm102
  %vm115 = vmand %vm109, %vm103
  %vm116 = vmand %vm110, %vm104
  %vm117 = vmand %vm111, %vm105
  %v118 = vadd.s32 %v44, 24
  %v119 = vadd.s32 %v55, 24
  %v120 = vadd.s32 %v66, 24
  %v121 = vadd.s32 %v77, 24
  %v122 = vadd.s32 %v88, 24
  %v123 = vadd.s32 %v99, 24
  %v124 = vsel %vm112, %v118, %v44
  %v125 = vsel %vm113, %v119, %v55
  %v126 = vsel %vm114, %v120, %v66
  %v127 = vsel %vm115, %v121, %v77
  %v128 = vsel %vm116, %v122, %v88
  %v129 = vsel %vm117, %v123, %v99
  %vm130 = vcmp.lt.s32.totalorder %v124, 16
  %vm131 = vcmp.lt.s32.totalorder %v125, 16
  %vm132 = vcmp.lt.s32.totalorder %v126, 16
  %vm133 = vcmp.lt.s32.totalorder %v127, 16
  %vm134 = vcmp.lt.s32.totalorder %v128, 16
  %vm135 = vcmp.lt.s32.totalorder %v129, 16
  %v136 = vsel %vm130, 1, 0
  %v137 = vsel %vm131, 1, 0
  %v138 = vsel %vm132, 1, 0
  %v139 = vsel %vm133, 1, 0
  %v140 = vsel %vm134, 1, 0
  %v141 = vsel %vm135, 1, 0
  %v142 = vcvt.s32.f32 %v136
  %v143 = vcvt.s32.f32 %v137
  %v144 = vcvt.s32.f32 %v138
  %v145 = vcvt.s32.f32 %v139
  %v146 = vcvt.s32.f32 %v140
  %v147 = vcvt.s32.f32 %v141
  %v148 = vld [vmem:[%s0] sm:$0xff]
  %v149 = vld [vmem:[%s0 + $0x8] sm:$0xff]
  %v152 = vcombine.high %v148, %v148
  %v154 = vpack.c.bf16 %v148, %v148
  %v155 = vpack.c.bf16 %v152, %v152
  %v156 = vpack.c.bf16 %v149, %v149
  %v157 = vunpack.c.l.bf16 %v154
  %v158 = vunpack.c.l.bf16 %v155
  %v159 = vunpack.c.l.bf16 %v156
  %v163 = vcombine.low %v157, %v158
  %v165 = vsub.f32 %v148, %v163
  %v166 = vsub.f32 %v149, %v159
  %v168 = vcombine.high %v165, %v165
  %v170 = vpack.c.bf16 %v165, %v165
  %v171 = vpack.c.bf16 %v168, %v168
  %v172 = vpack.c.bf16 %v166, %v166
  %v176 = vunpack.c.l.b16 %v154
  %v177 = vunpack.c.l.b16 %v155
  %v178 = vunpack.c.l.b16 %v156
  %v179 = vpack.c.b16 %v177, %v176
  %v180 = vpack.c.b16 %v178, %v178
  %183 = vst [vmem:[#allocation3] sm:$0x33] %v179
  %184 = vst [vmem:[#allocation3 + $0x8] sm:$0x3] %v180
  %v188 = vunpack.c.l.b16 %v170
  %v189 = vunpack.c.l.b16 %v171
  %v190 = vunpack.c.l.b16 %v172
  %v191 = vpack.c.b16 %v189, %v188
  %v192 = vpack.c.b16 %v190, %v190
  %195 = vst [vmem:[#allocation4] sm:$0x33] %v191
  %196 = vst [vmem:[#allocation4 + $0x8] sm:$0x3] %v192
  %v197 = vcombine.high %v149, %v149
  %v199 = vpack.c.bf16 %v197, %v197
  %v200 = vunpack.c.l.bf16 %v199
  %v202 = vcombine.low %v159, %v200
  %v204 = vsub.f32 %v149, %v202
  %v206 = vcombine.high %v204, %v204
  %v208 = vpack.c.bf16 %v204, %v204
  %v209 = vpack.c.bf16 %v206, %v206
  %v211 = vunpack.c.l.b16 %v199
  %v212 = vpack.c.b16 %v211, %v178
  %v213 = vrot.slane %v179, 6
  %v214 = vrot.slane %v212, 6
  %215 = vrot.lane.b32.xlu0 %v213, 127
  %v216 = vpop.permute.xlu0 %215
  %217 = vrot.lane.b32.xlu0 %v214, 127
  %v218 = vpop.permute.xlu0 %217
  %v219 = vrot.slane %v216, 4
  %v220 = vrot.slane %v218, 4
  %vm221 = vcmask 1043456
  %v222 = vsel %vm221, %v219, %v220
  %vm223 = vcmask 1039360
  %v224 = vsel %vm223, %v216, %v222
  %v225 = vsel %vm223, %v218, %v220
  %228 = vst [vmem:[#allocation3] sm:$0xcc] %v224
  %229 = vst [vmem:[#allocation3 + $0x8] sm:$0xc] %v225
  %v232 = vunpack.c.l.b16 %v208
  %v233 = vunpack.c.l.b16 %v209
  %v234 = vpack.c.b16 %v233, %v232
  %v235 = vrot.slane %v191, 6
  %v236 = vrot.slane %v234, 6
  %237 = vrot.lane.b32.xlu0 %v235, 127
  %v238 = vpop.permute.xlu0 %237
  %239 = vrot.lane.b32.xlu0 %v236, 127
  %v240 = vpop.permute.xlu0 %239
  %v241 = vrot.slane %v238, 4
  %v242 = vrot.slane %v240, 4
  %v243 = vsel %vm221, %v241, %v242
  %v244 = vsel %vm223, %v238, %v243
  %v245 = vsel %vm223, %v240, %v242
  %248 = vst [vmem:[#allocation4] sm:$0xcc] %v244
  %249 = vst [vmem:[#allocation4 + $0x8] sm:$0xc] %v245
  %250 = vrot.lane.b32.xlu0 %v179, 126
  %v251 = vpop.permute.xlu0 %250
  %252 = vrot.lane.b32.xlu0 %v212, 126
  %v253 = vpop.permute.xlu0 %252
  %v254 = vrot.slane %v251, 4
  %v255 = vrot.slane %v253, 4
  %v256 = vsel %vm221, %v254, %v255
  %vm257 = vcmask 1031168
  %v258 = vsel %vm257, %v251, %v256
  %v259 = vsel %vm257, %v253, %v255
  %262 = vst [vmem:[#allocation3 + $0x18] sm:$0x33] %v258
  %263 = vst [vmem:[#allocation3 + $0x20] sm:$0x3] %v259
  %264 = vrot.lane.b32.xlu0 %v191, 126
  %v265 = vpop.permute.xlu0 %264
  %266 = vrot.lane.b32.xlu0 %v234, 126
  %v267 = vpop.permute.xlu0 %266
  %v268 = vrot.slane %v265, 4
  %v269 = vrot.slane %v267, 4
  %v270 = vsel %vm221, %v268, %v269
  %v271 = vsel %vm257, %v265, %v270
  %v272 = vsel %vm257, %v267, %v269
  %275 = vst [vmem:[#allocation4 + $0x18] sm:$0x33] %v271
  %276 = vst [vmem:[#allocation4 + $0x20] sm:$0x3] %v272
  %v277 = vld [vmem:[%s0] sm:$0xff]
  %v278 = vld [vmem:[%s0 + $0x8] sm:$0xff]
  %v281 = vcombine.high %v277, %v277
  %v282 = vcombine.high %v278, %v278
  %v285 = vpack.c.bf16 %v277, %v277
  %v286 = vpack.c.bf16 %v281, %v281
  %v287 = vpack.c.bf16 %v278, %v278
  %v288 = vpack.c.bf16 %v282, %v282
  %v289 = vunpack.c.l.bf16 %v285
  %v290 = vunpack.c.l.bf16 %v286
  %v291 = vunpack.c.l.bf16 %v287
  %v292 = vunpack.c.l.bf16 %v288
  %v297 = vcombine.low %v289, %v290
  %v298 = vcombine.low %v291, %v292
  %v301 = vsub.f32 %v277, %v297
  %v302 = vsub.f32 %v278, %v298
  %v305 = vcombine.high %v301, %v301
  %v306 = vcombine.high %v302, %v302
  %v309 = vpack.c.bf16 %v301, %v301
  %v310 = vpack.c.bf16 %v305, %v305
  %v311 = vpack.c.bf16 %v302, %v302
  %v312 = vpack.c.bf16 %v306, %v306
  %v317 = vunpack.c.l.b16 %v285
  %v318 = vunpack.c.l.b16 %v286
  %v319 = vunpack.c.l.b16 %v287
  %v320 = vunpack.c.l.b16 %v288
  %v321 = vpack.c.b16 %v318, %v317
  %v322 = vpack.c.b16 %v320, %v319
  %v323 = vrot.slane %v321, 6
  %v324 = vrot.slane %v322, 6
  %325 = vrot.lane.b32.xlu0 %v323, 104
  %v326 = vpop.permute.xlu0 %325
  %327 = vrot.lane.b32.xlu0 %v324, 104
  %v328 = vpop.permute.xlu0 %327
  %v329 = vrot.slane %v326, 4
  %v330 = vrot.slane %v328, 4
  %v331 = vsel %vm221, %v329, %v330
  %vm332 = vcmask 850944
  %v333 = vsel %vm332, %v326, %v331
  %v334 = vsel %vm332, %v328, %v330
  %337 = vst [vmem:[#allocation3 + $0x18] sm:$0xcc] %v333
  %338 = vst [vmem:[#allocation3 + $0x20] sm:$0xc] %v334
  %v343 = vunpack.c.l.b16 %v309
  %v344 = vunpack.c.l.b16 %v310
  %v345 = vunpack.c.l.b16 %v311
  %v346 = vunpack.c.l.b16 %v312
  %v347 = vpack.c.b16 %v344, %v343
  %v348 = vpack.c.b16 %v346, %v345
  %v349 = vrot.slane %v347, 6
  %v350 = vrot.slane %v348, 6
  %351 = vrot.lane.b32.xlu0 %v349, 104
  %v352 = vpop.permute.xlu0 %351
  %353 = vrot.lane.b32.xlu0 %v350, 104
  %v354 = vpop.permute.xlu0 %353
  %v355 = vrot.slane %v352, 4
  %v356 = vrot.slane %v354, 4
  %v357 = vsel %vm221, %v355, %v356
  %v358 = vsel %vm332, %v352, %v357
  %v359 = vsel %vm332, %v354, %v356
  %362 = vst [vmem:[#allocation4 + $0x18] sm:$0xcc] %v358
  %363 = vst [vmem:[#allocation4 + $0x20] sm:$0xc] %v359
  %364 = vrot.lane.b32.xlu0 %v321, 103
  %v365 = vpop.permute.xlu0 %364
  %366 = vrot.lane.b32.xlu0 %v322, 103
  %v367 = vpop.permute.xlu0 %366
  %v368 = vrot.slane %v365, 4
  %v369 = vrot.slane %v367, 4
  %v370 = vsel %vm221, %v368, %v369
  %vm371 = vcmask 842752
  %v372 = vsel %vm371, %v365, %v370
  %v373 = vsel %vm371, %v367, %v369
  %376 = vst [vmem:[#allocation3 + $0x30] sm:$0x33] %v372
  %377 = vst [vmem:[#allocation3 + $0x38] sm:$0x3] %v373
  %378 = vrot.lane.b32.xlu0 %v347, 103
  %v379 = vpop.permute.xlu0 %378
  %380 = vrot.lane.b32.xlu0 %v348, 103
  %v381 = vpop.permute.xlu0 %380
  %v382 = vrot.slane %v379, 4
  %v383 = vrot.slane %v381, 4
  %v384 = vsel %vm221, %v382, %v383
  %v385 = vsel %vm371, %v379, %v384
  %v386 = vsel %vm371, %v381, %v383
  %389 = vst [vmem:[#allocation4 + $0x30] sm:$0x33] %v385
  %390 = vst [vmem:[#allocation4 + $0x38] sm:$0x3] %v386
  %391 = vrot.lane.b32.xlu0 %v323, 102
  %v392 = vpop.permute.xlu0 %391
  %393 = vrot.lane.b32.xlu0 %v324, 102
  %v394 = vpop.permute.xlu0 %393
  %v395 = vrot.slane %v392, 4
  %v396 = vrot.slane %v394, 4
  %v397 = vsel %vm221, %v395, %v396
  %vm398 = vcmask 834560
  %v399 = vsel %vm398, %v392, %v397
  %v400 = vsel %vm398, %v394, %v396
  %403 = vst [vmem:[#allocation3 + $0x30] sm:$0xcc] %v399
  %404 = vst [vmem:[#allocation3 + $0x38] sm:$0xc] %v400
  %405 = vrot.lane.b32.xlu0 %v349, 102
  %v406 = vpop.permute.xlu0 %405
  %407 = vrot.lane.b32.xlu0 %v350, 102
  %v408 = vpop.permute.xlu0 %407
  %v409 = vrot.slane %v406, 4
  %v410 = vrot.slane %v408, 4
  %v411 = vsel %vm221, %v409, %v410
  %v412 = vsel %vm398, %v406, %v411
  %v413 = vsel %vm398, %v408, %v410
  %416 = vst [vmem:[#allocation4 + $0x30] sm:$0xcc] %v412
  %417 = vst [vmem:[#allocation4 + $0x38] sm:$0xc] %v413
  %v418 = vld [vmem:[%s0] sm:$0xff]
  %v419 = vld [vmem:[%s0 + $0x8] sm:$0xff]
  %v422 = vcombine.high %v418, %v418
  %v423 = vcombine.high %v419, %v419
  %v426 = vpack.c.bf16 %v418, %v418
  %v427 = vpack.c.bf16 %v422, %v422
  %v428 = vpack.c.bf16 %v419, %v419
  %v429 = vpack.c.bf16 %v423, %v423
  %v430 = vunpack.c.l.bf16 %v426
  %v431 = vunpack.c.l.bf16 %v427
  %v432 = vunpack.c.l.bf16 %v428
  %v433 = vunpack.c.l.bf16 %v429
  %v438 = vcombine.low %v430, %v431
  %v439 = vcombine.low %v432, %v433
  %v442 = vsub.f32 %v418, %v438
  %v443 = vsub.f32 %v419, %v439
  %v446 = vcombine.high %v442, %v442
  %v447 = vcombine.high %v443, %v443
  %v450 = vpack.c.bf16 %v442, %v442
  %v451 = vpack.c.bf16 %v446, %v446
  %v452 = vpack.c.bf16 %v443, %v443
  %v453 = vpack.c.bf16 %v447, %v447
  %v458 = vunpack.c.l.b16 %v426
  %v459 = vunpack.c.l.b16 %v427
  %v460 = vunpack.c.l.b16 %v428
  %v461 = vunpack.c.l.b16 %v429
  %v462 = vpack.c.b16 %v459, %v458
  %v463 = vpack.c.b16 %v461, %v460
  %464 = vrot.lane.b32.xlu0 %v462, 80
  %v465 = vpop.permute.xlu0 %464
  %466 = vrot.lane.b32.xlu0 %v463, 80
  %v467 = vpop.permute.xlu0 %466
  %v468 = vrot.slane %v465, 4
  %v469 = vrot.slane %v467, 4
  %v470 = vsel %vm221, %v468, %v469
  %vm471 = vcmask 654336
  %v472 = vsel %vm471, %v465, %v470
  %v473 = vsel %vm471, %v467, %v469
  %476 = vst [vmem:[#allocation3 + $0x48] sm:$0x33] %v472
  %477 = vst [vmem:[#allocation3 + $0x50] sm:$0x3] %v473
  %v482 = vunpack.c.l.b16 %v450
  %v483 = vunpack.c.l.b16 %v451
  %v484 = vunpack.c.l.b16 %v452
  %v485 = vunpack.c.l.b16 %v453
  %v486 = vpack.c.b16 %v483, %v482
  %v487 = vpack.c.b16 %v485, %v484
  %488 = vrot.lane.b32.xlu0 %v486, 80
  %v489 = vpop.permute.xlu0 %488
  %490 = vrot.lane.b32.xlu0 %v487, 80
  %v491 = vpop.permute.xlu0 %490
  %v492 = vrot.slane %v489, 4
  %v493 = vrot.slane %v491, 4
  %v494 = vsel %vm221, %v492, %v493
  %v495 = vsel %vm471, %v489, %v494
  %v496 = vsel %vm471, %v491, %v493
  %499 = vst [vmem:[#allocation4 + $0x48] sm:$0x33] %v495
  %500 = vst [vmem:[#allocation4 + $0x50] sm:$0x3] %v496
  %v501 = vrot.slane %v462, 6
  %v502 = vrot.slane %v463, 6
  %503 = vrot.lane.b32.xlu0 %v501, 79
  %v504 = vpop.permute.xlu0 %503
  %505 = vrot.lane.b32.xlu0 %v502, 79
  %v506 = vpop.permute.xlu0 %505
  %v507 = vrot.slane %v504, 4
  %v508 = vrot.slane %v506, 4
  %v509 = vsel %vm221, %v507, %v508
  %vm510 = vcmask 646144
  %v511 = vsel %vm510, %v504, %v509
  %v512 = vsel %vm510, %v506, %v508
  %515 = vst [vmem:[#allocation3 + $0x48] sm:$0xcc] %v511
  %516 = vst [vmem:[#allocation3 + $0x50] sm:$0xc] %v512
  %v517 = vrot.slane %v486, 6
  %v518 = vrot.slane %v487, 6
  %519 = vrot.lane.b32.xlu0 %v517, 79
  %v520 = vpop.permute.xlu0 %519
  %521 = vrot.lane.b32.xlu0 %v518, 79
  %v522 = vpop.permute.xlu0 %521
  %v523 = vrot.slane %v520, 4
  %v524 = vrot.slane %v522, 4
  %v525 = vsel %vm221, %v523, %v524
  %v526 = vsel %vm510, %v520, %v525
  %v527 = vsel %vm510, %v522, %v524
  %530 = vst [vmem:[#allocation4 + $0x48] sm:$0xcc] %v526
  %531 = vst [vmem:[#allocation4 + $0x50] sm:$0xc] %v527
  %532 = vrot.lane.b32.xlu0 %v462, 78
  %v533 = vpop.permute.xlu0 %532
  %534 = vrot.lane.b32.xlu0 %v463, 78
  %v535 = vpop.permute.xlu0 %534
  %v536 = vrot.slane %v533, 4
  %v537 = vrot.slane %v535, 4
  %v538 = vsel %vm221, %v536, %v537
  %vm539 = vcmask 637952
  %v540 = vsel %vm539, %v533, %v538
  %v541 = vsel %vm539, %v535, %v537
  %544 = vst [vmem:[#allocation3 + $0x60] sm:$0x33] %v540
  %545 = vst [vmem:[#allocation3 + $0x68] sm:$0x3] %v541
  %546 = vrot.lane.b32.xlu0 %v486, 78
  %v547 = vpop.permute.xlu0 %546
  %548 = vrot.lane.b32.xlu0 %v487, 78
  %v549 = vpop.permute.xlu0 %548
  %v550 = vrot.slane %v547, 4
  %v551 = vrot.slane %v549, 4
  %v552 = vsel %vm221, %v550, %v551
  %v553 = vsel %vm539, %v547, %v552
  %v554 = vsel %vm539, %v549, %v551
  %557 = vst [vmem:[#allocation4 + $0x60] sm:$0x33] %v553
  %558 = vst [vmem:[#allocation4 + $0x68] sm:$0x3] %v554
  %s559 = scalar_lea.vmem %s0, 16
  %v560 = vld [vmem:[%s559] sm:$0xff]
  %v561 = vld [vmem:[%s559 + $0x8] sm:$0xff]
  %v564 = vcombine.high %v560, %v560
  %v566 = vpack.c.bf16 %v560, %v560
  %v567 = vpack.c.bf16 %v564, %v564
  %v568 = vpack.c.bf16 %v561, %v561
  %v569 = vunpack.c.l.bf16 %v566
  %v570 = vunpack.c.l.bf16 %v567
  %v571 = vunpack.c.l.bf16 %v568
  %v575 = vcombine.low %v569, %v570
  %v577 = vsub.f32 %v560, %v575
  %v578 = vsub.f32 %v561, %v571
  %v580 = vcombine.high %v577, %v577
  %v582 = vpack.c.bf16 %v577, %v577
  %v583 = vpack.c.bf16 %v580, %v580
  %v584 = vpack.c.bf16 %v578, %v578
  %v588 = vunpack.c.l.b16 %v566
  %v589 = vunpack.c.l.b16 %v567
  %v590 = vunpack.c.l.b16 %v568
  %v591 = vpack.c.b16 %v589, %v588
  %v592 = vpack.c.b16 %v590, %v590
  %595 = vst [vmem:[#allocation3 + $0xc] sm:$0x33] %v591
  %596 = vst [vmem:[#allocation3 + $0x14] sm:$0x3] %v592
  %v600 = vunpack.c.l.b16 %v582
  %v601 = vunpack.c.l.b16 %v583
  %v602 = vunpack.c.l.b16 %v584
  %v603 = vpack.c.b16 %v601, %v600
  %v604 = vpack.c.b16 %v602, %v602
  %607 = vst [vmem:[#allocation4 + $0xc] sm:$0x33] %v603
  %608 = vst [vmem:[#allocation4 + $0x14] sm:$0x3] %v604
  %v609 = vcombine.high %v561, %v561
  %v611 = vpack.c.bf16 %v609, %v609
  %v612 = vunpack.c.l.bf16 %v611
  %v614 = vcombine.low %v571, %v612
  %v616 = vsub.f32 %v561, %v614
  %v618 = vcombine.high %v616, %v616
  %v620 = vpack.c.bf16 %v616, %v616
  %v621 = vpack.c.bf16 %v618, %v618
  %v623 = vunpack.c.l.b16 %v611
  %v624 = vpack.c.b16 %v623, %v590
  %v625 = vrot.slane %v591, 6
  %v626 = vrot.slane %v624, 6
  %627 = vrot.lane.b32.xlu0 %v625, 127
  %v628 = vpop.permute.xlu0 %627
  %629 = vrot.lane.b32.xlu0 %v626, 127
  %v630 = vpop.permute.xlu0 %629
  %v631 = vrot.slane %v628, 4
  %v632 = vrot.slane %v630, 4
  %v633 = vsel %vm221, %v631, %v632
  %v634 = vsel %vm223, %v628, %v633
  %v635 = vsel %vm223, %v630, %v632
  %638 = vst [vmem:[#allocation3 + $0xc] sm:$0xcc] %v634
  %639 = vst [vmem:[#allocation3 + $0x14] sm:$0xc] %v635
  %v642 = vunpack.c.l.b16 %v620
  %v643 = vunpack.c.l.b16 %v621
  %v644 = vpack.c.b16 %v643, %v642
  %v645 = vrot.slane %v603, 6
  %v646 = vrot.slane %v644, 6
  %647 = vrot.lane.b32.xlu0 %v645, 127
  %v648 = vpop.permute.xlu0 %647
  %649 = vrot.lane.b32.xlu0 %v646, 127
  %v650 = vpop.permute.xlu0 %649
  %v651 = vrot.slane %v648, 4
  %v652 = vrot.slane %v650, 4
  %v653 = vsel %vm221, %v651, %v652
  %v654 = vsel %vm223, %v648, %v653
  %v655 = vsel %vm223, %v650, %v652
  %658 = vst [vmem:[#allocation4 + $0xc] sm:$0xcc] %v654
  %659 = vst [vmem:[#allocation4 + $0x14] sm:$0xc] %v655
  %660 = vrot.lane.b32.xlu0 %v591, 126
  %v661 = vpop.permute.xlu0 %660
  %662 = vrot.lane.b32.xlu0 %v624, 126
  %v663 = vpop.permute.xlu0 %662
  %v664 = vrot.slane %v661, 4
  %v665 = vrot.slane %v663, 4
  %v666 = vsel %vm221, %v664, %v665
  %v667 = vsel %vm257, %v661, %v666
  %v668 = vsel %vm257, %v663, %v665
  %671 = vst [vmem:[#allocation3 + $0x24] sm:$0x33] %v667
  %672 = vst [vmem:[#allocation3 + $0x2c] sm:$0x3] %v668
  %673 = vrot.lane.b32.xlu0 %v603, 126
  %v674 = vpop.permute.xlu0 %673
  %675 = vrot.lane.b32.xlu0 %v644, 126
  %v676 = vpop.permute.xlu0 %675
  %v677 = vrot.slane %v674, 4
  %v678 = vrot.slane %v676, 4
  %v679 = vsel %vm221, %v677, %v678
  %v680 = vsel %vm257, %v674, %v679
  %v681 = vsel %vm257, %v676, %v678
  %684 = vst [vmem:[#allocation4 + $0x24] sm:$0x33] %v680
  %685 = vst [vmem:[#allocation4 + $0x2c] sm:$0x3] %v681
  %v686 = vld [vmem:[%s559] sm:$0xff]
  %v687 = vld [vmem:[%s559 + $0x8] sm:$0xff]
  %v690 = vcombine.high %v686, %v686
  %v691 = vcombine.high %v687, %v687
  %v694 = vpack.c.bf16 %v686, %v686
  %v695 = vpack.c.bf16 %v690, %v690
  %v696 = vpack.c.bf16 %v687, %v687
  %v697 = vpack.c.bf16 %v691, %v691
  %v698 = vunpack.c.l.bf16 %v694
  %v699 = vunpack.c.l.bf16 %v695
  %v700 = vunpack.c.l.bf16 %v696
  %v701 = vunpack.c.l.bf16 %v697
  %v706 = vcombine.low %v698, %v699
  %v707 = vcombine.low %v700, %v701
  %v710 = vsub.f32 %v686, %v706
  %v711 = vsub.f32 %v687, %v707
  %v714 = vcombine.high %v710, %v710
  %v715 = vcombine.high %v711, %v711
  %v718 = vpack.c.bf16 %v710, %v710
  %v719 = vpack.c.bf16 %v714, %v714
  %v720 = vpack.c.bf16 %v711, %v711
  %v721 = vpack.c.bf16 %v715, %v715
  %v726 = vunpack.c.l.b16 %v694
  %v727 = vunpack.c.l.b16 %v695
  %v728 = vunpack.c.l.b16 %v696
  %v729 = vunpack.c.l.b16 %v697
  %v730 = vpack.c.b16 %v727, %v726
  %v731 = vpack.c.b16 %v729, %v728
  %v732 = vrot.slane %v730, 6
  %v733 = vrot.slane %v731, 6
  %734 = vrot.lane.b32.xlu0 %v732, 104
  %v735 = vpop.permute.xlu0 %734
  %736 = vrot.lane.b32.xlu0 %v733, 104
  %v737 = vpop.permute.xlu0 %736
  %v738 = vrot.slane %v735, 4
  %v739 = vrot.slane %v737, 4
  %v740 = vsel %vm221, %v738, %v739
  %v741 = vsel %vm332, %v735, %v740
  %v742 = vsel %vm332, %v737, %v739
  %745 = vst [vmem:[#allocation3 + $0x24] sm:$0xcc] %v741
  %746 = vst [vmem:[#allocation3 + $0x2c] sm:$0xc] %v742
  %v751 = vunpack.c.l.b16 %v718
  %v752 = vunpack.c.l.b16 %v719
  %v753 = vunpack.c.l.b16 %v720
  %v754 = vunpack.c.l.b16 %v721
  %v755 = vpack.c.b16 %v752, %v751
  %v756 = vpack.c.b16 %v754, %v753
  %v757 = vrot.slane %v755, 6
  %v758 = vrot.slane %v756, 6
  %759 = vrot.lane.b32.xlu0 %v757, 104
  %v760 = vpop.permute.xlu0 %759
  %761 = vrot.lane.b32.xlu0 %v758, 104
  %v762 = vpop.permute.xlu0 %761
  %v763 = vrot.slane %v760, 4
  %v764 = vrot.slane %v762, 4
  %v765 = vsel %vm221, %v763, %v764
  %v766 = vsel %vm332, %v760, %v765
  %v767 = vsel %vm332, %v762, %v764
  %770 = vst [vmem:[#allocation4 + $0x24] sm:$0xcc] %v766
  %771 = vst [vmem:[#allocation4 + $0x2c] sm:$0xc] %v767
  %772 = vrot.lane.b32.xlu0 %v730, 103
  %v773 = vpop.permute.xlu0 %772
  %774 = vrot.lane.b32.xlu0 %v731, 103
  %v775 = vpop.permute.xlu0 %774
  %v776 = vrot.slane %v773, 4
  %v777 = vrot.slane %v775, 4
  %v778 = vsel %vm221, %v776, %v777
  %v779 = vsel %vm371, %v773, %v778
  %v780 = vsel %vm371, %v775, %v777
  %783 = vst [vmem:[#allocation3 + $0x3c] sm:$0x33] %v779
  %784 = vst [vmem:[#allocation3 + $0x44] sm:$0x3] %v780
  %785 = vrot.lane.b32.xlu0 %v755, 103
  %v786 = vpop.permute.xlu0 %785
  %787 = vrot.lane.b32.xlu0 %v756, 103
  %v788 = vpop.permute.xlu0 %787
  %v789 = vrot.slane %v786, 4
  %v790 = vrot.slane %v788, 4
  %v791 = vsel %vm221, %v789, %v790
  %v792 = vsel %vm371, %v786, %v791
  %v793 = vsel %vm371, %v788, %v790
  %796 = vst [vmem:[#allocation4 + $0x3c] sm:$0x33] %v792
  %797 = vst [vmem:[#allocation4 + $0x44] sm:$0x3] %v793
  %798 = vrot.lane.b32.xlu0 %v732, 102
  %v799 = vpop.permute.xlu0 %798
  %800 = vrot.lane.b32.xlu0 %v733, 102
  %v801 = vpop.permute.xlu0 %800
  %v802 = vrot.slane %v799, 4
  %v803 = vrot.slane %v801, 4
  %v804 = vsel %vm221, %v802, %v803
  %v805 = vsel %vm398, %v799, %v804
  %v806 = vsel %vm398, %v801, %v803
  %809 = vst [vmem:[#allocation3 + $0x3c] sm:$0xcc] %v805
  %810 = vst [vmem:[#allocation3 + $0x44] sm:$0xc] %v806
  %811 = vrot.lane.b32.xlu0 %v757, 102
  %v812 = vpop.permute.xlu0 %811
  %813 = vrot.lane.b32.xlu0 %v758, 102
  %v814 = vpop.permute.xlu0 %813
  %v815 = vrot.slane %v812, 4
  %v816 = vrot.slane %v814, 4
  %v817 = vsel %vm221, %v815, %v816
  %v818 = vsel %vm398, %v812, %v817
  %v819 = vsel %vm398, %v814, %v816
  %822 = vst [vmem:[#allocation4 + $0x3c] sm:$0xcc] %v818
  %823 = vst [vmem:[#allocation4 + $0x44] sm:$0xc] %v819
  %v824 = vld [vmem:[%s559] sm:$0xff]
  %v825 = vld [vmem:[%s559 + $0x8] sm:$0xff]
  %v828 = vcombine.high %v824, %v824
  %v829 = vcombine.high %v825, %v825
  %v832 = vpack.c.bf16 %v824, %v824
  %v833 = vpack.c.bf16 %v828, %v828
  %v834 = vpack.c.bf16 %v825, %v825
  %v835 = vpack.c.bf16 %v829, %v829
  %v836 = vunpack.c.l.bf16 %v832
  %v837 = vunpack.c.l.bf16 %v833
  %v838 = vunpack.c.l.bf16 %v834
  %v839 = vunpack.c.l.bf16 %v835
  %v844 = vcombine.low %v836, %v837
  %v845 = vcombine.low %v838, %v839
  %v848 = vsub.f32 %v824, %v844
  %v849 = vsub.f32 %v825, %v845
  %v852 = vcombine.high %v848, %v848
  %v853 = vcombine.high %v849, %v849
  %v856 = vpack.c.bf16 %v848, %v848
  %v857 = vpack.c.bf16 %v852, %v852
  %v858 = vpack.c.bf16 %v849, %v849
  %v859 = vpack.c.bf16 %v853, %v853
  %v864 = vunpack.c.l.b16 %v832
  %v865 = vunpack.c.l.b16 %v833
  %v866 = vunpack.c.l.b16 %v834
  %v867 = vunpack.c.l.b16 %v835
  %v868 = vpack.c.b16 %v865, %v864
  %v869 = vpack.c.b16 %v867, %v866
  %870 = vrot.lane.b32.xlu0 %v868, 80
  %v871 = vpop.permute.xlu0 %870
  %872 = vrot.lane.b32.xlu0 %v869, 80
  %v873 = vpop.permute.xlu0 %872
  %v874 = vrot.slane %v871, 4
  %v875 = vrot.slane %v873, 4
  %v876 = vsel %vm221, %v874, %v875
  %v877 = vsel %vm471, %v871, %v876
  %v878 = vsel %vm471, %v873, %v875
  %881 = vst [vmem:[#allocation3 + $0x54] sm:$0x33] %v877
  %882 = vst [vmem:[#allocation3 + $0x5c] sm:$0x3] %v878
  %v887 = vunpack.c.l.b16 %v856
  %v888 = vunpack.c.l.b16 %v857
  %v889 = vunpack.c.l.b16 %v858
  %v890 = vunpack.c.l.b16 %v859
  %v891 = vpack.c.b16 %v888, %v887
  %v892 = vpack.c.b16 %v890, %v889
  %893 = vrot.lane.b32.xlu0 %v891, 80
  %v894 = vpop.permute.xlu0 %893
  %895 = vrot.lane.b32.xlu0 %v892, 80
  %v896 = vpop.permute.xlu0 %895
  %v897 = vrot.slane %v894, 4
  %v898 = vrot.slane %v896, 4
  %v899 = vsel %vm221, %v897, %v898
  %v900 = vsel %vm471, %v894, %v899
  %v901 = vsel %vm471, %v896, %v898
  %904 = vst [vmem:[#allocation4 + $0x54] sm:$0x33] %v900
  %905 = vst [vmem:[#allocation4 + $0x5c] sm:$0x3] %v901
  %v906 = vrot.slane %v868, 6
  %v907 = vrot.slane %v869, 6
  %908 = vrot.lane.b32.xlu0 %v906, 79
  %v909 = vpop.permute.xlu0 %908
  %910 = vrot.lane.b32.xlu0 %v907, 79
  %v911 = vpop.permute.xlu0 %910
  %v912 = vrot.slane %v909, 4
  %v913 = vrot.slane %v911, 4
  %v914 = vsel %vm221, %v912, %v913
  %v915 = vsel %vm510, %v909, %v914
  %v916 = vsel %vm510, %v911, %v913
  %919 = vst [vmem:[#allocation3 + $0x54] sm:$0xcc] %v915
  %920 = vst [vmem:[#allocation3 + $0x5c] sm:$0xc] %v916
  %v921 = vrot.slane %v891, 6
  %v922 = vrot.slane %v892, 6
  %923 = vrot.lane.b32.xlu0 %v921, 79
  %v924 = vpop.permute.xlu0 %923
  %925 = vrot.lane.b32.xlu0 %v922, 79
  %v926 = vpop.permute.xlu0 %925
  %v927 = vrot.slane %v924, 4
  %v928 = vrot.slane %v926, 4
  %v929 = vsel %vm221, %v927, %v928
  %v930 = vsel %vm510, %v924, %v929
  %v931 = vsel %vm510, %v926, %v928
  %934 = vst [vmem:[#allocation4 + $0x54] sm:$0xcc] %v930
  %935 = vst [vmem:[#allocation4 + $0x5c] sm:$0xc] %v931
  %936 = vrot.lane.b32.xlu0 %v868, 78
  %v937 = vpop.permute.xlu0 %936
  %938 = vrot.lane.b32.xlu0 %v869, 78
  %v939 = vpop.permute.xlu0 %938
  %v940 = vrot.slane %v937, 4
  %v941 = vrot.slane %v939, 4
  %v942 = vsel %vm221, %v940, %v941
  %v943 = vsel %vm539, %v937, %v942
  %v944 = vsel %vm539, %v939, %v941
  %947 = vst [vmem:[#allocation3 + $0x6c] sm:$0x33] %v943
  %948 = vst [vmem:[#allocation3 + $0x74] sm:$0x3] %v944
  %949 = vrot.lane.b32.xlu0 %v891, 78
  %v950 = vpop.permute.xlu0 %949
  %951 = vrot.lane.b32.xlu0 %v892, 78
  %v952 = vpop.permute.xlu0 %951
  %v953 = vrot.slane %v950, 4
  %v954 = vrot.slane %v952, 4
  %v955 = vsel %vm221, %v953, %v954
  %v956 = vsel %vm539, %v950, %v955
  %v957 = vsel %vm539, %v952, %v954
  %960 = vst [vmem:[#allocation4 + $0x6c] sm:$0x33] %v956
  %961 = vst [vmem:[#allocation4 + $0x74] sm:$0x3] %v957
  %v962 = vld [vmem:[%s1] sm:$0xff]
  %v963 = vpack.c.bf16 %v962, %v962
  %v964 = vunpack.c.l.bf16 %v963
  %v965 = vsub.f32 %v962, %v964
  %v966 = vpack.c.bf16 %v965, %v965
  %v967 = vld [vmem:[#allocation3] sm:$0xff]
  %v968 = vld [vmem:[#allocation3 + $0x8] sm:$0xff]
  %v969 = vld [vmem:[#allocation3 + $0x10] sm:$0xff]
  %v970 = vld [vmem:[#allocation3 + $0x18] sm:$0xff]
  %v971 = vld [vmem:[#allocation3 + $0x20] sm:$0xff]
  %v972 = vld [vmem:[#allocation3 + $0x28] sm:$0xff]
  %v973 = vld [vmem:[#allocation3 + $0x30] sm:$0xff]
  %v974 = vld [vmem:[#allocation3 + $0x38] sm:$0xff]
  %v975 = vld [vmem:[#allocation3 + $0x40] sm:$0xff]
  %v976 = vld [vmem:[#allocation3 + $0x48] sm:$0xff]
  %v977 = vld [vmem:[#allocation3 + $0x50] sm:$0xff]
  %v978 = vld [vmem:[#allocation3 + $0x58] sm:$0xff]
  %v979 = vld [vmem:[#allocation3 + $0x60] sm:$0x33]
  %v980 = vld [vmem:[#allocation3 + $0x68] sm:$0x33]
  %v981 = vld [vmem:[#allocation3 + $0x70] sm:$0x33]
  %v982 = vld [vmem:[#allocation4] sm:$0xff]
  %v983 = vld [vmem:[#allocation4 + $0x8] sm:$0xff]
  %v984 = vld [vmem:[#allocation4 + $0x10] sm:$0xff]
  %v985 = vld [vmem:[#allocation4 + $0x18] sm:$0xff]
  %v986 = vld [vmem:[#allocation4 + $0x20] sm:$0xff]
  %v987 = vld [vmem:[#allocation4 + $0x28] sm:$0xff]
  %v988 = vld [vmem:[#allocation4 + $0x30] sm:$0xff]
  %v989 = vld [vmem:[#allocation4 + $0x38] sm:$0xff]
  %v990 = vld [vmem:[#allocation4 + $0x40] sm:$0xff]
  %v991 = vld [vmem:[#allocation4 + $0x48] sm:$0xff]
  %v992 = vld [vmem:[#allocation4 + $0x50] sm:$0xff]
  %v993 = vld [vmem:[#allocation4 + $0x58] sm:$0xff]
  %v994 = vld [vmem:[#allocation4 + $0x60] sm:$0x33]
  %v995 = vld [vmem:[#allocation4 + $0x68] sm:$0x33]
  %v996 = vld [vmem:[#allocation4 + $0x70] sm:$0x33]
  %v1012 = vunpack.c.l.b16 %v982
  %v1013 = vunpack.c.h.b16 %v982
  %v1014 = vunpack.c.l.b16 %v983
  %v1015 = vunpack.c.h.b16 %v983
  %v1016 = vunpack.c.l.b16 %v984
  %v1017 = vunpack.c.h.b16 %v984
  %v1018 = vunpack.c.l.b16 %v985
  %v1019 = vunpack.c.h.b16 %v985
  %v1020 = vunpack.c.l.b16 %v986
  %v1021 = vunpack.c.h.b16 %v986
  %v1022 = vunpack.c.l.b16 %v987
  %v1023 = vunpack.c.h.b16 %v987
  %v1024 = vunpack.c.l.b16 %v988
  %v1025 = vunpack.c.h.b16 %v988
  %v1026 = vunpack.c.l.b16 %v989
  %v1027 = vunpack.c.h.b16 %v989
  %v1028 = vunpack.c.l.b16 %v990
  %v1029 = vunpack.c.h.b16 %v990
  %v1030 = vunpack.c.l.b16 %v991
  %v1031 = vunpack.c.h.b16 %v991
  %v1032 = vunpack.c.l.b16 %v992
  %v1033 = vunpack.c.h.b16 %v992
  %v1034 = vunpack.c.l.b16 %v993
  %v1035 = vunpack.c.h.b16 %v993
  %v1036 = vunpack.c.l.b16 %v994
  %v1037 = vunpack.c.h.b16 %v994
  %v1038 = vunpack.c.l.b16 %v995
  %v1039 = vunpack.c.h.b16 %v995
  %v1040 = vunpack.c.l.b16 %v996
  %v1041 = vunpack.c.h.b16 %v996
  %v1042 = vpack.c.b16 %v1018, %v1012
  %v1043 = vpack.c.b16 %v1019, %v1013
  %v1044 = vpack.c.b16 %v1020, %v1014
  %v1045 = vpack.c.b16 %v1021, %v1015
  %v1046 = vpack.c.b16 %v1022, %v1016
  %v1047 = vpack.c.b16 %v1023, %v1017
  %v1048 = vpack.c.b16 %v1030, %v1024
  %v1049 = vpack.c.b16 %v1031, %v1025
  %v1050 = vpack.c.b16 %v1032, %v1026
  %v1051 = vpack.c.b16 %v1033, %v1027
  %v1052 = vpack.c.b16 %v1034, %v1028
  %v1053 = vpack.c.b16 %v1035, %v1029
  %v1054 = vpack.c.b16 %v1036, %v1036
  %v1055 = vpack.c.b16 %v1037, %v1037
  %v1056 = vpack.c.b16 %v1038, %v1038
  %v1057 = vpack.c.b16 %v1039, %v1039
  %v1058 = vpack.c.b16 %v1040, %v1040
  %v1059 = vpack.c.b16 %v1041, %v1041
  %vm1072 = vcmask 293888
  %v1074 = vsel %vm1072, %v963, 0
  %vm1076 = vcmask 1041408
  %v1078 = vsel %vm1076, %v1054, 0
  %v1081 = vsel %vm1076, %v1055, 0
  %v1084 = vsel %vm1076, %v1056, 0
  %v1087 = vsel %vm1076, %v1057, 0
  %v1090 = vsel %vm1076, %v1058, 0
  %v1093 = vsel %vm1076, %v1059, 0
  %1095 = vmatprep.subr.bf16.mxu0 %v1043
  %1096 = vmatpush1.bf16.msra.mxu0 %v1042
  %1097 = vmatprep.subr.bf16.mxu0 %v1049
  %1098 = vmatpush1.bf16.msra.mxu0 %v1048
  %1099 = vmatprep.subr.bf16.mxu0 %v1081
  %1100 = vmatpush1.bf16.msra.mxu0 %v1078
  %1101 = vmatprep.subr.bf16.mxu0 0
  %1102 = vmatpush1.bf16.msra.mxu0 0
  %1103 = vmatprep.subr.bf16.mxu0 0
  %1104 = vmatpush1.bf16.msra.mxu0 0
  %1105 = vmatprep.subr.bf16.mxu0 0
  %1106 = vmatpush1.bf16.msra.mxu0 0
  %1107 = vmatprep.subr.bf16.mxu0 0
  %1108 = vmatpush1.bf16.msra.mxu0 0
  %1109 = vmatprep.subr.bf16.mxu0 0
  %1110 = vmatpush1.bf16.msra.mxu0 0
  %1111 = vmatprep.subr.bf16.mxu0 0
  %1112 = vmatpush1.bf16.msra.mxu0 0
  %1113 = vmatprep.subr.bf16.mxu0 0
  %1114 = vmatpush1.bf16.msra.mxu0 0
  %1115 = vmatprep.subr.bf16.mxu0 0
  %1116 = vmatpush1.bf16.msra.mxu0 0
  %1117 = vmatprep.subr.bf16.mxu0 0
  %1118 = vmatpush1.bf16.msra.mxu0 0
  %1119 = vmatprep.subr.bf16.mxu0 0
  %1120 = vmatpush1.bf16.msra.mxu0 0
  %1121 = vmatprep.subr.bf16.mxu0 0
  %1122 = vmatpush1.bf16.msra.mxu0 0
  %1123 = vmatprep.subr.bf16.mxu0 0
  %1124 = vmatpush1.bf16.msra.mxu0 0
  %1125 = vmatprep.subr.bf16.mxu0 0
  %1126 = vmatpush1.bf16.msra.mxu0 0
  %1127 = vmatprep.mubr.bf16.mxu0 0
  %1128 = vmatmul.mubr.bf16.gmra.mrb[0].mxu0 %v1074
  %v1129 = vpop.f32.mrb[0].mxu0
  %v1130 = vadd.f32 0.0, %v1129
  %v1131 = vpop.f32.mrb[0].mxu0
  %v1132 = vadd.f32 0.0, %v1131
  %v1133 = vpop.f32.mrb[0].mxu0
  %v1134 = vpop.f32.mrb[0].mxu0
  %1135 = vdwg.mxu0
  %1136 = vmatprep.subr.bf16.mxu0 %v1045
  %1137 = vmatpush1.bf16.msra.mxu0 %v1044
  %1138 = vmatprep.subr.bf16.mxu0 %v1051
  %1139 = vmatpush1.bf16.msra.mxu0 %v1050
  %1140 = vmatprep.subr.bf16.mxu0 %v1087
  %1141 = vmatpush1.bf16.msra.mxu0 %v1084
  %1142 = vmatprep.subr.bf16.mxu0 0
  %1143 = vmatpush1.bf16.msra.mxu0 0
  %1144 = vmatprep.subr.bf16.mxu0 0
  %1145 = vmatpush1.bf16.msra.mxu0 0
  %1146 = vmatprep.subr.bf16.mxu0 0
  %1147 = vmatpush1.bf16.msra.mxu0 0
  %1148 = vmatprep.subr.bf16.mxu0 0
  %1149 = vmatpush1.bf16.msra.mxu0 0
  %1150 = vmatprep.subr.bf16.mxu0 0
  %1151 = vmatpush1.bf16.msra.mxu0 0
  %1152 = vmatprep.subr.bf16.mxu0 0
  %1153 = vmatpush1.bf16.msra.mxu0 0
  %1154 = vmatprep.subr.bf16.mxu0 0
  %1155 = vmatpush1.bf16.msra.mxu0 0
  %1156 = vmatprep.subr.bf16.mxu0 0
  %1157 = vmatpush1.bf16.msra.mxu0 0
  %1158 = vmatprep.subr.bf16.mxu0 0
  %1159 = vmatpush1.bf16.msra.mxu0 0
  %1160 = vmatprep.subr.bf16.mxu0 0
  %1161 = vmatpush1.bf16.msra.mxu0 0
  %1162 = vmatprep.subr.bf16.mxu0 0
  %1163 = vmatpush1.bf16.msra.mxu0 0
  %1164 = vmatprep.subr.bf16.mxu0 0
  %1165 = vmatpush1.bf16.msra.mxu0 0
  %1166 = vmatprep.subr.bf16.mxu0 0
  %1167 = vmatpush1.bf16.msra.mxu0 0
  %1168 = vmatprep.mubr.bf16.mxu0 0
  %1169 = vmatmul.mubr.bf16.gmra.mrb[0].mxu0 %v1074
  %v1170 = vpop.f32.mrb[0].mxu0
  %v1171 = vadd.f32 0.0, %v1170
  %v1172 = vpop.f32.mrb[0].mxu0
  %v1173 = vadd.f32 0.0, %v1172
  %v1174 = vpop.f32.mrb[0].mxu0
  %v1175 = vpop.f32.mrb[0].mxu0
  %1176 = vdwg.mxu0
  %1177 = vmatprep.subr.bf16.mxu0 %v1047
  %1178 = vmatpush1.bf16.msra.mxu0 %v1046
  %1179 = vmatprep.subr.bf16.mxu0 %v1053
  %1180 = vmatpush1.bf16.msra.mxu0 %v1052
  %1181 = vmatprep.subr.bf16.mxu0 %v1093
  %1182 = vmatpush1.bf16.msra.mxu0 %v1090
  %1183 = vmatprep.subr.bf16.mxu0 0
  %1184 = vmatpush1.bf16.msra.mxu0 0
  %1185 = vmatprep.subr.bf16.mxu0 0
  %1186 = vmatpush1.bf16.msra.mxu0 0
  %1187 = vmatprep.subr.bf16.mxu0 0
  %1188 = vmatpush1.bf16.msra.mxu0 0
  %1189 = vmatprep.subr.bf16.mxu0 0
  %1190 = vmatpush1.bf16.msra.mxu0 0
  %1191 = vmatprep.subr.bf16.mxu0 0
  %1192 = vmatpush1.bf16.msra.mxu0 0
  %1193 = vmatprep.subr.bf16.mxu0 0
  %1194 = vmatpush1.bf16.msra.mxu0 0
  %1195 = vmatprep.subr.bf16.mxu0 0
  %1196 = vmatpush1.bf16.msra.mxu0 0
  %1197 = vmatprep.subr.bf16.mxu0 0
  %1198 = vmatpush1.bf16.msra.mxu0 0
  %1199 = vmatprep.subr.bf16.mxu0 0
  %1200 = vmatpush1.bf16.msra.mxu0 0
  %1201 = vmatprep.subr.bf16.mxu0 0
  %1202 = vmatpush1.bf16.msra.mxu0 0
  %1203 = vmatprep.subr.bf16.mxu0 0
  %1204 = vmatpush1.bf16.msra.mxu0 0
  %1205 = vmatprep.subr.bf16.mxu0 0
  %1206 = vmatpush1.bf16.msra.mxu0 0
  %1207 = vmatprep.subr.bf16.mxu0 0
  %1208 = vmatpush1.bf16.msra.mxu0 0
  %1209 = vmatprep.mubr.bf16.mxu0 0
  %1210 = vmatmul.mubr.bf16.gmra.mrb[0].mxu0 %v1074
  %v1211 = vpop.f32.mrb[0].mxu0
  %v1212 = vadd.f32 0.0, %v1211
  %v1213 = vpop.f32.mrb[0].mxu0
  %v1214 = vadd.f32 0.0, %v1213
  %v1215 = vpop.f32.mrb[0].mxu0
  %v1216 = vpop.f32.mrb[0].mxu0
  %1217 = vdwg.mxu0
  %v1233 = vunpack.c.l.b16 %v967
  %v1234 = vunpack.c.h.b16 %v967
  %v1235 = vunpack.c.l.b16 %v968
  %v1236 = vunpack.c.h.b16 %v968
  %v1237 = vunpack.c.l.b16 %v969
  %v1238 = vunpack.c.h.b16 %v969
  %v1239 = vunpack.c.l.b16 %v970
  %v1240 = vunpack.c.h.b16 %v970
  %v1241 = vunpack.c.l.b16 %v971
  %v1242 = vunpack.c.h.b16 %v971
  %v1243 = vunpack.c.l.b16 %v972
  %v1244 = vunpack.c.h.b16 %v972
  %v1245 = vunpack.c.l.b16 %v973
  %v1246 = vunpack.c.h.b16 %v973
  %v1247 = vunpack.c.l.b16 %v974
  %v1248 = vunpack.c.h.b16 %v974
  %v1249 = vunpack.c.l.b16 %v975
  %v1250 = vunpack.c.h.b16 %v975
  %v1251 = vunpack.c.l.b16 %v976
  %v1252 = vunpack.c.h.b16 %v976
  %v1253 = vunpack.c.l.b16 %v977
  %v1254 = vunpack.c.h.b16 %v977
  %v1255 = vunpack.c.l.b16 %v978
  %v1256 = vunpack.c.h.b16 %v978
  %v1257 = vunpack.c.l.b16 %v979
  %v1258 = vunpack.c.h.b16 %v979
  %v1259 = vunpack.c.l.b16 %v980
  %v1260 = vunpack.c.h.b16 %v980
  %v1261 = vunpack.c.l.b16 %v981
  %v1262 = vunpack.c.h.b16 %v981
  %v1263 = vpack.c.b16 %v1239, %v1233
  %v1264 = vpack.c.b16 %v1240, %v1234
  %v1265 = vpack.c.b16 %v1241, %v1235
  %v1266 = vpack.c.b16 %v1242, %v1236
  %v1267 = vpack.c.b16 %v1243, %v1237
  %v1268 = vpack.c.b16 %v1244, %v1238
  %v1269 = vpack.c.b16 %v1251, %v1245
  %v1270 = vpack.c.b16 %v1252, %v1246
  %v1271 = vpack.c.b16 %v1253, %v1247
  %v1272 = vpack.c.b16 %v1254, %v1248
  %v1273 = vpack.c.b16 %v1255, %v1249
  %v1274 = vpack.c.b16 %v1256, %v1250
  %v1275 = vpack.c.b16 %v1257, %v1257
  %v1276 = vpack.c.b16 %v1258, %v1258
  %v1277 = vpack.c.b16 %v1259, %v1259
  %v1278 = vpack.c.b16 %v1260, %v1260
  %v1279 = vpack.c.b16 %v1261, %v1261
  %v1280 = vpack.c.b16 %v1262, %v1262
  %v1294 = vsel %vm1076, %v1275, 0
  %v1297 = vsel %vm1076, %v1276, 0
  %v1300 = vsel %vm1076, %v1277, 0
  %v1303 = vsel %vm1076, %v1278, 0
  %v1306 = vsel %vm1076, %v1279, 0
  %v1309 = vsel %vm1076, %v1280, 0
  %1311 = vmatprep.subr.bf16.mxu0 %v1264
  %1312 = vmatpush1.bf16.msra.mxu0 %v1263
  %1313 = vmatprep.subr.bf16.mxu0 %v1270
  %1314 = vmatpush1.bf16.msra.mxu0 %v1269
  %1315 = vmatprep.subr.bf16.mxu0 %v1297
  %1316 = vmatpush1.bf16.msra.mxu0 %v1294
  %1317 = vmatprep.subr.bf16.mxu0 0
  %1318 = vmatpush1.bf16.msra.mxu0 0
  %1319 = vmatprep.subr.bf16.mxu0 0
  %1320 = vmatpush1.bf16.msra.mxu0 0
  %1321 = vmatprep.subr.bf16.mxu0 0
  %1322 = vmatpush1.bf16.msra.mxu0 0
  %1323 = vmatprep.subr.bf16.mxu0 0
  %1324 = vmatpush1.bf16.msra.mxu0 0
  %1325 = vmatprep.subr.bf16.mxu0 0
  %1326 = vmatpush1.bf16.msra.mxu0 0
  %1327 = vmatprep.subr.bf16.mxu0 0
  %1328 = vmatpush1.bf16.msra.mxu0 0
  %1329 = vmatprep.subr.bf16.mxu0 0
  %1330 = vmatpush1.bf16.msra.mxu0 0
  %1331 = vmatprep.subr.bf16.mxu0 0
  %1332 = vmatpush1.bf16.msra.mxu0 0
  %1333 = vmatprep.subr.bf16.mxu0 0
  %1334 = vmatpush1.bf16.msra.mxu0 0
  %1335 = vmatprep.subr.bf16.mxu0 0
  %1336 = vmatpush1.bf16.msra.mxu0 0
  %1337 = vmatprep.subr.bf16.mxu0 0
  %1338 = vmatpush1.bf16.msra.mxu0 0
  %1339 = vmatprep.subr.bf16.mxu0 0
  %1340 = vmatpush1.bf16.msra.mxu0 0
  %1341 = vmatprep.subr.bf16.mxu0 0
  %1342 = vmatpush1.bf16.msra.mxu0 0
  %1343 = vmatprep.mubr.bf16.mxu0 0
  %1344 = vmatmul.mubr.bf16.gmra.mrb[0].mxu0 %v1074
  %v1345 = vpop.f32.mrb[0].mxu0
  %v1346 = vadd.f32 %v1130, %v1345
  %v1347 = vpop.f32.mrb[0].mxu0
  %v1348 = vadd.f32 %v1132, %v1347
  %v1349 = vpop.f32.mrb[0].mxu0
  %v1350 = vpop.f32.mrb[0].mxu0
  %1351 = vdwg.mxu0
  %1352 = vmatprep.subr.bf16.mxu0 %v1266
  %1353 = vmatpush1.bf16.msra.mxu0 %v1265
  %1354 = vmatprep.subr.bf16.mxu0 %v1272
  %1355 = vmatpush1.bf16.msra.mxu0 %v1271
  %1356 = vmatprep.subr.bf16.mxu0 %v1303
  %1357 = vmatpush1.bf16.msra.mxu0 %v1300
  %1358 = vmatprep.subr.bf16.mxu0 0
  %1359 = vmatpush1.bf16.msra.mxu0 0
  %1360 = vmatprep.subr.bf16.mxu0 0
  %1361 = vmatpush1.bf16.msra.mxu0 0
  %1362 = vmatprep.subr.bf16.mxu0 0
  %1363 = vmatpush1.bf16.msra.mxu0 0
  %1364 = vmatprep.subr.bf16.mxu0 0
  %1365 = vmatpush1.bf16.msra.mxu0 0
  %1366 = vmatprep.subr.bf16.mxu0 0
  %1367 = vmatpush1.bf16.msra.mxu0 0
  %1368 = vmatprep.subr.bf16.mxu0 0
  %1369 = vmatpush1.bf16.msra.mxu0 0
  %1370 = vmatprep.subr.bf16.mxu0 0
  %1371 = vmatpush1.bf16.msra.mxu0 0
  %1372 = vmatprep.subr.bf16.mxu0 0
  %1373 = vmatpush1.bf16.msra.mxu0 0
  %1374 = vmatprep.subr.bf16.mxu0 0
  %1375 = vmatpush1.bf16.msra.mxu0 0
  %1376 = vmatprep.subr.bf16.mxu0 0
  %1377 = vmatpush1.bf16.msra.mxu0 0
  %1378 = vmatprep.subr.bf16.mxu0 0
  %1379 = vmatpush1.bf16.msra.mxu0 0
  %1380 = vmatprep.subr.bf16.mxu0 0
  %1381 = vmatpush1.bf16.msra.mxu0 0
  %1382 = vmatprep.subr.bf16.mxu0 0
  %1383 = vmatpush1.bf16.msra.mxu0 0
  %1384 = vmatprep.mubr.bf16.mxu0 0
  %1385 = vmatmul.mubr.bf16.gmra.mrb[0].mxu0 %v1074
  %v1386 = vpop.f32.mrb[0].mxu0
  %v1387 = vadd.f32 %v1171, %v1386
  %v1388 = vpop.f32.mrb[0].mxu0
  %v1389 = vadd.f32 %v1173, %v1388
  %v1390 = vpop.f32.mrb[0].mxu0
  %v1391 = vpop.f32.mrb[0].mxu0
  %1392 = vdwg.mxu0
  %1393 = vmatprep.subr.bf16.mxu0 %v1268
  %1394 = vmatpush1.bf16.msra.mxu0 %v1267
  %1395 = vmatprep.subr.bf16.mxu0 %v1274
  %1396 = vmatpush1.bf16.msra.mxu0 %v1273
  %1397 = vmatprep.subr.bf16.mxu0 %v1309
  %1398 = vmatpush1.bf16.msra.mxu0 %v1306
  %1399 = vmatprep.subr.bf16.mxu0 0
  %1400 = vmatpush1.bf16.msra.mxu0 0
  %1401 = vmatprep.subr.bf16.mxu0 0
  %1402 = vmatpush1.bf16.msra.mxu0 0
  %1403 = vmatprep.subr.bf16.mxu0 0
  %1404 = vmatpush1.bf16.msra.mxu0 0
  %1405 = vmatprep.subr.bf16.mxu0 0
  %1406 = vmatpush1.bf16.msra.mxu0 0
  %1407 = vmatprep.subr.bf16.mxu0 0
  %1408 = vmatpush1.bf16.msra.mxu0 0
  %1409 = vmatprep.subr.bf16.mxu0 0
  %1410 = vmatpush1.bf16.msra.mxu0 0
  %1411 = vmatprep.subr.bf16.mxu0 0
  %1412 = vmatpush1.bf16.msra.mxu0 0
  %1413 = vmatprep.subr.bf16.mxu0 0
  %1414 = vmatpush1.bf16.msra.mxu0 0
  %1415 = vmatprep.subr.bf16.mxu0 0
  %1416 = vmatpush1.bf16.msra.mxu0 0
  %1417 = vmatprep.subr.bf16.mxu0 0
  %1418 = vmatpush1.bf16.msra.mxu0 0
  %1419 = vmatprep.subr.bf16.mxu0 0
  %1420 = vmatpush1.bf16.msra.mxu0 0
  %1421 = vmatprep.subr.bf16.mxu0 0
  %1422 = vmatpush1.bf16.msra.mxu0 0
  %1423 = vmatprep.subr.bf16.mxu0 0
  %1424 = vmatpush1.bf16.msra.mxu0 0
  %1425 = vmatprep.mubr.bf16.mxu0 0
  %1426 = vmatmul.mubr.bf16.gmra.mrb[0].mxu0 %v1074
  %v1427 = vpop.f32.mrb[0].mxu0
  %v1428 = vadd.f32 %v1212, %v1427
  %v1429 = vpop.f32.mrb[0].mxu0
  %v1430 = vadd.f32 %v1214, %v1429
  %v1431 = vpop.f32.mrb[0].mxu0
  %v1432 = vpop.f32.mrb[0].mxu0
  %1433 = vdwg.mxu0
  %v1435 = vsel %vm1072, %v966, 0
  %1437 = vmatprep.subr.bf16.mxu0 %v1264
  %1438 = vmatpush1.bf16.msra.mxu0 %v1263
  %1439 = vmatprep.subr.bf16.mxu0 %v1270
  %1440 = vmatpush1.bf16.msra.mxu0 %v1269
  %1441 = vmatprep.subr.bf16.mxu0 %v1297
  %1442 = vmatpush1.bf16.msra.mxu0 %v1294
  %1443 = vmatprep.subr.bf16.mxu0 0
  %1444 = vmatpush1.bf16.msra.mxu0 0
  %1445 = vmatprep.subr.bf16.mxu0 0
  %1446 = vmatpush1.bf16.msra.mxu0 0
  %1447 = vmatprep.subr.bf16.mxu0 0
  %1448 = vmatpush1.bf16.msra.mxu0 0
  %1449 = vmatprep.subr.bf16.mxu0 0
  %1450 = vmatpush1.bf16.msra.mxu0 0
  %1451 = vmatprep.subr.bf16.mxu0 0
  %1452 = vmatpush1.bf16.msra.mxu0 0
  %1453 = vmatprep.subr.bf16.mxu0 0
  %1454 = vmatpush1.bf16.msra.mxu0 0
  %1455 = vmatprep.subr.bf16.mxu0 0
  %1456 = vmatpush1.bf16.msra.mxu0 0
  %1457 = vmatprep.subr.bf16.mxu0 0
  %1458 = vmatpush1.bf16.msra.mxu0 0
  %1459 = vmatprep.subr.bf16.mxu0 0
  %1460 = vmatpush1.bf16.msra.mxu0 0
  %1461 = vmatprep.subr.bf16.mxu0 0
  %1462 = vmatpush1.bf16.msra.mxu0 0
  %1463 = vmatprep.subr.bf16.mxu0 0
  %1464 = vmatpush1.bf16.msra.mxu0 0
  %1465 = vmatprep.subr.bf16.mxu0 0
  %1466 = vmatpush1.bf16.msra.mxu0 0
  %1467 = vmatprep.subr.bf16.mxu0 0
  %1468 = vmatpush1.bf16.msra.mxu0 0
  %1469 = vmatprep.mubr.bf16.mxu0 0
  %1470 = vmatmul.mubr.bf16.gmra.mrb[0].mxu0 %v1435
  %v1471 = vpop.f32.mrb[0].mxu0
  %v1472 = vadd.f32 0.0, %v1471
  %v1473 = vpop.f32.mrb[0].mxu0
  %v1474 = vadd.f32 0.0, %v1473
  %v1475 = vpop.f32.mrb[0].mxu0
  %v1476 = vpop.f32.mrb[0].mxu0
  %1477 = vdwg.mxu0
  %1478 = vmatprep.subr.bf16.mxu0 %v1266
  %1479 = vmatpush1.bf16.msra.mxu0 %v1265
  %1480 = vmatprep.subr.bf16.mxu0 %v1272
  %1481 = vmatpush1.bf16.msra.mxu0 %v1271
  %1482 = vmatprep.subr.bf16.mxu0 %v1303
  %1483 = vmatpush1.bf16.msra.mxu0 %v1300
  %1484 = vmatprep.subr.bf16.mxu0 0
  %1485 = vmatpush1.bf16.msra.mxu0 0
  %1486 = vmatprep.subr.bf16.mxu0 0
  %1487 = vmatpush1.bf16.msra.mxu0 0
  %1488 = vmatprep.subr.bf16.mxu0 0
  %1489 = vmatpush1.bf16.msra.mxu0 0
  %1490 = vmatprep.subr.bf16.mxu0 0
  %1491 = vmatpush1.bf16.msra.mxu0 0
  %1492 = vmatprep.subr.bf16.mxu0 0
  %1493 = vmatpush1.bf16.msra.mxu0 0
  %1494 = vmatprep.subr.bf16.mxu0 0
  %1495 = vmatpush1.bf16.msra.mxu0 0
  %1496 = vmatprep.subr.bf16.mxu0 0
  %1497 = vmatpush1.bf16.msra.mxu0 0
  %1498 = vmatprep.subr.bf16.mxu0 0
  %1499 = vmatpush1.bf16.msra.mxu0 0
  %1500 = vmatprep.subr.bf16.mxu0 0
  %1501 = vmatpush1.bf16.msra.mxu0 0
  %1502 = vmatprep.subr.bf16.mxu0 0
  %1503 = vmatpush1.bf16.msra.mxu0 0
  %1504 = vmatprep.subr.bf16.mxu0 0
  %1505 = vmatpush1.bf16.msra.mxu0 0
  %1506 = vmatprep.subr.bf16.mxu0 0
  %1507 = vmatpush1.bf16.msra.mxu0 0
  %1508 = vmatprep.subr.bf16.mxu0 0
  %1509 = vmatpush1.bf16.msra.mxu0 0
  %1510 = vmatprep.mubr.bf16.mxu0 0
  %1511 = vmatmul.mubr.bf16.gmra.mrb[0].mxu0 %v1435
  %v1512 = vpop.f32.mrb[0].mxu0
  %v1513 = vadd.f32 0.0, %v1512
  %v1514 = vpop.f32.mrb[0].mxu0
  %v1515 = vadd.f32 0.0, %v1514
  %v1516 = vpop.f32.mrb[0].mxu0
  %v1517 = vpop.f32.mrb[0].mxu0
  %1518 = vdwg.mxu0
  %1519 = vmatprep.subr.bf16.mxu0 %v1268
  %1520 = vmatpush1.bf16.msra.mxu0 %v1267
  %1521 = vmatprep.subr.bf16.mxu0 %v1274
  %1522 = vmatpush1.bf16.msra.mxu0 %v1273
  %1523 = vmatprep.subr.bf16.mxu0 %v1309
  %1524 = vmatpush1.bf16.msra.mxu0 %v1306
  %1525 = vmatprep.subr.bf16.mxu0 0
  %1526 = vmatpush1.bf16.msra.mxu0 0
  %1527 = vmatprep.subr.bf16.mxu0 0
  %1528 = vmatpush1.bf16.msra.mxu0 0
  %1529 = vmatprep.subr.bf16.mxu0 0
  %1530 = vmatpush1.bf16.msra.mxu0 0
  %1531 = vmatprep.subr.bf16.mxu0 0
  %1532 = vmatpush1.bf16.msra.mxu0 0
  %1533 = vmatprep.subr.bf16.mxu0 0
  %1534 = vmatpush1.bf16.msra.mxu0 0
  %1535 = vmatprep.subr.bf16.mxu0 0
  %1536 = vmatpush1.bf16.msra.mxu0 0
  %1537 = vmatprep.subr.bf16.mxu0 0
  %1538 = vmatpush1.bf16.msra.mxu0 0
  %1539 = vmatprep.subr.bf16.mxu0 0
  %1540 = vmatpush1.bf16.msra.mxu0 0
  %1541 = vmatprep.subr.bf16.mxu0 0
  %1542 = vmatpush1.bf16.msra.mxu0 0
  %1543 = vmatprep.subr.bf16.mxu0 0
  %1544 = vmatpush1.bf16.msra.mxu0 0
  %1545 = vmatprep.subr.bf16.mxu0 0
  %1546 = vmatpush1.bf16.msra.mxu0 0
  %1547 = vmatprep.subr.bf16.mxu0 0
  %1548 = vmatpush1.bf16.msra.mxu0 0
  %1549 = vmatprep.subr.bf16.mxu0 0
  %1550 = vmatpush1.bf16.msra.mxu0 0
  %1551 = vmatprep.mubr.bf16.mxu0 0
  %1552 = vmatmul.mubr.bf16.gmra.mrb[0].mxu0 %v1435
  %v1553 = vpop.f32.mrb[0].mxu0
  %v1554 = vadd.f32 0.0, %v1553
  %v1555 = vpop.f32.mrb[0].mxu0
  %v1556 = vadd.f32 0.0, %v1555
  %v1557 = vpop.f32.mrb[0].mxu0
  %v1558 = vpop.f32.mrb[0].mxu0
  %1559 = vdwg.mxu0
  %v1560 = vadd.f32 %v1346, %v1472
  %v1561 = vadd.f32 %v1348, %v1474
  %v1562 = vadd.f32 %v1387, %v1513
  %v1563 = vadd.f32 %v1389, %v1515
  %v1564 = vadd.f32 %v1428, %v1554
  %v1565 = vadd.f32 %v1430, %v1556
  %v1566 = vmul.f32 %v1560, %v142
  %v1567 = vmul.f32 %v1561, %v143
  %v1568 = vmul.f32 %v1562, %v144
  %v1569 = vmul.f32 %v1563, %v145
  %v1570 = vmul.f32 %v1564, %v146
  %v1571 = vmul.f32 %v1565, %v147
  %v1572 = vadd.f32 %v1566, %v1567
  %v1573 = vadd.f32 %v1572, %v1568
  %v1574 = vadd.f32 %v1573, %v1569
  %v1575 = vadd.f32 %v1574, %v1570
  %v1576 = vadd.f32 %v1575, %v1571
  %1577 = vadd.xlane.f32.xlu0 %v1576
  %v1578 = vpop.xlane.xlu0 %1577
  %v1579 = vmul.f32 %v1566, %v1566
  %v1580 = vmul.f32 %v1567, %v1567
  %v1581 = vmul.f32 %v1568, %v1568
  %v1582 = vmul.f32 %v1569, %v1569
  %v1583 = vmul.f32 %v1570, %v1570
  %v1584 = vmul.f32 %v1571, %v1571
  %v1585 = vadd.f32 %v1579, %v1580
  %v1586 = vadd.f32 %v1585, %v1581
  %v1587 = vadd.f32 %v1586, %v1582
  %v1588 = vadd.f32 %v1587, %v1583
  %v1589 = vadd.f32 %v1588, %v1584
  %1590 = vadd.xlane.f32.xlu0 %v1589
  %v1591 = vpop.xlane.xlu0 %1590
  %v1592 = vmul.f32 %v1578, 0.001953125
  %v1593 = vmul.f32 %v1591, 0.001953125
  %v1594 = vmul.f32 %v1592, %v1592
  %v1595 = vsub.f32 %v1593, %v1594
  %v1596 = vmax.f32 %v1595, 0.0
  %v1597 = vld [vmem:[%s2] sm:$0xff]
  %v1598 = vadd.f32 %v1596, 1e-05
  %v1599 = vrsqrt.pop %v1598
  %v1600 = vmul.f32 %v1597, %v1599
  %v1601 = vld [vmem:[%s3] sm:$0xff]
  %v1602 = vmul.f32 %v1592, %v1600
  %v1603 = vsub.f32 %v1601, %v1602
  %1605 = vset.pattern.permute.xlu0 0
  %1606 = vperm.xlu0 %1605, %v1600
  %v1607 = vpop.permute.xlu0 %1606
  %v1609 = vmul.f32 %v1560, %v1607
  %v1610 = vmul.f32 %v1561, %v1607
  %v1611 = vmul.f32 %v1562, %v1607
  %v1612 = vmul.f32 %v1563, %v1607
  %v1613 = vmul.f32 %v1564, %v1607
  %v1614 = vmul.f32 %v1565, %v1607
  %1616 = vset.pattern.permute.xlu0 0
  %1617 = vperm.xlu0 %1616, %v1603
  %v1618 = vpop.permute.xlu0 %1617
  %v1620 = vadd.f32 %v1609, %v1618
  %v1621 = vadd.f32 %v1610, %v1618
  %v1622 = vadd.f32 %v1611, %v1618
  %v1623 = vadd.f32 %v1612, %v1618
  %v1624 = vadd.f32 %v1613, %v1618
  %v1625 = vadd.f32 %v1614, %v1618
  %v1626 = vmax.f32 %v1620, 0.0
  %v1627 = vmax.f32 %v1621, 0.0
  %v1628 = vmax.f32 %v1622, 0.0
  %v1629 = vmax.f32 %v1623, 0.0
  %v1630 = vmax.f32 %v1624, 0.0
  %v1631 = vmax.f32 %v1625, 0.0
  %v1632 = vmul.f32 %v1626, %v142
  %v1633 = vmul.f32 %v1627, %v143
  %v1634 = vmul.f32 %v1628, %v144
  %v1635 = vmul.f32 %v1629, %v145
  %v1636 = vmul.f32 %v1630, %v146
  %v1637 = vmul.f32 %v1631, %v147
  %1638 = vst [vmem:[#allocation2] sm:$0xff] 0.0
  %1639 = vst [vmem:[#allocation2 + $0x28] sm:$0xff] 0.0
  %1640 = vst [vmem:[#allocation2 + $0x20] sm:$0xff] 0.0
  %1641 = vst [vmem:[#allocation2 + $0x48] sm:$0xff] 0.0
  %1642 = vst [vmem:[#allocation2 + $0x8] sm:$0xff] %v1632
  %1643 = vst [vmem:[#allocation2 + $0x10] sm:$0xff] %v1633
  %1644 = vst [vmem:[#allocation2 + $0x18] sm:$0xff] %v1634
  %s1645 = scalar_lea.vmem [#allocation2], 40
  %1646 = vst [vmem:[%s1645 + $0x8] sm:$0xff] %v1635
  %1647 = vst [vmem:[%s1645 + $0x10] sm:$0xff] %v1636
  %1648 = vst [vmem:[%s1645 + $0x18] sm:$0xff] %v1637
  %v1649 = vld [vmem:[#allocation2] sm:$0xff]
  %v1650 = vld [vmem:[#allocation2 + $0x8] sm:$0xff]
  %v1651 = vld [vmem:[#allocation2 + $0x10] sm:$0xff]
  %v1652 = vld [vmem:[#allocation2 + $0x18] sm:$0xff]
  %v1653 = vpack.c.bf16 %v1649, %v1649
  %v1654 = vpack.c.bf16 %v1650, %v1650
  %v1655 = vpack.c.bf16 %v1651, %v1651
  %v1656 = vpack.c.bf16 %v1652, %v1652
  %v1657 = vunpack.c.l.bf16 %v1653
  %v1658 = vunpack.c.l.bf16 %v1654
  %v1659 = vunpack.c.l.bf16 %v1655
  %v1660 = vunpack.c.l.bf16 %v1656
  %v1661 = vsub.f32 %v1649, %v1657
  %v1662 = vsub.f32 %v1650, %v1658
  %v1663 = vsub.f32 %v1651, %v1659
  %v1664 = vsub.f32 %v1652, %v1660
  %v1665 = vpack.c.bf16 %v1661, %v1661
  %v1666 = vpack.c.bf16 %v1662, %v1662
  %v1667 = vpack.c.bf16 %v1663, %v1663
  %v1668 = vpack.c.bf16 %v1664, %v1664
  %v1673 = vunpack.c.l.b16 %v1653
  %v1674 = vunpack.c.l.b16 %v1654
  %v1675 = vunpack.c.l.b16 %v1655
  %v1676 = vunpack.c.l.b16 %v1656
  %v1677 = vpack.c.b16 %v1674, %v1673
  %v1678 = vpack.c.b16 %v1676, %v1675
  %1679 = vrot.lane.b32.xlu0 %v1677, 25
  %v1680 = vpop.permute.xlu0 %1679
  %1681 = vrot.lane.b32.xlu0 %v1678, 25
  %v1682 = vpop.permute.xlu0 %1681
  %v1683 = vrot.slane %v1680, 4
  %v1684 = vrot.slane %v1682, 4
  %v1685 = vsel %vm221, %v1683, %v1684
  %vm1686 = vcmask 203776
  %v1687 = vsel %vm1686, %v1680, %v1685
  %v1688 = vsel %vm1686, %v1682, %v1684
  %1691 = vst [vmem:[#allocation3] sm:$0xff] %v1687
  %1692 = vst [vmem:[#allocation3 + $0x8] sm:$0xf] %v1688
  %v1697 = vunpack.c.l.b16 %v1665
  %v1698 = vunpack.c.l.b16 %v1666
  %v1699 = vunpack.c.l.b16 %v1667
  %v1700 = vunpack.c.l.b16 %v1668
  %v1701 = vpack.c.b16 %v1698, %v1697
  %v1702 = vpack.c.b16 %v1700, %v1699
  %1703 = vrot.lane.b32.xlu0 %v1701, 25
  %v1704 = vpop.permute.xlu0 %1703
  %1705 = vrot.lane.b32.xlu0 %v1702, 25
  %v1706 = vpop.permute.xlu0 %1705
  %v1707 = vrot.slane %v1704, 4
  %v1708 = vrot.slane %v1706, 4
  %v1709 = vsel %vm221, %v1707, %v1708
  %v1710 = vsel %vm1686, %v1704, %v1709
  %v1711 = vsel %vm1686, %v1706, %v1708
  %1714 = vst [vmem:[#allocation4] sm:$0xff] %v1710
  %1715 = vst [vmem:[#allocation4 + $0x8] sm:$0xf] %v1711
  %1716 = vrot.lane.b32.xlu0 %v1677, 24
  %v1717 = vpop.permute.xlu0 %1716
  %1718 = vrot.lane.b32.xlu0 %v1678, 24
  %v1719 = vpop.permute.xlu0 %1718
  %v1720 = vrot.slane %v1717, 4
  %v1721 = vrot.slane %v1719, 4
  %v1722 = vsel %vm221, %v1720, %v1721
  %vm1723 = vcmask 195584
  %v1724 = vsel %vm1723, %v1717, %v1722
  %v1725 = vsel %vm1723, %v1719, %v1721
  %1728 = vst [vmem:[#allocation3 + $0x18] sm:$0xff] %v1724
  %1729 = vst [vmem:[#allocation3 + $0x20] sm:$0xf] %v1725
  %1730 = vrot.lane.b32.xlu0 %v1701, 24
  %v1731 = vpop.permute.xlu0 %1730
  %1732 = vrot.lane.b32.xlu0 %v1702, 24
  %v1733 = vpop.permute.xlu0 %1732
  %v1734 = vrot.slane %v1731, 4
  %v1735 = vrot.slane %v1733, 4
  %v1736 = vsel %vm221, %v1734, %v1735
  %v1737 = vsel %vm1723, %v1731, %v1736
  %v1738 = vsel %vm1723, %v1733, %v1735
  %1741 = vst [vmem:[#allocation4 + $0x18] sm:$0xff] %v1737
  %1742 = vst [vmem:[#allocation4 + $0x20] sm:$0xf] %v1738
  %1743 = vrot.lane.b32.xlu0 %v1677, 23
  %v1744 = vpop.permute.xlu0 %1743
  %1745 = vrot.lane.b32.xlu0 %v1678, 23
  %v1746 = vpop.permute.xlu0 %1745
  %v1747 = vrot.slane %v1744, 4
  %v1748 = vrot.slane %v1746, 4
  %v1749 = vsel %vm221, %v1747, %v1748
  %vm1750 = vcmask 187392
  %v1751 = vsel %vm1750, %v1744, %v1749
  %v1752 = vsel %vm1750, %v1746, %v1748
  %1755 = vst [vmem:[#allocation3 + $0x30] sm:$0xff] %v1751
  %1756 = vst [vmem:[#allocation3 + $0x38] sm:$0xf] %v1752
  %1757 = vrot.lane.b32.xlu0 %v1701, 23
  %v1758 = vpop.permute.xlu0 %1757
  %1759 = vrot.lane.b32.xlu0 %v1702, 23
  %v1760 = vpop.permute.xlu0 %1759
  %v1761 = vrot.slane %v1758, 4
  %v1762 = vrot.slane %v1760, 4
  %v1763 = vsel %vm221, %v1761, %v1762
  %v1764 = vsel %vm1750, %v1758, %v1763
  %v1765 = vsel %vm1750, %v1760, %v1762
  %1768 = vst [vmem:[#allocation4 + $0x30] sm:$0xff] %v1764
  %1769 = vst [vmem:[#allocation4 + $0x38] sm:$0xf] %v1765
  %v1770 = vld [vmem:[#allocation2] sm:$0xff]
  %v1771 = vld [vmem:[#allocation2 + $0x8] sm:$0xff]
  %v1772 = vld [vmem:[#allocation2 + $0x10] sm:$0xff]
  %v1773 = vld [vmem:[#allocation2 + $0x18] sm:$0xff]
  %v1774 = vld [vmem:[#allocation2 + $0x20] sm:$0xff]
  %v1775 = vpack.c.bf16 %v1770, %v1770
  %v1776 = vpack.c.bf16 %v1771, %v1771
  %v1777 = vpack.c.bf16 %v1772, %v1772
  %v1778 = vpack.c.bf16 %v1773, %v1773
  %v1779 = vunpack.c.l.bf16 %v1775
  %v1780 = vunpack.c.l.bf16 %v1776
  %v1781 = vunpack.c.l.bf16 %v1777
  %v1782 = vunpack.c.l.bf16 %v1778
  %v1783 = vsub.f32 %v1770, %v1779
  %v1784 = vsub.f32 %v1771, %v1780
  %v1785 = vsub.f32 %v1772, %v1781
  %v1786 = vsub.f32 %v1773, %v1782
  %v1787 = vpack.c.bf16 %v1783, %v1783
  %v1788 = vpack.c.bf16 %v1784, %v1784
  %v1789 = vpack.c.bf16 %v1785, %v1785
  %v1790 = vpack.c.bf16 %v1786, %v1786
  %v1795 = vunpack.c.l.b16 %v1775
  %v1796 = vunpack.c.l.b16 %v1776
  %v1797 = vunpack.c.l.b16 %v1777
  %v1798 = vunpack.c.l.b16 %v1778
  %v1799 = vpack.c.b16 %v1796, %v1795
  %v1800 = vpack.c.b16 %v1798, %v1797
  %1801 = vrot.lane.b32.xlu0 %v1799, 1
  %v1802 = vpop.permute.xlu0 %1801
  %1803 = vrot.lane.b32.xlu0 %v1800, 1
  %v1804 = vpop.permute.xlu0 %1803
  %v1805 = vrot.slane %v1802, 4
  %v1806 = vrot.slane %v1804, 4
  %v1807 = vsel %vm221, %v1805, %v1806
  %vm1808 = vcmask 7168
  %v1809 = vsel %vm1808, %v1802, %v1807
  %v1810 = vsel %vm1808, %v1804, %v1806
  %1813 = vst [vmem:[#allocation3 + $0x48] sm:$0xff] %v1809
  %1814 = vst [vmem:[#allocation3 + $0x50] sm:$0xf] %v1810
  %v1819 = vunpack.c.l.b16 %v1787
  %v1820 = vunpack.c.l.b16 %v1788
  %v1821 = vunpack.c.l.b16 %v1789
  %v1822 = vunpack.c.l.b16 %v1790
  %v1823 = vpack.c.b16 %v1820, %v1819
  %v1824 = vpack.c.b16 %v1822, %v1821
  %1825 = vrot.lane.b32.xlu0 %v1823, 1
  %v1826 = vpop.permute.xlu0 %1825
  %1827 = vrot.lane.b32.xlu0 %v1824, 1
  %v1828 = vpop.permute.xlu0 %1827
  %v1829 = vrot.slane %v1826, 4
  %v1830 = vrot.slane %v1828, 4
  %v1831 = vsel %vm221, %v1829, %v1830
  %v1832 = vsel %vm1808, %v1826, %v1831
  %v1833 = vsel %vm1808, %v1828, %v1830
  %1836 = vst [vmem:[#allocation4 + $0x48] sm:$0xff] %v1832
  %1837 = vst [vmem:[#allocation4 + $0x50] sm:$0xf] %v1833
  %v1838 = vpack.c.b16 %v1797, %v1796
  %v1839 = vpack.c.b16 %v1798, %v1798
  %1842 = vst [vmem:[#allocation3 + $0x60] sm:$0xff] %v1838
  %1843 = vst [vmem:[#allocation3 + $0x68] sm:$0xf] %v1839
  %v1844 = vpack.c.b16 %v1821, %v1820
  %v1845 = vpack.c.b16 %v1822, %v1822
  %1848 = vst [vmem:[#allocation4 + $0x60] sm:$0xff] %v1844
  %1849 = vst [vmem:[#allocation4 + $0x68] sm:$0xf] %v1845
  %v1850 = vpack.c.bf16 %v1774, %v1774
  %v1851 = vunpack.c.l.bf16 %v1850
  %v1852 = vsub.f32 %v1774, %v1851
  %v1853 = vpack.c.bf16 %v1852, %v1852
  %v1855 = vunpack.c.l.b16 %v1850
  %v1856 = vpack.c.b16 %v1855, %v1798
  %1857 = vrot.lane.b32.xlu0 %v1838, 127
  %v1858 = vpop.permute.xlu0 %1857
  %1859 = vrot.lane.b32.xlu0 %v1856, 127
  %v1860 = vpop.permute.xlu0 %1859
  %v1861 = vrot.slane %v1858, 4
  %v1862 = vrot.slane %v1860, 4
  %v1863 = vsel %vm221, %v1861, %v1862
  %v1864 = vsel %vm223, %v1858, %v1863
  %v1865 = vsel %vm223, %v1860, %v1862
  %1868 = vst [vmem:[#allocation3 + $0x78] sm:$0xff] %v1864
  %1869 = vst [vmem:[#allocation3 + $0x80] sm:$0xf] %v1865
  %v1871 = vunpack.c.l.b16 %v1853
  %v1872 = vpack.c.b16 %v1871, %v1822
  %1873 = vrot.lane.b32.xlu0 %v1844, 127
  %v1874 = vpop.permute.xlu0 %1873
  %1875 = vrot.lane.b32.xlu0 %v1872, 127
  %v1876 = vpop.permute.xlu0 %1875
  %v1877 = vrot.slane %v1874, 4
  %v1878 = vrot.slane %v1876, 4
  %v1879 = vsel %vm221, %v1877, %v1878
  %v1880 = vsel %vm223, %v1874, %v1879
  %v1881 = vsel %vm223, %v1876, %v1878
  %1884 = vst [vmem:[#allocation4 + $0x78] sm:$0xff] %v1880
  %1885 = vst [vmem:[#allocation4 + $0x80] sm:$0xf] %v1881
  %v1886 = vld [vmem:[#allocation2 + $0x8] sm:$0xff]
  %v1887 = vld [vmem:[#allocation2 + $0x10] sm:$0xff]
  %v1888 = vld [vmem:[#allocation2 + $0x18] sm:$0xff]
  %v1889 = vld [vmem:[#allocation2 + $0x20] sm:$0xff]
  %v1890 = vpack.c.bf16 %v1886, %v1886
  %v1891 = vpack.c.bf16 %v1887, %v1887
  %v1892 = vpack.c.bf16 %v1888, %v1888
  %v1893 = vpack.c.bf16 %v1889, %v1889
  %v1894 = vunpack.c.l.bf16 %v1890
  %v1895 = vunpack.c.l.bf16 %v1891
  %v1896 = vunpack.c.l.bf16 %v1892
  %v1897 = vunpack.c.l.bf16 %v1893
  %v1898 = vsub.f32 %v1886, %v1894
  %v1899 = vsub.f32 %v1887, %v1895
  %v1900 = vsub.f32 %v1888, %v1896
  %v1901 = vsub.f32 %v1889, %v1897
  %v1902 = vpack.c.bf16 %v1898, %v1898
  %v1903 = vpack.c.bf16 %v1899, %v1899
  %v1904 = vpack.c.bf16 %v1900, %v1900
  %v1905 = vpack.c.bf16 %v1901, %v1901
  %v1910 = vunpack.c.l.b16 %v1890
  %v1911 = vunpack.c.l.b16 %v1891
  %v1912 = vunpack.c.l.b16 %v1892
  %v1913 = vunpack.c.l.b16 %v1893
  %v1914 = vpack.c.b16 %v1911, %v1910
  %v1915 = vpack.c.b16 %v1913, %v1912
  %1916 = vrot.lane.b32.xlu0 %v1914, 105
  %v1917 = vpop.permute.xlu0 %1916
  %1918 = vrot.lane.b32.xlu0 %v1915, 105
  %v1919 = vpop.permute.xlu0 %1918
  %v1920 = vrot.slane %v1917, 4
  %v1921 = vrot.slane %v1919, 4
  %v1922 = vsel %vm221, %v1920, %v1921
  %vm1923 = vcmask 859136
  %v1924 = vsel %vm1923, %v1917, %v1922
  %v1925 = vsel %vm1923, %v1919, %v1921
  %1928 = vst [vmem:[#allocation3 + $0x90] sm:$0xff] %v1924
  %1929 = vst [vmem:[#allocation3 + $0x98] sm:$0xf] %v1925
  %v1934 = vunpack.c.l.b16 %v1902
  %v1935 = vunpack.c.l.b16 %v1903
  %v1936 = vunpack.c.l.b16 %v1904
  %v1937 = vunpack.c.l.b16 %v1905
  %v1938 = vpack.c.b16 %v1935, %v1934
  %v1939 = vpack.c.b16 %v1937, %v1936
  %1940 = vrot.lane.b32.xlu0 %v1938, 105
  %v1941 = vpop.permute.xlu0 %1940
  %1942 = vrot.lane.b32.xlu0 %v1939, 105
  %v1943 = vpop.permute.xlu0 %1942
  %v1944 = vrot.slane %v1941, 4
  %v1945 = vrot.slane %v1943, 4
  %v1946 = vsel %vm221, %v1944, %v1945
  %v1947 = vsel %vm1923, %v1941, %v1946
  %v1948 = vsel %vm1923, %v1943, %v1945
  %1951 = vst [vmem:[#allocation4 + $0x90] sm:$0xff] %v1947
  %1952 = vst [vmem:[#allocation4 + $0x98] sm:$0xf] %v1948
  %1953 = vrot.lane.b32.xlu0 %v1914, 104
  %v1954 = vpop.permute.xlu0 %1953
  %1955 = vrot.lane.b32.xlu0 %v1915, 104
  %v1956 = vpop.permute.xlu0 %1955
  %v1957 = vrot.slane %v1954, 4
  %v1958 = vrot.slane %v1956, 4
  %v1959 = vsel %vm221, %v1957, %v1958
  %v1960 = vsel %vm332, %v1954, %v1959
  %v1961 = vsel %vm332, %v1956, %v1958
  %1964 = vst [vmem:[#allocation3 + $0xa8] sm:$0xff] %v1960
  %1965 = vst [vmem:[#allocation3 + $0xb0] sm:$0xf] %v1961
  %1966 = vrot.lane.b32.xlu0 %v1938, 104
  %v1967 = vpop.permute.xlu0 %1966
  %1968 = vrot.lane.b32.xlu0 %v1939, 104
  %v1969 = vpop.permute.xlu0 %1968
  %v1970 = vrot.slane %v1967, 4
  %v1971 = vrot.slane %v1969, 4
  %v1972 = vsel %vm221, %v1970, %v1971
  %v1973 = vsel %vm332, %v1967, %v1972
  %v1974 = vsel %vm332, %v1969, %v1971
  %1977 = vst [vmem:[#allocation4 + $0xa8] sm:$0xff] %v1973
  %1978 = vst [vmem:[#allocation4 + $0xb0] sm:$0xf] %v1974
  %1979 = vrot.lane.b32.xlu0 %v1914, 103
  %v1980 = vpop.permute.xlu0 %1979
  %1981 = vrot.lane.b32.xlu0 %v1915, 103
  %v1982 = vpop.permute.xlu0 %1981
  %v1983 = vrot.slane %v1980, 4
  %v1984 = vrot.slane %v1982, 4
  %v1985 = vsel %vm221, %v1983, %v1984
  %v1986 = vsel %vm371, %v1980, %v1985
  %v1987 = vsel %vm371, %v1982, %v1984
  %1990 = vst [vmem:[#allocation3 + $0xc0] sm:$0xff] %v1986
  %1991 = vst [vmem:[#allocation3 + $0xc8] sm:$0xf] %v1987
  %1992 = vrot.lane.b32.xlu0 %v1938, 103
  %v1993 = vpop.permute.xlu0 %1992
  %1994 = vrot.lane.b32.xlu0 %v1939, 103
  %v1995 = vpop.permute.xlu0 %1994
  %v1996 = vrot.slane %v1993, 4
  %v1997 = vrot.slane %v1995, 4
  %v1998 = vsel %vm221, %v1996, %v1997
  %v1999 = vsel %vm371, %v1993, %v1998
  %v2000 = vsel %vm371, %v1995, %v1997
  %2003 = vst [vmem:[#allocation4 + $0xc0] sm:$0xff] %v1999
  %2004 = vst [vmem:[#allocation4 + $0xc8] sm:$0xf] %v2000
  %v2005 = vld [vmem:[%s1645] sm:$0xff]
  %v2006 = vld [vmem:[%s1645 + $0x8] sm:$0xff]
  %v2007 = vld [vmem:[%s1645 + $0x10] sm:$0xff]
  %v2008 = vld [vmem:[%s1645 + $0x18] sm:$0xff]
  %v2009 = vpack.c.bf16 %v2005, %v2005
  %v2010 = vpack.c.bf16 %v2006, %v2006
  %v2011 = vpack.c.bf16 %v2007, %v2007
  %v2012 = vpack.c.bf16 %v2008, %v2008
  %v2013 = vunpack.c.l.bf16 %v2009
  %v2014 = vunpack.c.l.bf16 %v2010
  %v2015 = vunpack.c.l.bf16 %v2011
  %v2016 = vunpack.c.l.bf16 %v2012
  %v2017 = vsub.f32 %v2005, %v2013
  %v2018 = vsub.f32 %v2006, %v2014
  %v2019 = vsub.f32 %v2007, %v2015
  %v2020 = vsub.f32 %v2008, %v2016
  %v2021 = vpack.c.bf16 %v2017, %v2017
  %v2022 = vpack.c.bf16 %v2018, %v2018
  %v2023 = vpack.c.bf16 %v2019, %v2019
  %v2024 = vpack.c.bf16 %v2020, %v2020
  %v2029 = vunpack.c.l.b16 %v2009
  %v2030 = vunpack.c.l.b16 %v2010
  %v2031 = vunpack.c.l.b16 %v2011
  %v2032 = vunpack.c.l.b16 %v2012
  %v2033 = vpack.c.b16 %v2030, %v2029
  %v2034 = vpack.c.b16 %v2032, %v2031
  %2035 = vrot.lane.b32.xlu0 %v2033, 25
  %v2036 = vpop.permute.xlu0 %2035
  %2037 = vrot.lane.b32.xlu0 %v2034, 25
  %v2038 = vpop.permute.xlu0 %2037
  %v2039 = vrot.slane %v2036, 4
  %v2040 = vrot.slane %v2038, 4
  %v2041 = vsel %vm221, %v2039, %v2040
  %v2042 = vsel %vm1686, %v2036, %v2041
  %v2043 = vsel %vm1686, %v2038, %v2040
  %2046 = vst [vmem:[#allocation3 + $0xc] sm:$0xff] %v2042
  %2047 = vst [vmem:[#allocation3 + $0x14] sm:$0xf] %v2043
  %v2052 = vunpack.c.l.b16 %v2021
  %v2053 = vunpack.c.l.b16 %v2022
  %v2054 = vunpack.c.l.b16 %v2023
  %v2055 = vunpack.c.l.b16 %v2024
  %v2056 = vpack.c.b16 %v2053, %v2052
  %v2057 = vpack.c.b16 %v2055, %v2054
  %2058 = vrot.lane.b32.xlu0 %v2056, 25
  %v2059 = vpop.permute.xlu0 %2058
  %2060 = vrot.lane.b32.xlu0 %v2057, 25
  %v2061 = vpop.permute.xlu0 %2060
  %v2062 = vrot.slane %v2059, 4
  %v2063 = vrot.slane %v2061, 4
  %v2064 = vsel %vm221, %v2062, %v2063
  %v2065 = vsel %vm1686, %v2059, %v2064
  %v2066 = vsel %vm1686, %v2061, %v2063
  %2069 = vst [vmem:[#allocation4 + $0xc] sm:$0xff] %v2065
  %2070 = vst [vmem:[#allocation4 + $0x14] sm:$0xf] %v2066
  %2071 = vrot.lane.b32.xlu0 %v2033, 24
  %v2072 = vpop.permute.xlu0 %2071
  %2073 = vrot.lane.b32.xlu0 %v2034, 24
  %v2074 = vpop.permute.xlu0 %2073
  %v2075 = vrot.slane %v2072, 4
  %v2076 = vrot.slane %v2074, 4
  %v2077 = vsel %vm221, %v2075, %v2076
  %v2078 = vsel %vm1723, %v2072, %v2077
  %v2079 = vsel %vm1723, %v2074, %v2076
  %2082 = vst [vmem:[#allocation3 + $0x24] sm:$0xff] %v2078
  %2083 = vst [vmem:[#allocation3 + $0x2c] sm:$0xf] %v2079
  %2084 = vrot.lane.b32.xlu0 %v2056, 24
  %v2085 = vpop.permute.xlu0 %2084
  %2086 = vrot.lane.b32.xlu0 %v2057, 24
  %v2087 = vpop.permute.xlu0 %2086
  %v2088 = vrot.slane %v2085, 4
  %v2089 = vrot.slane %v2087, 4
  %v2090 = vsel %vm221, %v2088, %v2089
  %v2091 = vsel %vm1723, %v2085, %v2090
  %v2092 = vsel %vm1723, %v2087, %v2089
  %2095 = vst [vmem:[#allocation4 + $0x24] sm:$0xff] %v2091
  %2096 = vst [vmem:[#allocation4 + $0x2c] sm:$0xf] %v2092
  %2097 = vrot.lane.b32.xlu0 %v2033, 23
  %v2098 = vpop.permute.xlu0 %2097
  %2099 = vrot.lane.b32.xlu0 %v2034, 23
  %v2100 = vpop.permute.xlu0 %2099
  %v2101 = vrot.slane %v2098, 4
  %v2102 = vrot.slane %v2100, 4
  %v2103 = vsel %vm221, %v2101, %v2102
  %v2104 = vsel %vm1750, %v2098, %v2103
  %v2105 = vsel %vm1750, %v2100, %v2102
  %2108 = vst [vmem:[#allocation3 + $0x3c] sm:$0xff] %v2104
  %2109 = vst [vmem:[#allocation3 + $0x44] sm:$0xf] %v2105
  %2110 = vrot.lane.b32.xlu0 %v2056, 23
  %v2111 = vpop.permute.xlu0 %2110
  %2112 = vrot.lane.b32.xlu0 %v2057, 23
  %v2113 = vpop.permute.xlu0 %2112
  %v2114 = vrot.slane %v2111, 4
  %v2115 = vrot.slane %v2113, 4
  %v2116 = vsel %vm221, %v2114, %v2115
  %v2117 = vsel %vm1750, %v2111, %v2116
  %v2118 = vsel %vm1750, %v2113, %v2115
  %2121 = vst [vmem:[#allocation4 + $0x3c] sm:$0xff] %v2117
  %2122 = vst [vmem:[#allocation4 + $0x44] sm:$0xf] %v2118
  %v2123 = vld [vmem:[%s1645] sm:$0xff]
  %v2124 = vld [vmem:[%s1645 + $0x8] sm:$0xff]
  %v2125 = vld [vmem:[%s1645 + $0x10] sm:$0xff]
  %v2126 = vld [vmem:[%s1645 + $0x18] sm:$0xff]
  %v2127 = vld [vmem:[%s1645 + $0x20] sm:$0xff]
  %v2128 = vpack.c.bf16 %v2123, %v2123
  %v2129 = vpack.c.bf16 %v2124, %v2124
  %v2130 = vpack.c.bf16 %v2125, %v2125
  %v2131 = vpack.c.bf16 %v2126, %v2126
  %v2132 = vunpack.c.l.bf16 %v2128
  %v2133 = vunpack.c.l.bf16 %v2129
  %v2134 = vunpack.c.l.bf16 %v2130
  %v2135 = vunpack.c.l.bf16 %v2131
  %v2136 = vsub.f32 %v2123, %v2132
  %v2137 = vsub.f32 %v2124, %v2133
  %v2138 = vsub.f32 %v2125, %v2134
  %v2139 = vsub.f32 %v2126, %v2135
  %v2140 = vpack.c.bf16 %v2136, %v2136
  %v2141 = vpack.c.bf16 %v2137, %v2137
  %v2142 = vpack.c.bf16 %v2138, %v2138
  %v2143 = vpack.c.bf16 %v2139, %v2139
  %v2148 = vunpack.c.l.b16 %v2128
  %v2149 = vunpack.c.l.b16 %v2129
  %v2150 = vunpack.c.l.b16 %v2130
  %v2151 = vunpack.c.l.b16 %v2131
  %v2152 = vpack.c.b16 %v2149, %v2148
  %v2153 = vpack.c.b16 %v2151, %v2150
  %2154 = vrot.lane.b32.xlu0 %v2152, 1
  %v2155 = vpop.permute.xlu0 %2154
  %2156 = vrot.lane.b32.xlu0 %v2153, 1
  %v2157 = vpop.permute.xlu0 %2156
  %v2158 = vrot.slane %v2155, 4
  %v2159 = vrot.slane %v2157, 4
  %v2160 = vsel %vm221, %v2158, %v2159
  %v2161 = vsel %vm1808, %v2155, %v2160
  %v2162 = vsel %vm1808, %v2157, %v2159
  %2165 = vst [vmem:[#allocation3 + $0x54] sm:$0xff] %v2161
  %2166 = vst [vmem:[#allocation3 + $0x5c] sm:$0xf] %v2162
  %v2171 = vunpack.c.l.b16 %v2140
  %v2172 = vunpack.c.l.b16 %v2141
  %v2173 = vunpack.c.l.b16 %v2142
  %v2174 = vunpack.c.l.b16 %v2143
  %v2175 = vpack.c.b16 %v2172, %v2171
  %v2176 = vpack.c.b16 %v2174, %v2173
  %2177 = vrot.lane.b32.xlu0 %v2175, 1
  %v2178 = vpop.permute.xlu0 %2177
  %2179 = vrot.lane.b32.xlu0 %v2176, 1
  %v2180 = vpop.permute.xlu0 %2179
  %v2181 = vrot.slane %v2178, 4
  %v2182 = vrot.slane %v2180, 4
  %v2183 = vsel %vm221, %v2181, %v2182
  %v2184 = vsel %vm1808, %v2178, %v2183
  %v2185 = vsel %vm1808, %v2180, %v2182
  %2188 = vst [vmem:[#allocation4 + $0x54] sm:$0xff] %v2184
  %2189 = vst [vmem:[#allocation4 + $0x5c] sm:$0xf] %v2185
  %v2190 = vpack.c.b16 %v2150, %v2149
  %v2191 = vpack.c.b16 %v2151, %v2151
  %2194 = vst [vmem:[#allocation3 + $0x6c] sm:$0xff] %v2190
  %2195 = vst [vmem:[#allocation3 + $0x74] sm:$0xf] %v2191
  %v2196 = vpack.c.b16 %v2173, %v2172
  %v2197 = vpack.c.b16 %v2174, %v2174
  %2200 = vst [vmem:[#allocation4 + $0x6c] sm:$0xff] %v2196
  %2201 = vst [vmem:[#allocation4 + $0x74] sm:$0xf] %v2197
  %v2202 = vpack.c.bf16 %v2127, %v2127
  %v2203 = vunpack.c.l.bf16 %v2202
  %v2204 = vsub.f32 %v2127, %v2203
  %v2205 = vpack.c.bf16 %v2204, %v2204
  %v2207 = vunpack.c.l.b16 %v2202
  %v2208 = vpack.c.b16 %v2207, %v2151
  %2209 = vrot.lane.b32.xlu0 %v2190, 127
  %v2210 = vpop.permute.xlu0 %2209
  %2211 = vrot.lane.b32.xlu0 %v2208, 127
  %v2212 = vpop.permute.xlu0 %2211
  %v2213 = vrot.slane %v2210, 4
  %v2214 = vrot.slane %v2212, 4
  %v2215 = vsel %vm221, %v2213, %v2214
  %v2216 = vsel %vm223, %v2210, %v2215
  %v2217 = vsel %vm223, %v2212, %v2214
  %2220 = vst [vmem:[#allocation3 + $0x84] sm:$0xff] %v2216
  %2221 = vst [vmem:[#allocation3 + $0x8c] sm:$0xf] %v2217
  %v2223 = vunpack.c.l.b16 %v2205
  %v2224 = vpack.c.b16 %v2223, %v2174
  %2225 = vrot.lane.b32.xlu0 %v2196, 127
  %v2226 = vpop.permute.xlu0 %2225
  %2227 = vrot.lane.b32.xlu0 %v2224, 127
  %v2228 = vpop.permute.xlu0 %2227
  %v2229 = vrot.slane %v2226, 4
  %v2230 = vrot.slane %v2228, 4
  %v2231 = vsel %vm221, %v2229, %v2230
  %v2232 = vsel %vm223, %v2226, %v2231
  %v2233 = vsel %vm223, %v2228, %v2230
  %2236 = vst [vmem:[#allocation4 + $0x84] sm:$0xff] %v2232
  %2237 = vst [vmem:[#allocation4 + $0x8c] sm:$0xf] %v2233
  %v2238 = vld [vmem:[%s1645 + $0x8] sm:$0xff]
  %v2239 = vld [vmem:[%s1645 + $0x10] sm:$0xff]
  %v2240 = vld [vmem:[%s1645 + $0x18] sm:$0xff]
  %v2241 = vld [vmem:[%s1645 + $0x20] sm:$0xff]
  %v2242 = vpack.c.bf16 %v2238, %v2238
  %v2243 = vpack.c.bf16 %v2239, %v2239
  %v2244 = vpack.c.bf16 %v2240, %v2240
  %v2245 = vpack.c.bf16 %v2241, %v2241
  %v2246 = vunpack.c.l.bf16 %v2242
  %v2247 = vunpack.c.l.bf16 %v2243
  %v2248 = vunpack.c.l.bf16 %v2244
  %v2249 = vunpack.c.l.bf16 %v2245
  %v2250 = vsub.f32 %v2238, %v2246
  %v2251 = vsub.f32 %v2239, %v2247
  %v2252 = vsub.f32 %v2240, %v2248
  %v2253 = vsub.f32 %v2241, %v2249
  %v2254 = vpack.c.bf16 %v2250, %v2250
  %v2255 = vpack.c.bf16 %v2251, %v2251
  %v2256 = vpack.c.bf16 %v2252, %v2252
  %v2257 = vpack.c.bf16 %v2253, %v2253
  %v2262 = vunpack.c.l.b16 %v2242
  %v2263 = vunpack.c.l.b16 %v2243
  %v2264 = vunpack.c.l.b16 %v2244
  %v2265 = vunpack.c.l.b16 %v2245
  %v2266 = vpack.c.b16 %v2263, %v2262
  %v2267 = vpack.c.b16 %v2265, %v2264
  %2268 = vrot.lane.b32.xlu0 %v2266, 105
  %v2269 = vpop.permute.xlu0 %2268
  %2270 = vrot.lane.b32.xlu0 %v2267, 105
  %v2271 = vpop.permute.xlu0 %2270
  %v2272 = vrot.slane %v2269, 4
  %v2273 = vrot.slane %v2271, 4
  %v2274 = vsel %vm221, %v2272, %v2273
  %v2275 = vsel %vm1923, %v2269, %v2274
  %v2276 = vsel %vm1923, %v2271, %v2273
  %2279 = vst [vmem:[#allocation3 + $0x9c] sm:$0xff] %v2275
  %2280 = vst [vmem:[#allocation3 + $0xa4] sm:$0xf] %v2276
  %v2285 = vunpack.c.l.b16 %v2254
  %v2286 = vunpack.c.l.b16 %v2255
  %v2287 = vunpack.c.l.b16 %v2256
  %v2288 = vunpack.c.l.b16 %v2257
  %v2289 = vpack.c.b16 %v2286, %v2285
  %v2290 = vpack.c.b16 %v2288, %v2287
  %2291 = vrot.lane.b32.xlu0 %v2289, 105
  %v2292 = vpop.permute.xlu0 %2291
  %2293 = vrot.lane.b32.xlu0 %v2290, 105
  %v2294 = vpop.permute.xlu0 %2293
  %v2295 = vrot.slane %v2292, 4
  %v2296 = vrot.slane %v2294, 4
  %v2297 = vsel %vm221, %v2295, %v2296
  %v2298 = vsel %vm1923, %v2292, %v2297
  %v2299 = vsel %vm1923, %v2294, %v2296
  %2302 = vst [vmem:[#allocation4 + $0x9c] sm:$0xff] %v2298
  %2303 = vst [vmem:[#allocation4 + $0xa4] sm:$0xf] %v2299
  %2304 = vrot.lane.b32.xlu0 %v2266, 104
  %v2305 = vpop.permute.xlu0 %2304
  %2306 = vrot.lane.b32.xlu0 %v2267, 104
  %v2307 = vpop.permute.xlu0 %2306
  %v2308 = vrot.slane %v2305, 4
  %v2309 = vrot.slane %v2307, 4
  %v2310 = vsel %vm221, %v2308, %v2309
  %v2311 = vsel %vm332, %v2305, %v2310
  %v2312 = vsel %vm332, %v2307, %v2309
  %2315 = vst [vmem:[#allocation3 + $0xb4] sm:$0xff] %v2311
  %2316 = vst [vmem:[#allocation3 + $0xbc] sm:$0xf] %v2312
  %2317 = vrot.lane.b32.xlu0 %v2289, 104
  %v2318 = vpop.permute.xlu0 %2317
  %2319 = vrot.lane.b32.xlu0 %v2290, 104
  %v2320 = vpop.permute.xlu0 %2319
  %v2321 = vrot.slane %v2318, 4
  %v2322 = vrot.slane %v2320, 4
  %v2323 = vsel %vm221, %v2321, %v2322
  %v2324 = vsel %vm332, %v2318, %v2323
  %v2325 = vsel %vm332, %v2320, %v2322
  %2328 = vst [vmem:[#allocation4 + $0xb4] sm:$0xff] %v2324
  %2329 = vst [vmem:[#allocation4 + $0xbc] sm:$0xf] %v2325
  %2330 = vrot.lane.b32.xlu0 %v2266, 103
  %v2331 = vpop.permute.xlu0 %2330
  %2332 = vrot.lane.b32.xlu0 %v2267, 103
  %v2333 = vpop.permute.xlu0 %2332
  %v2334 = vrot.slane %v2331, 4
  %v2335 = vrot.slane %v2333, 4
  %v2336 = vsel %vm221, %v2334, %v2335
  %v2337 = vsel %vm371, %v2331, %v2336
  %v2338 = vsel %vm371, %v2333, %v2335
  %2341 = vst [vmem:[#allocation3 + $0xcc] sm:$0xff] %v2337
  %2342 = vst [vmem:[#allocation3 + $0xd4] sm:$0xf] %v2338
  %2343 = vrot.lane.b32.xlu0 %v2289, 103
  %v2344 = vpop.permute.xlu0 %2343
  %2345 = vrot.lane.b32.xlu0 %v2290, 103
  %v2346 = vpop.permute.xlu0 %2345
  %v2347 = vrot.slane %v2344, 4
  %v2348 = vrot.slane %v2346, 4
  %v2349 = vsel %vm221, %v2347, %v2348
  %v2350 = vsel %vm371, %v2344, %v2349
  %v2351 = vsel %vm371, %v2346, %v2348
  %2354 = vst [vmem:[#allocation4 + $0xcc] sm:$0xff] %v2350
  %2355 = vst [vmem:[#allocation4 + $0xd4] sm:$0xf] %v2351
  %v2356 = vld [vmem:[%s4] sm:$0xff]
  %v2357 = vpack.c.bf16 %v2356, %v2356
  %v2358 = vunpack.c.l.bf16 %v2357
  %v2359 = vsub.f32 %v2356, %v2358
  %v2360 = vpack.c.bf16 %v2359, %v2359
  %v2361 = vld [vmem:[#allocation3] sm:$0xff]
  %v2362 = vld [vmem:[#allocation3 + $0x8] sm:$0xff]
  %v2363 = vld [vmem:[#allocation3 + $0x10] sm:$0xff]
  %v2364 = vld [vmem:[#allocation3 + $0x18] sm:$0xff]
  %v2365 = vld [vmem:[#allocation3 + $0x20] sm:$0xff]
  %v2366 = vld [vmem:[#allocation3 + $0x28] sm:$0xff]
  %v2367 = vld [vmem:[#allocation3 + $0x30] sm:$0xff]
  %v2368 = vld [vmem:[#allocation3 + $0x38] sm:$0xff]
  %v2369 = vld [vmem:[#allocation3 + $0x40] sm:$0xff]
  %v2370 = vld [vmem:[#allocation3 + $0x48] sm:$0xff]
  %v2371 = vld [vmem:[#allocation3 + $0x50] sm:$0xff]
  %v2372 = vld [vmem:[#allocation3 + $0x58] sm:$0xff]
  %v2373 = vld [vmem:[#allocation3 + $0x60] sm:$0xff]
  %v2374 = vld [vmem:[#allocation3 + $0x68] sm:$0xff]
  %v2375 = vld [vmem:[#allocation3 + $0x70] sm:$0xff]
  %v2376 = vld [vmem:[#allocation3 + $0x78] sm:$0xff]
  %v2377 = vld [vmem:[#allocation3 + $0x80] sm:$0xff]
  %v2378 = vld [vmem:[#allocation3 + $0x88] sm:$0xff]
  %v2379 = vld [vmem:[#allocation3 + $0x90] sm:$0xff]
  %v2380 = vld [vmem:[#allocation3 + $0x98] sm:$0xff]
  %v2381 = vld [vmem:[#allocation3 + $0xa0] sm:$0xff]
  %v2382 = vld [vmem:[#allocation3 + $0xa8] sm:$0xff]
  %v2383 = vld [vmem:[#allocation3 + $0xb0] sm:$0xff]
  %v2384 = vld [vmem:[#allocation3 + $0xb8] sm:$0xff]
  %v2385 = vld [vmem:[#allocation3 + $0xc0] sm:$0xff]
  %v2386 = vld [vmem:[#allocation3 + $0xc8] sm:$0xff]
  %v2387 = vld [vmem:[#allocation3 + $0xd0] sm:$0xff]
  %v2388 = vld [vmem:[#allocation4] sm:$0xff]
  %v2389 = vld [vmem:[#allocation4 + $0x8] sm:$0xff]
  %v2390 = vld [vmem:[#allocation4 + $0x10] sm:$0xff]
  %v2391 = vld [vmem:[#allocation4 + $0x18] sm:$0xff]
  %v2392 = vld [vmem:[#allocation4 + $0x20] sm:$0xff]
  %v2393 = vld [vmem:[#allocation4 + $0x28] sm:$0xff]
  %v2394 = vld [vmem:[#allocation4 + $0x30] sm:$0xff]
  %v2395 = vld [vmem:[#allocation4 + $0x38] sm:$0xff]
  %v2396 = vld [vmem:[#allocation4 + $0x40] sm:$0xff]
  %v2397 = vld [vmem:[#allocation4 + $0x48] sm:$0xff]
  %v2398 = vld [vmem:[#allocation4 + $0x50] sm:$0xff]
  %v2399 = vld [vmem:[#allocation4 + $0x58] sm:$0xff]
  %v2400 = vld [vmem:[#allocation4 + $0x60] sm:$0xff]
  %v2401 = vld [vmem:[#allocation4 + $0x68] sm:$0xff]
  %v2402 = vld [vmem:[#allocation4 + $0x70] sm:$0xff]
  %v2403 = vld [vmem:[#allocation4 + $0x78] sm:$0xff]
  %v2404 = vld [vmem:[#allocation4 + $0x80] sm:$0xff]
  %v2405 = vld [vmem:[#allocation4 + $0x88] sm:$0xff]
  %v2406 = vld [vmem:[#allocation4 + $0x90] sm:$0xff]
  %v2407 = vld [vmem:[#allocation4 + $0x98] sm:$0xff]
  %v2408 = vld [vmem:[#allocation4 + $0xa0] sm:$0xff]
  %v2409 = vld [vmem:[#allocation4 + $0xa8] sm:$0xff]
  %v2410 = vld [vmem:[#allocation4 + $0xb0] sm:$0xff]
  %v2411 = vld [vmem:[#allocation4 + $0xb8] sm:$0xff]
  %v2412 = vld [vmem:[#allocation4 + $0xc0] sm:$0xff]
  %v2413 = vld [vmem:[#allocation4 + $0xc8] sm:$0xff]
  %v2414 = vld [vmem:[#allocation4 + $0xd0] sm:$0xff]
  %v2442 = vunpack.c.l.b16 %v2388
  %v2443 = vunpack.c.h.b16 %v2388
  %v2444 = vunpack.c.l.b16 %v2389
  %v2445 = vunpack.c.h.b16 %v2389
  %v2446 = vunpack.c.l.b16 %v2390
  %v2447 = vunpack.c.h.b16 %v2390
  %v2448 = vunpack.c.l.b16 %v2391
  %v2449 = vunpack.c.h.b16 %v2391
  %v2450 = vunpack.c.l.b16 %v2392
  %v2451 = vunpack.c.h.b16 %v2392
  %v2452 = vunpack.c.l.b16 %v2393
  %v2453 = vunpack.c.h.b16 %v2393
  %v2454 = vunpack.c.l.b16 %v2394
  %v2455 = vunpack.c.h.b16 %v2394
  %v2456 = vunpack.c.l.b16 %v2395
  %v2457 = vunpack.c.h.b16 %v2395
  %v2458 = vunpack.c.l.b16 %v2396
  %v2459 = vunpack.c.h.b16 %v2396
  %v2460 = vunpack.c.l.b16 %v2397
  %v2461 = vunpack.c.h.b16 %v2397
  %v2462 = vunpack.c.l.b16 %v2398
  %v2463 = vunpack.c.h.b16 %v2398
  %v2464 = vunpack.c.l.b16 %v2399
  %v2465 = vunpack.c.h.b16 %v2399
  %v2466 = vunpack.c.l.b16 %v2400
  %v2467 = vunpack.c.h.b16 %v2400
  %v2468 = vunpack.c.l.b16 %v2401
  %v2469 = vunpack.c.h.b16 %v2401
  %v2470 = vunpack.c.l.b16 %v2402
  %v2471 = vunpack.c.h.b16 %v2402
  %v2472 = vunpack.c.l.b16 %v2403
  %v2473 = vunpack.c.h.b16 %v2403
  %v2474 = vunpack.c.l.b16 %v2404
  %v2475 = vunpack.c.h.b16 %v2404
  %v2476 = vunpack.c.l.b16 %v2405
  %v2477 = vunpack.c.h.b16 %v2405
  %v2478 = vunpack.c.l.b16 %v2406
  %v2479 = vunpack.c.h.b16 %v2406
  %v2480 = vunpack.c.l.b16 %v2407
  %v2481 = vunpack.c.h.b16 %v2407
  %v2482 = vunpack.c.l.b16 %v2408
  %v2483 = vunpack.c.h.b16 %v2408
  %v2484 = vunpack.c.l.b16 %v2409
  %v2485 = vunpack.c.h.b16 %v2409
  %v2486 = vunpack.c.l.b16 %v2410
  %v2487 = vunpack.c.h.b16 %v2410
  %v2488 = vunpack.c.l.b16 %v2411
  %v2489 = vunpack.c.h.b16 %v2411
  %v2490 = vunpack.c.l.b16 %v2412
  %v2491 = vunpack.c.h.b16 %v2412
  %v2492 = vunpack.c.l.b16 %v2413
  %v2493 = vunpack.c.h.b16 %v2413
  %v2494 = vunpack.c.l.b16 %v2414
  %v2495 = vunpack.c.h.b16 %v2414
  %v2496 = vpack.c.b16 %v2448, %v2442
  %v2497 = vpack.c.b16 %v2449, %v2443
  %v2498 = vpack.c.b16 %v2450, %v2444
  %v2499 = vpack.c.b16 %v2451, %v2445
  %v2500 = vpack.c.b16 %v2452, %v2446
  %v2501 = vpack.c.b16 %v2453, %v2447
  %v2502 = vpack.c.b16 %v2460, %v2454
  %v2503 = vpack.c.b16 %v2461, %v2455
  %v2504 = vpack.c.b16 %v2462, %v2456
  %v2505 = vpack.c.b16 %v2463, %v2457
  %v2506 = vpack.c.b16 %v2464, %v2458
  %v2507 = vpack.c.b16 %v2465, %v2459
  %v2508 = vpack.c.b16 %v2472, %v2466
  %v2509 = vpack.c.b16 %v2473, %v2467
  %v2510 = vpack.c.b16 %v2474, %v2468
  %v2511 = vpack.c.b16 %v2475, %v2469
  %v2512 = vpack.c.b16 %v2476, %v2470
  %v2513 = vpack.c.b16 %v2477, %v2471
  %v2514 = vpack.c.b16 %v2484, %v2478
  %v2515 = vpack.c.b16 %v2485, %v2479
  %v2516 = vpack.c.b16 %v2486, %v2480
  %v2517 = vpack.c.b16 %v2487, %v2481
  %v2518 = vpack.c.b16 %v2488, %v2482
  %v2519 = vpack.c.b16 %v2489, %v2483
  %v2520 = vpack.c.b16 %v2490, %v2490
  %v2521 = vpack.c.b16 %v2491, %v2491
  %v2522 = vpack.c.b16 %v2492, %v2492
  %v2523 = vpack.c.b16 %v2493, %v2493
  %v2524 = vpack.c.b16 %v2494, %v2494
  %v2525 = vpack.c.b16 %v2495, %v2495
  %vm2550 = vcmask 588800
  %v2552 = vsel %vm2550, %v2357, 0
  %vm2554 = vcmask 1043456
  %v2556 = vsel %vm2554, %v2520, 0
  %v2559 = vsel %vm2554, %v2521, 0
  %v2562 = vsel %vm2554, %v2522, 0
  %v2565 = vsel %vm2554, %v2523, 0
  %v2568 = vsel %vm2554, %v2524, 0
  %v2571 = vsel %vm2554, %v2525, 0
  %2573 = vmatprep.subr.bf16.mxu0 %v2497
  %2574 = vmatpush1.bf16.msra.mxu0 %v2496
  %2575 = vmatprep.subr.bf16.mxu0 %v2503
  %2576 = vmatpush1.bf16.msra.mxu0 %v2502
  %2577 = vmatprep.subr.bf16.mxu0 %v2509
  %2578 = vmatpush1.bf16.msra.mxu0 %v2508
  %2579 = vmatprep.subr.bf16.mxu0 %v2515
  %2580 = vmatpush1.bf16.msra.mxu0 %v2514
  %2581 = vmatprep.subr.bf16.mxu0 %v2559
  %2582 = vmatpush1.bf16.msra.mxu0 %v2556
  %2583 = vmatprep.subr.bf16.mxu0 0
  %2584 = vmatpush1.bf16.msra.mxu0 0
  %2585 = vmatprep.subr.bf16.mxu0 0
  %2586 = vmatpush1.bf16.msra.mxu0 0
  %2587 = vmatprep.subr.bf16.mxu0 0
  %2588 = vmatpush1.bf16.msra.mxu0 0
  %2589 = vmatprep.subr.bf16.mxu0 0
  %2590 = vmatpush1.bf16.msra.mxu0 0
  %2591 = vmatprep.subr.bf16.mxu0 0
  %2592 = vmatpush1.bf16.msra.mxu0 0
  %2593 = vmatprep.subr.bf16.mxu0 0
  %2594 = vmatpush1.bf16.msra.mxu0 0
  %2595 = vmatprep.subr.bf16.mxu0 0
  %2596 = vmatpush1.bf16.msra.mxu0 0
  %2597 = vmatprep.subr.bf16.mxu0 0
  %2598 = vmatpush1.bf16.msra.mxu0 0
  %2599 = vmatprep.subr.bf16.mxu0 0
  %2600 = vmatpush1.bf16.msra.mxu0 0
  %2601 = vmatprep.subr.bf16.mxu0 0
  %2602 = vmatpush1.bf16.msra.mxu0 0
  %2603 = vmatprep.subr.bf16.mxu0 0
  %2604 = vmatpush1.bf16.msra.mxu0 0
  %2605 = vmatprep.mubr.bf16.mxu0 0
  %2606 = vmatmul.mubr.bf16.gmra.mrb[0].mxu0 %v2552
  %v2607 = vpop.f32.mrb[0].mxu0
  %v2608 = vadd.f32 0.0, %v2607
  %v2609 = vpop.f32.mrb[0].mxu0
  %v2610 = vadd.f32 0.0, %v2609
  %v2611 = vpop.f32.mrb[0].mxu0
  %v2612 = vpop.f32.mrb[0].mxu0
  %2613 = vdwg.mxu0
  %2614 = vmatprep.subr.bf16.mxu0 %v2499
  %2615 = vmatpush1.bf16.msra.mxu0 %v2498
  %2616 = vmatprep.subr.bf16.mxu0 %v2505
  %2617 = vmatpush1.bf16.msra.mxu0 %v2504
  %2618 = vmatprep.subr.bf16.mxu0 %v2511
  %2619 = vmatpush1.bf16.msra.mxu0 %v2510
  %2620 = vmatprep.subr.bf16.mxu0 %v2517
  %2621 = vmatpush1.bf16.msra.mxu0 %v2516
  %2622 = vmatprep.subr.bf16.mxu0 %v2565
  %2623 = vmatpush1.bf16.msra.mxu0 %v2562
  %2624 = vmatprep.subr.bf16.mxu0 0
  %2625 = vmatpush1.bf16.msra.mxu0 0
  %2626 = vmatprep.subr.bf16.mxu0 0
  %2627 = vmatpush1.bf16.msra.mxu0 0
  %2628 = vmatprep.subr.bf16.mxu0 0
  %2629 = vmatpush1.bf16.msra.mxu0 0
  %2630 = vmatprep.subr.bf16.mxu0 0
  %2631 = vmatpush1.bf16.msra.mxu0 0
  %2632 = vmatprep.subr.bf16.mxu0 0
  %2633 = vmatpush1.bf16.msra.mxu0 0
  %2634 = vmatprep.subr.bf16.mxu0 0
  %2635 = vmatpush1.bf16.msra.mxu0 0
  %2636 = vmatprep.subr.bf16.mxu0 0
  %2637 = vmatpush1.bf16.msra.mxu0 0
  %2638 = vmatprep.subr.bf16.mxu0 0
  %2639 = vmatpush1.bf16.msra.mxu0 0
  %2640 = vmatprep.subr.bf16.mxu0 0
  %2641 = vmatpush1.bf16.msra.mxu0 0
  %2642 = vmatprep.subr.bf16.mxu0 0
  %2643 = vmatpush1.bf16.msra.mxu0 0
  %2644 = vmatprep.subr.bf16.mxu0 0
  %2645 = vmatpush1.bf16.msra.mxu0 0
  %2646 = vmatprep.mubr.bf16.mxu0 0
  %2647 = vmatmul.mubr.bf16.gmra.mrb[0].mxu0 %v2552
  %v2648 = vpop.f32.mrb[0].mxu0
  %v2649 = vadd.f32 0.0, %v2648
  %v2650 = vpop.f32.mrb[0].mxu0
  %v2651 = vadd.f32 0.0, %v2650
  %v2652 = vpop.f32.mrb[0].mxu0
  %v2653 = vpop.f32.mrb[0].mxu0
  %2654 = vdwg.mxu0
  %2655 = vmatprep.subr.bf16.mxu0 %v2501
  %2656 = vmatpush1.bf16.msra.mxu0 %v2500
  %2657 = vmatprep.subr.bf16.mxu0 %v2507
  %2658 = vmatpush1.bf16.msra.mxu0 %v2506
  %2659 = vmatprep.subr.bf16.mxu0 %v2513
  %2660 = vmatpush1.bf16.msra.mxu0 %v2512
  %2661 = vmatprep.subr.bf16.mxu0 %v2519
  %2662 = vmatpush1.bf16.msra.mxu0 %v2518
  %2663 = vmatprep.subr.bf16.mxu0 %v2571
  %2664 = vmatpush1.bf16.msra.mxu0 %v2568
  %2665 = vmatprep.subr.bf16.mxu0 0
  %2666 = vmatpush1.bf16.msra.mxu0 0
  %2667 = vmatprep.subr.bf16.mxu0 0
  %2668 = vmatpush1.bf16.msra.mxu0 0
  %2669 = vmatprep.subr.bf16.mxu0 0
  %2670 = vmatpush1.bf16.msra.mxu0 0
  %2671 = vmatprep.subr.bf16.mxu0 0
  %2672 = vmatpush1.bf16.msra.mxu0 0
  %2673 = vmatprep.subr.bf16.mxu0 0
  %2674 = vmatpush1.bf16.msra.mxu0 0
  %2675 = vmatprep.subr.bf16.mxu0 0
  %2676 = vmatpush1.bf16.msra.mxu0 0
  %2677 = vmatprep.subr.bf16.mxu0 0
  %2678 = vmatpush1.bf16.msra.mxu0 0
  %2679 = vmatprep.subr.bf16.mxu0 0
  %2680 = vmatpush1.bf16.msra.mxu0 0
  %2681 = vmatprep.subr.bf16.mxu0 0
  %2682 = vmatpush1.bf16.msra.mxu0 0
  %2683 = vmatprep.subr.bf16.mxu0 0
  %2684 = vmatpush1.bf16.msra.mxu0 0
  %2685 = vmatprep.subr.bf16.mxu0 0
  %2686 = vmatpush1.bf16.msra.mxu0 0
  %2687 = vmatprep.mubr.bf16.mxu0 0
  %2688 = vmatmul.mubr.bf16.gmra.mrb[0].mxu0 %v2552
  %v2689 = vpop.f32.mrb[0].mxu0
  %v2690 = vadd.f32 0.0, %v2689
  %v2691 = vpop.f32.mrb[0].mxu0
  %v2692 = vadd.f32 0.0, %v2691
  %v2693 = vpop.f32.mrb[0].mxu0
  %v2694 = vpop.f32.mrb[0].mxu0
  %2695 = vdwg.mxu0
  %v2723 = vunpack.c.l.b16 %v2361
  %v2724 = vunpack.c.h.b16 %v2361
  %v2725 = vunpack.c.l.b16 %v2362
  %v2726 = vunpack.c.h.b16 %v2362
  %v2727 = vunpack.c.l.b16 %v2363
  %v2728 = vunpack.c.h.b16 %v2363
  %v2729 = vunpack.c.l.b16 %v2364
  %v2730 = vunpack.c.h.b16 %v2364
  %v2731 = vunpack.c.l.b16 %v2365
  %v2732 = vunpack.c.h.b16 %v2365
  %v2733 = vunpack.c.l.b16 %v2366
  %v2734 = vunpack.c.h.b16 %v2366
  %v2735 = vunpack.c.l.b16 %v2367
  %v2736 = vunpack.c.h.b16 %v2367
  %v2737 = vunpack.c.l.b16 %v2368
  %v2738 = vunpack.c.h.b16 %v2368
  %v2739 = vunpack.c.l.b16 %v2369
  %v2740 = vunpack.c.h.b16 %v2369
  %v2741 = vunpack.c.l.b16 %v2370
  %v2742 = vunpack.c.h.b16 %v2370
  %v2743 = vunpack.c.l.b16 %v2371
  %v2744 = vunpack.c.h.b16 %v2371
  %v2745 = vunpack.c.l.b16 %v2372
  %v2746 = vunpack.c.h.b16 %v2372
  %v2747 = vunpack.c.l.b16 %v2373
  %v2748 = vunpack.c.h.b16 %v2373
  %v2749 = vunpack.c.l.b16 %v2374
  %v2750 = vunpack.c.h.b16 %v2374
  %v2751 = vunpack.c.l.b16 %v2375
  %v2752 = vunpack.c.h.b16 %v2375
  %v2753 = vunpack.c.l.b16 %v2376
  %v2754 = vunpack.c.h.b16 %v2376
  %v2755 = vunpack.c.l.b16 %v2377
  %v2756 = vunpack.c.h.b16 %v2377
  %v2757 = vunpack.c.l.b16 %v2378
  %v2758 = vunpack.c.h.b16 %v2378
  %v2759 = vunpack.c.l.b16 %v2379
  %v2760 = vunpack.c.h.b16 %v2379
  %v2761 = vunpack.c.l.b16 %v2380
  %v2762 = vunpack.c.h.b16 %v2380
  %v2763 = vunpack.c.l.b16 %v2381
  %v2764 = vunpack.c.h.b16 %v2381
  %v2765 = vunpack.c.l.b16 %v2382
  %v2766 = vunpack.c.h.b16 %v2382
  %v2767 = vunpack.c.l.b16 %v2383
  %v2768 = vunpack.c.h.b16 %v2383
  %v2769 = vunpack.c.l.b16 %v2384
  %v2770 = vunpack.c.h.b16 %v2384
  %v2771 = vunpack.c.l.b16 %v2385
  %v2772 = vunpack.c.h.b16 %v2385
  %v2773 = vunpack.c.l.b16 %v2386
  %v2774 = vunpack.c.h.b16 %v2386
  %v2775 = vunpack.c.l.b16 %v2387
  %v2776 = vunpack.c.h.b16 %v2387
  %v2777 = vpack.c.b16 %v2729, %v2723
  %v2778 = vpack.c.b16 %v2730, %v2724
  %v2779 = vpack.c.b16 %v2731, %v2725
  %v2780 = vpack.c.b16 %v2732, %v2726
  %v2781 = vpack.c.b16 %v2733, %v2727
  %v2782 = vpack.c.b16 %v2734, %v2728
  %v2783 = vpack.c.b16 %v2741, %v2735
  %v2784 = vpack.c.b16 %v2742, %v2736
  %v2785 = vpack.c.b16 %v2743, %v2737
  %v2786 = vpack.c.b16 %v2744, %v2738
  %v2787 = vpack.c.b16 %v2745, %v2739
  %v2788 = vpack.c.b16 %v2746, %v2740
  %v2789 = vpack.c.b16 %v2753, %v2747
  %v2790 = vpack.c.b16 %v2754, %v2748
  %v2791 = vpack.c.b16 %v2755, %v2749
  %v2792 = vpack.c.b16 %v2756, %v2750
  %v2793 = vpack.c.b16 %v2757, %v2751
  %v2794 = vpack.c.b16 %v2758, %v2752
  %v2795 = vpack.c.b16 %v2765, %v2759
  %v2796 = vpack.c.b16 %v2766, %v2760
  %v2797 = vpack.c.b16 %v2767, %v2761
  %v2798 = vpack.c.b16 %v2768, %v2762
  %v2799 = vpack.c.b16 %v2769, %v2763
  %v2800 = vpack.c.b16 %v2770, %v2764
  %v2801 = vpack.c.b16 %v2771, %v2771
  %v2802 = vpack.c.b16 %v2772, %v2772
  %v2803 = vpack.c.b16 %v2773, %v2773
  %v2804 = vpack.c.b16 %v2774, %v2774
  %v2805 = vpack.c.b16 %v2775, %v2775
  %v2806 = vpack.c.b16 %v2776, %v2776
  %v2832 = vsel %vm2554, %v2801, 0
  %v2835 = vsel %vm2554, %v2802, 0
  %v2838 = vsel %vm2554, %v2803, 0
  %v2841 = vsel %vm2554, %v2804, 0
  %v2844 = vsel %vm2554, %v2805, 0
  %v2847 = vsel %vm2554, %v2806, 0
  %2849 = vmatprep.subr.bf16.mxu0 %v2778
  %2850 = vmatpush1.bf16.msra.mxu0 %v2777
  %2851 = vmatprep.subr.bf16.mxu0 %v2784
  %2852 = vmatpush1.bf16.msra.mxu0 %v2783
  %2853 = vmatprep.subr.bf16.mxu0 %v2790
  %2854 = vmatpush1.bf16.msra.mxu0 %v2789
  %2855 = vmatprep.subr.bf16.mxu0 %v2796
  %2856 = vmatpush1.bf16.msra.mxu0 %v2795
  %2857 = vmatprep.subr.bf16.mxu0 %v2835
  %2858 = vmatpush1.bf16.msra.mxu0 %v2832
  %2859 = vmatprep.subr.bf16.mxu0 0
  %2860 = vmatpush1.bf16.msra.mxu0 0
  %2861 = vmatprep.subr.bf16.mxu0 0
  %2862 = vmatpush1.bf16.msra.mxu0 0
  %2863 = vmatprep.subr.bf16.mxu0 0
  %2864 = vmatpush1.bf16.msra.mxu0 0
  %2865 = vmatprep.subr.bf16.mxu0 0
  %2866 = vmatpush1.bf16.msra.mxu0 0
  %2867 = vmatprep.subr.bf16.mxu0 0
  %2868 = vmatpush1.bf16.msra.mxu0 0
  %2869 = vmatprep.subr.bf16.mxu0 0
  %2870 = vmatpush1.bf16.msra.mxu0 0
  %2871 = vmatprep.subr.bf16.mxu0 0
  %2872 = vmatpush1.bf16.msra.mxu0 0
  %2873 = vmatprep.subr.bf16.mxu0 0
  %2874 = vmatpush1.bf16.msra.mxu0 0
  %2875 = vmatprep.subr.bf16.mxu0 0
  %2876 = vmatpush1.bf16.msra.mxu0 0
  %2877 = vmatprep.subr.bf16.mxu0 0
  %2878 = vmatpush1.bf16.msra.mxu0 0
  %2879 = vmatprep.subr.bf16.mxu0 0
  %2880 = vmatpush1.bf16.msra.mxu0 0
  %2881 = vmatprep.mubr.bf16.mxu0 0
  %2882 = vmatmul.mubr.bf16.gmra.mrb[0].mxu0 %v2552
  %v2883 = vpop.f32.mrb[0].mxu0
  %v2884 = vadd.f32 %v2608, %v2883
  %v2885 = vpop.f32.mrb[0].mxu0
  %v2886 = vadd.f32 %v2610, %v2885
  %v2887 = vpop.f32.mrb[0].mxu0
  %v2888 = vpop.f32.mrb[0].mxu0
  %2889 = vdwg.mxu0
  %2890 = vmatprep.subr.bf16.mxu0 %v2780
  %2891 = vmatpush1.bf16.msra.mxu0 %v2779
  %2892 = vmatprep.subr.bf16.mxu0 %v2786
  %2893 = vmatpush1.bf16.msra.mxu0 %v2785
  %2894 = vmatprep.subr.bf16.mxu0 %v2792
  %2895 = vmatpush1.bf16.msra.mxu0 %v2791
  %2896 = vmatprep.subr.bf16.mxu0 %v2798
  %2897 = vmatpush1.bf16.msra.mxu0 %v2797
  %2898 = vmatprep.subr.bf16.mxu0 %v2841
  %2899 = vmatpush1.bf16.msra.mxu0 %v2838
  %2900 = vmatprep.subr.bf16.mxu0 0
  %2901 = vmatpush1.bf16.msra.mxu0 0
  %2902 = vmatprep.subr.bf16.mxu0 0
  %2903 = vmatpush1.bf16.msra.mxu0 0
  %2904 = vmatprep.subr.bf16.mxu0 0
  %2905 = vmatpush1.bf16.msra.mxu0 0
  %2906 = vmatprep.subr.bf16.mxu0 0
  %2907 = vmatpush1.bf16.msra.mxu0 0
  %2908 = vmatprep.subr.bf16.mxu0 0
  %2909 = vmatpush1.bf16.msra.mxu0 0
  %2910 = vmatprep.subr.bf16.mxu0 0
  %2911 = vmatpush1.bf16.msra.mxu0 0
  %2912 = vmatprep.subr.bf16.mxu0 0
  %2913 = vmatpush1.bf16.msra.mxu0 0
  %2914 = vmatprep.subr.bf16.mxu0 0
  %2915 = vmatpush1.bf16.msra.mxu0 0
  %2916 = vmatprep.subr.bf16.mxu0 0
  %2917 = vmatpush1.bf16.msra.mxu0 0
  %2918 = vmatprep.subr.bf16.mxu0 0
  %2919 = vmatpush1.bf16.msra.mxu0 0
  %2920 = vmatprep.subr.bf16.mxu0 0
  %2921 = vmatpush1.bf16.msra.mxu0 0
  %2922 = vmatprep.mubr.bf16.mxu0 0
  %2923 = vmatmul.mubr.bf16.gmra.mrb[0].mxu0 %v2552
  %v2924 = vpop.f32.mrb[0].mxu0
  %v2925 = vadd.f32 %v2649, %v2924
  %v2926 = vpop.f32.mrb[0].mxu0
  %v2927 = vadd.f32 %v2651, %v2926
  %v2928 = vpop.f32.mrb[0].mxu0
  %v2929 = vpop.f32.mrb[0].mxu0
  %2930 = vdwg.mxu0
  %2931 = vmatprep.subr.bf16.mxu0 %v2782
  %2932 = vmatpush1.bf16.msra.mxu0 %v2781
  %2933 = vmatprep.subr.bf16.mxu0 %v2788
  %2934 = vmatpush1.bf16.msra.mxu0 %v2787
  %2935 = vmatprep.subr.bf16.mxu0 %v2794
  %2936 = vmatpush1.bf16.msra.mxu0 %v2793
  %2937 = vmatprep.subr.bf16.mxu0 %v2800
  %2938 = vmatpush1.bf16.msra.mxu0 %v2799
  %2939 = vmatprep.subr.bf16.mxu0 %v2847
  %2940 = vmatpush1.bf16.msra.mxu0 %v2844
  %2941 = vmatprep.subr.bf16.mxu0 0
  %2942 = vmatpush1.bf16.msra.mxu0 0
  %2943 = vmatprep.subr.bf16.mxu0 0
  %2944 = vmatpush1.bf16.msra.mxu0 0
  %2945 = vmatprep.subr.bf16.mxu0 0
  %2946 = vmatpush1.bf16.msra.mxu0 0
  %2947 = vmatprep.subr.bf16.mxu0 0
  %2948 = vmatpush1.bf16.msra.mxu0 0
  %2949 = vmatprep.subr.bf16.mxu0 0
  %2950 = vmatpush1.bf16.msra.mxu0 0
  %2951 = vmatprep.subr.bf16.mxu0 0
  %2952 = vmatpush1.bf16.msra.mxu0 0
  %2953 = vmatprep.subr.bf16.mxu0 0
  %2954 = vmatpush1.bf16.msra.mxu0 0
  %2955 = vmatprep.subr.bf16.mxu0 0
  %2956 = vmatpush1.bf16.msra.mxu0 0
  %2957 = vmatprep.subr.bf16.mxu0 0
  %2958 = vmatpush1.bf16.msra.mxu0 0
  %2959 = vmatprep.subr.bf16.mxu0 0
  %2960 = vmatpush1.bf16.msra.mxu0 0
  %2961 = vmatprep.subr.bf16.mxu0 0
  %2962 = vmatpush1.bf16.msra.mxu0 0
  %2963 = vmatprep.mubr.bf16.mxu0 0
  %2964 = vmatmul.mubr.bf16.gmra.mrb[0].mxu0 %v2552
  %v2965 = vpop.f32.mrb[0].mxu0
  %v2966 = vadd.f32 %v2690, %v2965
  %v2967 = vpop.f32.mrb[0].mxu0
  %v2968 = vadd.f32 %v2692, %v2967
  %v2969 = vpop.f32.mrb[0].mxu0
  %v2970 = vpop.f32.mrb[0].mxu0
  %2971 = vdwg.mxu0
  %v2973 = vsel %vm2550, %v2360, 0
  %2975 = vmatprep.subr.bf16.mxu0 %v2778
  %2976 = vmatpush1.bf16.msra.mxu0 %v2777
  %2977 = vmatprep.subr.bf16.mxu0 %v2784
  %2978 = vmatpush1.bf16.msra.mxu0 %v2783
  %2979 = vmatprep.subr.bf16.mxu0 %v2790
  %2980 = vmatpush1.bf16.msra.mxu0 %v2789
  %2981 = vmatprep.subr.bf16.mxu0 %v2796
  %2982 = vmatpush1.bf16.msra.mxu0 %v2795
  %2983 = vmatprep.subr.bf16.mxu0 %v2835
  %2984 = vmatpush1.bf16.msra.mxu0 %v2832
  %2985 = vmatprep.subr.bf16.mxu0 0
  %2986 = vmatpush1.bf16.msra.mxu0 0
  %2987 = vmatprep.subr.bf16.mxu0 0
  %2988 = vmatpush1.bf16.msra.mxu0 0
  %2989 = vmatprep.subr.bf16.mxu0 0
  %2990 = vmatpush1.bf16.msra.mxu0 0
  %2991 = vmatprep.subr.bf16.mxu0 0
  %2992 = vmatpush1.bf16.msra.mxu0 0
  %2993 = vmatprep.subr.bf16.mxu0 0
  %2994 = vmatpush1.bf16.msra.mxu0 0
  %2995 = vmatprep.subr.bf16.mxu0 0
  %2996 = vmatpush1.bf16.msra.mxu0 0
  %2997 = vmatprep.subr.bf16.mxu0 0
  %2998 = vmatpush1.bf16.msra.mxu0 0
  %2999 = vmatprep.subr.bf16.mxu0 0
  %3000 = vmatpush1.bf16.msra.mxu0 0
  %3001 = vmatprep.subr.bf16.mxu0 0
  %3002 = vmatpush1.bf16.msra.mxu0 0
  %3003 = vmatprep.subr.bf16.mxu0 0
  %3004 = vmatpush1.bf16.msra.mxu0 0
  %3005 = vmatprep.subr.bf16.mxu0 0
  %3006 = vmatpush1.bf16.msra.mxu0 0
  %3007 = vmatprep.mubr.bf16.mxu0 0
  %3008 = vmatmul.mubr.bf16.gmra.mrb[0].mxu0 %v2973
  %v3009 = vpop.f32.mrb[0].mxu0
  %v3010 = vadd.f32 0.0, %v3009
  %v3011 = vpop.f32.mrb[0].mxu0
  %v3012 = vadd.f32 0.0, %v3011
  %v3013 = vpop.f32.mrb[0].mxu0
  %v3014 = vpop.f32.mrb[0].mxu0
  %3015 = vdwg.mxu0
  %3016 = vmatprep.subr.bf16.mxu0 %v2780
  %3017 = vmatpush1.bf16.msra.mxu0 %v2779
  %3018 = vmatprep.subr.bf16.mxu0 %v2786
  %3019 = vmatpush1.bf16.msra.mxu0 %v2785
  %3020 = vmatprep.subr.bf16.mxu0 %v2792
  %3021 = vmatpush1.bf16.msra.mxu0 %v2791
  %3022 = vmatprep.subr.bf16.mxu0 %v2798
  %3023 = vmatpush1.bf16.msra.mxu0 %v2797
  %3024 = vmatprep.subr.bf16.mxu0 %v2841
  %3025 = vmatpush1.bf16.msra.mxu0 %v2838
  %3026 = vmatprep.subr.bf16.mxu0 0
  %3027 = vmatpush1.bf16.msra.mxu0 0
  %3028 = vmatprep.subr.bf16.mxu0 0
  %3029 = vmatpush1.bf16.msra.mxu0 0
  %3030 = vmatprep.subr.bf16.mxu0 0
  %3031 = vmatpush1.bf16.msra.mxu0 0
  %3032 = vmatprep.subr.bf16.mxu0 0
  %3033 = vmatpush1.bf16.msra.mxu0 0
  %3034 = vmatprep.subr.bf16.mxu0 0
  %3035 = vmatpush1.bf16.msra.mxu0 0
  %3036 = vmatprep.subr.bf16.mxu0 0
  %3037 = vmatpush1.bf16.msra.mxu0 0
  %3038 = vmatprep.subr.bf16.mxu0 0
  %3039 = vmatpush1.bf16.msra.mxu0 0
  %3040 = vmatprep.subr.bf16.mxu0 0
  %3041 = vmatpush1.bf16.msra.mxu0 0
  %3042 = vmatprep.subr.bf16.mxu0 0
  %3043 = vmatpush1.bf16.msra.mxu0 0
  %3044 = vmatprep.subr.bf16.mxu0 0
  %3045 = vmatpush1.bf16.msra.mxu0 0
  %3046 = vmatprep.subr.bf16.mxu0 0
  %3047 = vmatpush1.bf16.msra.mxu0 0
  %3048 = vmatprep.mubr.bf16.mxu0 0
  %3049 = vmatmul.mubr.bf16.gmra.mrb[0].mxu0 %v2973
  %v3050 = vpop.f32.mrb[0].mxu0
  %v3051 = vadd.f32 0.0, %v3050
  %v3052 = vpop.f32.mrb[0].mxu0
  %v3053 = vadd.f32 0.0, %v3052
  %v3054 = vpop.f32.mrb[0].mxu0
  %v3055 = vpop.f32.mrb[0].mxu0
  %3056 = vdwg.mxu0
  %3057 = vmatprep.subr.bf16.mxu0 %v2782
  %3058 = vmatpush1.bf16.msra.mxu0 %v2781
  %3059 = vmatprep.subr.bf16.mxu0 %v2788
  %3060 = vmatpush1.bf16.msra.mxu0 %v2787
  %3061 = vmatprep.subr.bf16.mxu0 %v2794
  %3062 = vmatpush1.bf16.msra.mxu0 %v2793
  %3063 = vmatprep.subr.bf16.mxu0 %v2800
  %3064 = vmatpush1.bf16.msra.mxu0 %v2799
  %3065 = vmatprep.subr.bf16.mxu0 %v2847
  %3066 = vmatpush1.bf16.msra.mxu0 %v2844
  %3067 = vmatprep.subr.bf16.mxu0 0
  %3068 = vmatpush1.bf16.msra.mxu0 0
  %3069 = vmatprep.subr.bf16.mxu0 0
  %3070 = vmatpush1.bf16.msra.mxu0 0
  %3071 = vmatprep.subr.bf16.mxu0 0
  %3072 = vmatpush1.bf16.msra.mxu0 0
  %3073 = vmatprep.subr.bf16.mxu0 0
  %3074 = vmatpush1.bf16.msra.mxu0 0
  %3075 = vmatprep.subr.bf16.mxu0 0
  %3076 = vmatpush1.bf16.msra.mxu0 0
  %3077 = vmatprep.subr.bf16.mxu0 0
  %3078 = vmatpush1.bf16.msra.mxu0 0
  %3079 = vmatprep.subr.bf16.mxu0 0
  %3080 = vmatpush1.bf16.msra.mxu0 0
  %3081 = vmatprep.subr.bf16.mxu0 0
  %3082 = vmatpush1.bf16.msra.mxu0 0
  %3083 = vmatprep.subr.bf16.mxu0 0
  %3084 = vmatpush1.bf16.msra.mxu0 0
  %3085 = vmatprep.subr.bf16.mxu0 0
  %3086 = vmatpush1.bf16.msra.mxu0 0
  %3087 = vmatprep.subr.bf16.mxu0 0
  %3088 = vmatpush1.bf16.msra.mxu0 0
  %3089 = vmatprep.mubr.bf16.mxu0 0
  %3090 = vmatmul.mubr.bf16.gmra.mrb[0].mxu0 %v2973
  %v3091 = vpop.f32.mrb[0].mxu0
  %v3092 = vadd.f32 0.0, %v3091
  %v3093 = vpop.f32.mrb[0].mxu0
  %v3094 = vadd.f32 0.0, %v3093
  %v3095 = vpop.f32.mrb[0].mxu0
  %v3096 = vpop.f32.mrb[0].mxu0
  %3097 = vdwg.mxu0
  %v3098 = vadd.f32 %v2884, %v3010
  %v3099 = vadd.f32 %v2886, %v3012
  %v3100 = vadd.f32 %v2925, %v3051
  %v3101 = vadd.f32 %v2927, %v3053
  %v3102 = vadd.f32 %v2966, %v3092
  %v3103 = vadd.f32 %v2968, %v3094
  %v3104 = vmul.f32 %v3098, %v142
  %v3105 = vmul.f32 %v3099, %v143
  %v3106 = vmul.f32 %v3100, %v144
  %v3107 = vmul.f32 %v3101, %v145
  %v3108 = vmul.f32 %v3102, %v146
  %v3109 = vmul.f32 %v3103, %v147
  %v3110 = vadd.f32 %v3104, %v3105
  %v3111 = vadd.f32 %v3110, %v3106
  %v3112 = vadd.f32 %v3111, %v3107
  %v3113 = vadd.f32 %v3112, %v3108
  %v3114 = vadd.f32 %v3113, %v3109
  %3115 = vadd.xlane.f32.xlu0 %v3114
  %v3116 = vpop.xlane.xlu0 %3115
  %v3117 = vmul.f32 %v3104, %v3104
  %v3118 = vmul.f32 %v3105, %v3105
  %v3119 = vmul.f32 %v3106, %v3106
  %v3120 = vmul.f32 %v3107, %v3107
  %v3121 = vmul.f32 %v3108, %v3108
  %v3122 = vmul.f32 %v3109, %v3109
  %v3123 = vadd.f32 %v3117, %v3118
  %v3124 = vadd.f32 %v3123, %v3119
  %v3125 = vadd.f32 %v3124, %v3120
  %v3126 = vadd.f32 %v3125, %v3121
  %v3127 = vadd.f32 %v3126, %v3122
  %3128 = vadd.xlane.f32.xlu0 %v3127
  %v3129 = vpop.xlane.xlu0 %3128
  %v3130 = vmul.f32 %v3116, 0.001953125
  %v3131 = vmul.f32 %v3129, 0.001953125
  %v3132 = vmul.f32 %v3130, %v3130
  %v3133 = vsub.f32 %v3131, %v3132
  %v3134 = vmax.f32 %v3133, 0.0
  %v3135 = vld [vmem:[%s5] sm:$0xff]
  %v3136 = vadd.f32 %v3134, 1e-05
  %v3137 = vrsqrt.pop %v3136
  %v3138 = vmul.f32 %v3135, %v3137
  %v3139 = vld [vmem:[%s6] sm:$0xff]
  %v3140 = vmul.f32 %v3130, %v3138
  %v3141 = vsub.f32 %v3139, %v3140
  %3143 = vset.pattern.permute.xlu0 0
  %3144 = vperm.xlu0 %3143, %v3138
  %v3145 = vpop.permute.xlu0 %3144
  %v3147 = vmul.f32 %v3098, %v3145
  %v3148 = vmul.f32 %v3099, %v3145
  %v3149 = vmul.f32 %v3100, %v3145
  %v3150 = vmul.f32 %v3101, %v3145
  %v3151 = vmul.f32 %v3102, %v3145
  %v3152 = vmul.f32 %v3103, %v3145
  %3154 = vset.pattern.permute.xlu0 0
  %3155 = vperm.xlu0 %3154, %v3141
  %v3156 = vpop.permute.xlu0 %3155
  %v3158 = vadd.f32 %v3147, %v3156
  %v3159 = vadd.f32 %v3148, %v3156
  %v3160 = vadd.f32 %v3149, %v3156
  %v3161 = vadd.f32 %v3150, %v3156
  %v3162 = vadd.f32 %v3151, %v3156
  %v3163 = vadd.f32 %v3152, %v3156
  %v3164 = vmax.f32 %v3158, 0.0
  %v3165 = vmax.f32 %v3159, 0.0
  %v3166 = vmax.f32 %v3160, 0.0
  %v3167 = vmax.f32 %v3161, 0.0
  %v3168 = vmax.f32 %v3162, 0.0
  %v3169 = vmax.f32 %v3163, 0.0
  %v3170 = vmul.f32 %v3164, %v142
  %v3171 = vmul.f32 %v3165, %v143
  %v3172 = vmul.f32 %v3166, %v144
  %v3173 = vmul.f32 %v3167, %v145
  %v3174 = vmul.f32 %v3168, %v146
  %v3175 = vmul.f32 %v3169, %v147
  %3176 = vst [vmem:[%s7] sm:$0xff] %v3170
  %3177 = vst [vmem:[%s7 + $0x8] sm:$0xff] %v3171
  %3178 = vst [vmem:[%s7 + $0x10] sm:$0xff] %v3172
  %s3179 = scalar_lea.vmem %s7, 24
  %3180 = vst [vmem:[%s3179] sm:$0xff] %v3173
  %3181 = vst [vmem:[%s3179 + $0x8] sm:$0xff] %v3174
  %3182 = vst [vmem:[%s3179 + $0x10] sm:$0xff] %v3175
  // Predicated region
  $region30: #{conv_block_forward.1} parent=0 // pred_check
    _
  $region31: #{conv_block_forward.1} parent=0 // pred_check_branch
    %3184 = sbr.rel (0) target = $region33
  $region32: #{conv_block_forward.1} parent=0 // pred_region
    _
  $region33: #{conv_block_forward.1} parent=0 // pred_fallthru
    _
  // Predicated region
  $region34: #{conv_block_forward.1} parent=0 // pred_check
    _
  $region35: #{conv_block_forward.1} parent=0 // pred_check_branch
    %3186 = sbr.rel (0) target = $region37
  $region36: #{conv_block_forward.1} parent=0 // pred_region
    _
  $region37: #{conv_block_forward.1} parent=0 // pred_fallthru
    _

</llo_original>
